<compile_context>
chip_gen: v7x
topology: tpu7x:2x2x1
jax: 0.10.0
libtpu: 0.0.40
codegen_flags: <defaults>
</compile_context>

<pallas_src>
import math
import functools

import jax
import jax.numpy as jnp
import numpy as np
from jax import lax
from jax.experimental import pallas as pl
from jax.experimental.pallas import tpu as pltpu


# ----------------------------- in-kernel helpers -----------------------------

_SQRT2_INV = 1.0 / math.sqrt(2.0)


def _gelu_exact(x):
    # PyTorch nn.GELU() default (erf-based).
    return 0.5 * x * (1.0 + lax.erf(x * _SQRT2_INV))


def _layer_norm(x, gamma, beta, eps=1e-5):
    # Single-pass stats: var = E[x^2] - mu^2 (one fused reduce pair).
    mu = jnp.mean(x, axis=-1, keepdims=True)
    ms = jnp.mean(x * x, axis=-1, keepdims=True)
    var = ms - mu * mu
    return (x - mu) * lax.rsqrt(var + eps) * gamma + beta


# --------------------------------- kernel ------------------------------------

def fused_encoder_kernel(src_ref,
                         wbig_ref, bbig_ref, wo_ref, bo_ref,
                         ln1g_ref, ln1b_ref,
                         w1_ref, b1_ref, w2_ref, b2_ref,
                         ln2g_ref, ln2b_ref,
                         out_ref,
                         *, num_heads, num_features, hf_pad):
    layer = pl.program_id(1)

    # Layer 0: seed the resident activation slab with the input sequences.
    @pl.when(layer == 0)
    def _():
        out_ref[...] = src_ref[...]

    x3 = out_ref[...]                        # (Bt, L, E) f32, resident across layers
    Bt, L, E = x3.shape
    H, F = num_heads, num_features
    Dh = E // H
    HFp = hf_pad                             # H*F rounded up to 128 lanes

    cdt = wo_ref.dtype                       # MXU operand dtype for post-cos matmuls

    x = x3.reshape(Bt * L, E)                # merged M dimension for the projections

    # Single fused projection (f32 for cos-argument precision):
    #   [ q-features | k-features | v ]
    big = jnp.dot(x, wbig_ref[...],
                  preferred_element_type=jnp.float32) + bbig_ref[...]   # (BtL, 2*HFp+E)

    # Lane-aligned segment slices (HFp is a multiple of 128 after padding).
    qf = jnp.cos(big[:, :HFp])               # (BtL, HFp)  f32 (EUP/VPU)
    kf = jnp.cos(big[:, HFp:2 * HFp])        # (BtL, HFp)
    v = big[:, 2 * HFp:]                     # (BtL, E)

    qf_b = qf.reshape(Bt, L, HFp).astype(cdt)
    kf_b = kf.reshape(Bt, L, HFp).astype(cdt)
    v_b = v.reshape(Bt, L, E).astype(cdt)

    wo = wo_ref[...]                         # (E, E), 1/F feature scale pre-folded

    # Per-head linear attention with wo folded in:
    #   attn = sum_h qf_h @ ((kf_h^T @ v_h) @ wo_h)
    # Every head contribution is a full E-wide, lane-dense (Bt, L, E) value —
    # no attention scratch, no masked lane stores, no transposes.
    attn = None
    for h in range(H):
        kf_h = kf_b[:, :, h * F:(h + 1) * F]          # (Bt, L, F)
        qf_h = qf_b[:, :, h * F:(h + 1) * F]          # (Bt, L, F)
        v_h = v_b[:, :, h * Dh:(h + 1) * Dh]          # (Bt, L, Dh)
        kv = lax.dot_general(kf_h, v_h,
                             (((1,), (1,)), ((0,), (0,))),
                             preferred_element_type=jnp.float32)       # (Bt, F, Dh)
        kvwo = lax.dot_general(kv.astype(cdt), wo[h * Dh:(h + 1) * Dh, :],
                               (((2,), (0,)), ((), ())),
                               preferred_element_type=jnp.float32)     # (Bt, F, E)
        c = lax.dot_general(qf_h, kvwo.astype(cdt),
                            (((2,), (1,)), ((0,), (0,))),
                            preferred_element_type=jnp.float32)        # (Bt, L, E)
        attn = c if attn is None else attn + c

    attn = attn.reshape(Bt * L, E) + bo_ref[...]

    # Residual + LayerNorm 1 (dropout1 is identity).
    h1 = _layer_norm(x + attn, ln1g_ref[...], ln1b_ref[...])

    # Feed-forward (dropout is identity), exact (erf) GELU.
    f = jnp.dot(h1.astype(cdt), w1_ref[...],
                preferred_element_type=jnp.float32) + b1_ref[...]
    f = _gelu_exact(f)
    f = jnp.dot(f.astype(cdt), w2_ref[...],
                preferred_element_type=jnp.float32) + b2_ref[...]

    # Residual + LayerNorm 2 (dropout2 is identity); write back to the resident
    # activation slab (flushed to HBM once per batch tile).
    y = _layer_norm(h1 + f, ln2g_ref[...], ln2b_ref[...])
    out_ref[...] = y.reshape(Bt, L, E)


# --------------------------------- wrapper -----------------------------------

_FUSED_ORDER = ("w_big", "b_big", "wo", "bo",
                "ln1g", "ln1b", "w1", "b1", "w2", "b2", "ln2g", "ln2b")


def _fuse_layer_params(p, num_heads, num_features, hf_pad, compute_dtype):
    """Fold QKV + feature map + scales into MXU-friendly fused weights."""
    E = p["wq"].shape[0]
    H, F = num_heads, num_features
    Dh = E // H
    HF = H * F
    fw_t = p["fw"].T                                      # (Dh, F)

    # Block-diagonal feature weight: (E, H*F), block h = fw^T.
    wfeat = jnp.zeros((E, HF), jnp.float32)
    for h in range(H):
        wfeat = wfeat.at[h * Dh:(h + 1) * Dh, h * F:(h + 1) * F].set(fw_t)
    fb_tiled = jnp.tile(p["fb"], (1, H))                  # (1, H*F)

    w_qf = p["wq"] @ wfeat                                # (E, H*F)
    b_qf = p["bq"] @ wfeat + fb_tiled                     # (1, H*F)
    w_kf = p["wk"] @ wfeat
    b_kf = p["bk"] @ wfeat + fb_tiled

    # Pad H*F up to hf_pad (128-lane multiple). Padded feature columns are
    # never read by the per-head loop; the pi/2 bias makes them ~0 anyway.
    pad = hf_pad - HF
    if pad:
        zw = jnp.zeros((E, pad), jnp.float32)
        zb = jnp.full((1, pad), 0.5 * math.pi, jnp.float32)
        w_qf = jnp.concatenate([w_qf, zw], axis=1)
        b_qf = jnp.concatenate([b_qf, zb], axis=1)
        w_kf = jnp.concatenate([w_kf, zw], axis=1)
        b_kf = jnp.concatenate([b_kf, zb], axis=1)

    w_big = jnp.concatenate([w_qf, w_kf, p["wv"]], axis=1)    # (E, 2*hf_pad + E)
    b_big = jnp.concatenate([b_qf, b_kf, p["bv"]], axis=1)    # (1, 2*hf_pad + E)

    wo_scaled = p["wo"] * (1.0 / F)                       # fold both 1/sqrt(F) scales

    return {
        "w_big": w_big,                                   # f32 (cos-argument precision)
        "b_big": b_big,                                   # f32
        "wo": wo_scaled.astype(compute_dtype),
        "bo": p["bo"],
        "ln1g": p["ln1g"], "ln1b": p["ln1b"],
        "w1": p["w1"].astype(compute_dtype), "b1": p["b1"],
        "w2": p["w2"].astype(compute_dtype), "b2": p["b2"],
        "ln2g": p["ln2g"], "ln2b": p["ln2b"],
    }


def _pick_vmem_limit():
    try:
        cap = int(pltpu.get_tpu_info().vmem_capacity_bytes)
        return max(32 * 1024 * 1024, (cap * 3) // 4)
    except Exception:
        return 48 * 1024 * 1024


def performer_exp_encoder(src, layer_params, *, num_heads, num_features,
                          compute_dtype=jnp.bfloat16, batch_tile=None,
                          vmem_limit_bytes=None):
    B, L, E = src.shape
    num_layers = len(layer_params)
    assert E % num_heads == 0, "embed_dim must be divisible by num_heads"

    HF = num_heads * num_features
    hf_pad = ((HF + 127) // 128) * 128                    # lane-align segment boundaries

    if batch_tile is None:
        # Largest divisor of B that is <= 8: cuts per-layer weight streaming by
        # batch_tile x and fills the MXU M dim.  (On v7x you may prefer a tile
        # that keeps >= 2 parallel grid iterations for the 2 TensorCores.)
        batch_tile = 1
        for cand in (8, 4, 2, 1):
            if cand <= B and B % cand == 0:
                batch_tile = cand
                break
    assert B % batch_tile == 0

    if vmem_limit_bytes is None:
        vmem_limit_bytes = _pick_vmem_limit()

    fused = [_fuse_layer_params(p, num_heads, num_features, hf_pad, compute_dtype)
             for p in layer_params]
    stacked = {k: jnp.stack([f[k] for f in fused], axis=0) for k in _FUSED_ORDER}

    arrays = [src]
    in_specs = [pl.BlockSpec((batch_tile, L, E), lambda b, l: (b, 0, 0))]
    for name in _FUSED_ORDER:
        arr = stacked[name]
        arrays.append(arr)
        pshape = arr.shape[1:]
        nd = len(pshape)
        in_specs.append(pl.BlockSpec(
            (pl.Squeezed(),) + tuple(pshape),
            lambda b, l, _nd=nd: (l,) + (0,) * _nd))

    kernel = functools.partial(fused_encoder_kernel,
                               num_heads=num_heads, num_features=num_features,
                               hf_pad=hf_pad)
    return pl.pallas_call(
        kernel,
        out_shape=jax.ShapeDtypeStruct((B, L, E), jnp.float32),
        grid=(B // batch_tile, num_layers),
        in_specs=in_specs,
        out_specs=pl.BlockSpec((batch_tile, L, E), lambda b, l: (b, 0, 0)),
        compiler_params=pltpu.CompilerParams(
            dimension_semantics=("parallel", "arbitrary"),
            vmem_limit_bytes=int(vmem_limit_bytes)),
    )(*arrays)


# ------------------------- deterministic parameter init ----------------------

def _linear_init(key, fan_in, fan_out):
    bound = 1.0 / math.sqrt(fan_in)
    k1, k2 = jax.random.split(key)
    w = jax.random.uniform(k1, (fan_in, fan_out), jnp.float32, -bound, bound)
    b = jax.random.uniform(k2, (1, fan_out), jnp.float32, -bound, bound)
    return w, b


def init_layer_params(key, embed_dim, num_heads, hidden_dim, num_features):
    head_dim = embed_dim // num_heads
    keys = jax.random.split(key, 8)
    p = {}
    p["wq"], p["bq"] = _linear_init(keys[0], embed_dim, embed_dim)
    p["wk"], p["bk"] = _linear_init(keys[1], embed_dim, embed_dim)
    p["wv"], p["bv"] = _linear_init(keys[2], embed_dim, embed_dim)
    p["wo"], p["bo"] = _linear_init(keys[3], embed_dim, embed_dim)
    p["fw"] = jax.random.normal(keys[4], (num_features, head_dim), jnp.float32)
    p["fb"] = 2.0 * math.pi * jax.random.uniform(keys[5], (1, num_features), jnp.float32)
    p["w1"], p["b1"] = _linear_init(keys[6], embed_dim, hidden_dim)
    p["w2"], p["b2"] = _linear_init(keys[7], hidden_dim, embed_dim)
    p["ln1g"] = jnp.ones((1, embed_dim), jnp.float32)
    p["ln1b"] = jnp.zeros((1, embed_dim), jnp.float32)
    p["ln2g"] = jnp.ones((1, embed_dim), jnp.float32)
    p["ln2b"] = jnp.zeros((1, embed_dim), jnp.float32)
    return p


# ------------------------------ pure-JAX reference ----------------------------

def _ln_ref(x, g, b, eps=1e-5):
    mu = jnp.mean(x, axis=-1, keepdims=True)
    var = jnp.mean((x - mu) ** 2, axis=-1, keepdims=True)
    return (x - mu) / jnp.sqrt(var + eps) * g + b


def reference_forward(src, layer_params, *, num_heads, num_features):
    x = src
    for p in layer_params:
        B, L, E = x.shape
        H, F = num_heads, num_features
        Dh = E // H
        q = x @ p["wq"] + p["bq"]
        k = x @ p["wk"] + p["bk"]
        v = x @ p["wv"] + p["bv"]
        qh = q.reshape(B, L, H, Dh)
        kh = k.reshape(B, L, H, Dh)
        vh = v.reshape(B, L, H, Dh)
        fb = p["fb"].reshape(1, 1, 1, F)
        qf = jnp.cos(jnp.einsum("blhd,fd->blhf", qh, p["fw"]) + fb) / math.sqrt(F)
        kf = jnp.cos(jnp.einsum("blhd,fd->blhf", kh, p["fw"]) + fb) / math.sqrt(F)
        kv = jnp.einsum("blhf,blhd->bhfd", kf, vh)
        qkv = jnp.einsum("blhf,bhfd->blhd", qf, kv)
        attn = qkv.reshape(B, L, E) @ p["wo"] + p["bo"]
        h1 = _ln_ref(x + attn, p["ln1g"], p["ln1b"])
        f = jax.nn.gelu(h1 @ p["w1"] + p["b1"], approximate=False)
        f = f @ p["w2"] + p["b2"]
        x = _ln_ref(h1 + f, p["ln2g"], p["ln2b"])
    return x


# ----------------------------------- main -------------------------------------

if __name__ == "__main__":
    B, L, E = 2, 8, 32
    num_heads = 4
    hidden_dim = 64
    num_features = 16
    num_layers = 2

    root = jax.random.PRNGKey(0)
    k_src, k_par = jax.random.split(root)
    src = jax.random.normal(k_src, (B, L, E), jnp.float32)

    layer_keys = jax.random.split(k_par, num_layers)
    layer_params = [
        init_layer_params(layer_keys[i], E, num_heads, hidden_dim, num_features)
        for i in range(num_layers)
    ]

    ref = jax.block_until_ready(
        reference_forward(src, layer_params,
                          num_heads=num_heads, num_features=num_features))

    # f32 matmul path: strict correctness check.
    out_f32 = jax.block_until_ready(
        performer_exp_encoder(src, layer_params,
                              num_heads=num_heads, num_features=num_features,
                              compute_dtype=jnp.float32))
    np.testing.assert_allclose(np.asarray(out_f32), np.asarray(ref),
                               rtol=2e-4, atol=2e-4)

    # Default mixed-precision path: bf16 MXU operands for wo/w1/w2 and the
    # post-cos matmuls, f32 feature projection / cos / LN / residuals.
    out_bf16 = jax.block_until_ready(
        performer_exp_encoder(src, layer_params,
                              num_heads=num_heads, num_features=num_features))
    assert np.all(np.isfinite(np.asarray(out_bf16)))
    np.testing.assert_allclose(np.asarray(out_bf16), np.asarray(ref),
                               rtol=1e-1, atol=1e-1)

    print("KERNEL_OK")
</pallas_src>

<mosaic_0001>
module attributes {stable_mosaic.version = 11 : i64} {
  func.func @fused_encoder_kernel(%arg0: i32, %arg1: i32, %arg2: memref<2x8x32xf32, #tpu.memory_space<vmem>>, %arg3: memref<1x32x288xf32, #tpu.memory_space<vmem>>, %arg4: memref<1x1x288xf32, #tpu.memory_space<vmem>>, %arg5: memref<1x32x32xf32, #tpu.memory_space<vmem>>, %arg6: memref<1x1x32xf32, #tpu.memory_space<vmem>>, %arg7: memref<1x1x32xf32, #tpu.memory_space<vmem>>, %arg8: memref<1x1x32xf32, #tpu.memory_space<vmem>>, %arg9: memref<1x32x64xf32, #tpu.memory_space<vmem>>, %arg10: memref<1x1x64xf32, #tpu.memory_space<vmem>>, %arg11: memref<1x64x32xf32, #tpu.memory_space<vmem>>, %arg12: memref<1x1x32xf32, #tpu.memory_space<vmem>>, %arg13: memref<1x1x32xf32, #tpu.memory_space<vmem>>, %arg14: memref<1x1x32xf32, #tpu.memory_space<vmem>>, %arg15: memref<2x8x32xf32, #tpu.memory_space<vmem>>) attributes {dimension_semantics = [#tpu.dimension_semantics<parallel>, #tpu.dimension_semantics<arbitrary>], iteration_bounds = array<i64: 1, 2>, scalar_prefetch = 0 : i64, scratch_operands = 0 : i64, tpu.core_type = #tpu.core_type<tc>, window_params = [{transform_indices = @transform_0, window_bounds = array<i64: 2, 8, 32>}, {transform_indices = @transform_1, window_bounds = array<i64: 1, 32, 288>}, {transform_indices = @transform_2, window_bounds = array<i64: 1, 1, 288>}, {transform_indices = @transform_3, window_bounds = array<i64: 1, 32, 32>}, {transform_indices = @transform_4, window_bounds = array<i64: 1, 1, 32>}, {transform_indices = @transform_5, window_bounds = array<i64: 1, 1, 32>}, {transform_indices = @transform_6, window_bounds = array<i64: 1, 1, 32>}, {transform_indices = @transform_7, window_bounds = array<i64: 1, 32, 64>}, {transform_indices = @transform_8, window_bounds = array<i64: 1, 1, 64>}, {transform_indices = @transform_9, window_bounds = array<i64: 1, 64, 32>}, {transform_indices = @transform_10, window_bounds = array<i64: 1, 1, 32>}, {transform_indices = @transform_11, window_bounds = array<i64: 1, 1, 32>}, {transform_indices = @transform_12, window_bounds = array<i64: 1, 1, 32>}, {transform_indices = @transform_13, window_bounds = array<i64: 2, 8, 32>}]} {
    %c0_i32 = arith.constant 0 : i32
    %0 = arith.cmpi eq, %arg1, %c0_i32 : i32
    %1 = arith.extui %0 : i1 to i32
    %c0_i32_0 = arith.constant 0 : i32
    %2 = arith.cmpi ne, %1, %c0_i32_0 : i32
    scf.if %2 {
      %c0_69 = arith.constant 0 : index
      %c0_70 = arith.constant 0 : index
      %c0_71 = arith.constant 0 : index
      %136 = vector.load %arg2[%c0_69, %c0_70, %c0_71] : memref<2x8x32xf32, #tpu.memory_space<vmem>>, vector<2x8x32xf32>
      %c0_72 = arith.constant 0 : index
      %c0_73 = arith.constant 0 : index
      %c0_74 = arith.constant 0 : index
      %137 = vector.load %arg15[%c0_72, %c0_73, %c0_74] : memref<2x8x32xf32, #tpu.memory_space<vmem>>, vector<2x8x32xf32>
      tpu.vector_store %arg15[%c0_72, %c0_73, %c0_74], %136 {strides = array<i32>} : memref<2x8x32xf32, #tpu.memory_space<vmem>>, vector<2x8x32xf32>,
    } else {
    }
    %c0 = arith.constant 0 : index
    %c0_1 = arith.constant 0 : index
    %c0_2 = arith.constant 0 : index
    %3 = vector.load %arg15[%c0, %c0_1, %c0_2] : memref<2x8x32xf32, #tpu.memory_space<vmem>>, vector<2x8x32xf32>
    %4 = vector.shape_cast %3 : vector<2x8x32xf32> to vector<16x32xf32>
    %c0_3 = arith.constant 0 : index
    %c0_4 = arith.constant 0 : index
    %c0_5 = arith.constant 0 : index
    %5 = vector.load %arg3[%c0_3, %c0_4, %c0_5] : memref<1x32x288xf32, #tpu.memory_space<vmem>>, vector<1x32x288xf32>
    %6 = vector.shape_cast %5 : vector<1x32x288xf32> to vector<32x288xf32>
    %cst = arith.constant dense<0.000000e+00> : vector<16x288xf32>
    %7 = tpu.matmul %4, %6, %cst {dimension_numbers = #tpu.dot_dimension_numbers<[1], [0], [0], [1], [0, 0, 1, 1], [], []>} : vector<16x32xf32>, vector<32x288xf32>, vector<16x288xf32> -> vector<16x288xf32>
    %c0_6 = arith.constant 0 : index
    %c0_7 = arith.constant 0 : index
    %c0_8 = arith.constant 0 : index
    %8 = vector.load %arg4[%c0_6, %c0_7, %c0_8] : memref<1x1x288xf32, #tpu.memory_space<vmem>>, vector<1x1x288xf32>
    %9 = vector.shape_cast %8 : vector<1x1x288xf32> to vector<1x288xf32>
    %10 = vector.broadcast %9 : vector<1x288xf32> to vector<16x288xf32>
    %11 = arith.addf %7, %10 : vector<16x288xf32>
    %12 = vector.extract_strided_slice %11 {offsets = [0, 0], sizes = [16, 128], strides = [1, 1]} : vector<16x288xf32> to vector<16x128xf32>
    %13 = math.cos %12 : vector<16x128xf32>
    %14 = vector.extract_strided_slice %11 {offsets = [0, 128], sizes = [16, 128], strides = [1, 1]} : vector<16x288xf32> to vector<16x128xf32>
    %15 = math.cos %14 : vector<16x128xf32>
    %16 = vector.extract_strided_slice %11 {offsets = [0, 256], sizes = [16, 32], strides = [1, 1]} : vector<16x288xf32> to vector<16x32xf32>
    %17 = vector.shape_cast %13 : vector<16x128xf32> to vector<2x8x128xf32>
    %18 = vector.shape_cast %15 : vector<16x128xf32> to vector<2x8x128xf32>
    %19 = vector.shape_cast %16 : vector<16x32xf32> to vector<2x8x32xf32>
    %c0_9 = arith.constant 0 : index
    %c0_10 = arith.constant 0 : index
    %c0_11 = arith.constant 0 : index
    %20 = vector.load %arg5[%c0_9, %c0_10, %c0_11] : memref<1x32x32xf32, #tpu.memory_space<vmem>>, vector<1x32x32xf32>
    %21 = vector.shape_cast %20 : vector<1x32x32xf32> to vector<32x32xf32>
    %22 = vector.extract_strided_slice %18 {offsets = [0, 0, 0], sizes = [2, 8, 16], strides = [1, 1, 1]} : vector<2x8x128xf32> to vector<2x8x16xf32>
    %23 = vector.extract_strided_slice %17 {offsets = [0, 0, 0], sizes = [2, 8, 16], strides = [1, 1, 1]} : vector<2x8x128xf32> to vector<2x8x16xf32>
    %24 = vector.extract_strided_slice %19 {offsets = [0, 0, 0], sizes = [2, 8, 8], strides = [1, 1, 1]} : vector<2x8x32xf32> to vector<2x8x8xf32>
    %cst_12 = arith.constant dense<0.000000e+00> : vector<2x16x8xf32>
    %25 = tpu.matmul %22, %24, %cst_12 {dimension_numbers = #tpu.dot_dimension_numbers<[1], [1], [2], [2], [0, 0, 0, 2, 1, 2], [0], [0]>} : vector<2x8x16xf32>, vector<2x8x8xf32>, vector<2x16x8xf32> -> vector<2x16x8xf32>
    %26 = vector.extract_strided_slice %21 {offsets = [0, 0], sizes = [8, 32], strides = [1, 1]} : vector<32x32xf32> to vector<8x32xf32>
    %cst_13 = arith.constant dense<0.000000e+00> : vector<2x16x32xf32>
    %27 = tpu.matmul %25, %26, %cst_13 {dimension_numbers = #tpu.dot_dimension_numbers<[2], [0], [0, 1], [1], [0, 0, 0, 1, 1, 1], [], []>} : vector<2x16x8xf32>, vector<8x32xf32>, vector<2x16x32xf32> -> vector<2x16x32xf32>
    %cst_14 = arith.constant dense<0.000000e+00> : vector<2x8x32xf32>
    %28 = tpu.matmul %23, %27, %cst_14 {dimension_numbers = #tpu.dot_dimension_numbers<[2], [1], [1], [2], [0, 0, 0, 1, 1, 2], [0], [0]>} : vector<2x8x16xf32>, vector<2x16x32xf32>, vector<2x8x32xf32> -> vector<2x8x32xf32>
    %29 = vector.extract_strided_slice %18 {offsets = [0, 0, 16], sizes = [2, 8, 16], strides = [1, 1, 1]} : vector<2x8x128xf32> to vector<2x8x16xf32>
    %30 = vector.extract_strided_slice %17 {offsets = [0, 0, 16], sizes = [2, 8, 16], strides = [1, 1, 1]} : vector<2x8x128xf32> to vector<2x8x16xf32>
    %31 = vector.extract_strided_slice %19 {offsets = [0, 0, 8], sizes = [2, 8, 8], strides = [1, 1, 1]} : vector<2x8x32xf32> to vector<2x8x8xf32>
    %cst_15 = arith.constant dense<0.000000e+00> : vector<2x16x8xf32>
    %32 = tpu.matmul %29, %31, %cst_15 {dimension_numbers = #tpu.dot_dimension_numbers<[1], [1], [2], [2], [0, 0, 0, 2, 1, 2], [0], [0]>} : vector<2x8x16xf32>, vector<2x8x8xf32>, vector<2x16x8xf32> -> vector<2x16x8xf32>
    %33 = vector.extract_strided_slice %21 {offsets = [8, 0], sizes = [8, 32], strides = [1, 1]} : vector<32x32xf32> to vector<8x32xf32>
    %cst_16 = arith.constant dense<0.000000e+00> : vector<2x16x32xf32>
    %34 = tpu.matmul %32, %33, %cst_16 {dimension_numbers = #tpu.dot_dimension_numbers<[2], [0], [0, 1], [1], [0, 0, 0, 1, 1, 1], [], []>} : vector<2x16x8xf32>, vector<8x32xf32>, vector<2x16x32xf32> -> vector<2x16x32xf32>
    %cst_17 = arith.constant dense<0.000000e+00> : vector<2x8x32xf32>
    %35 = tpu.matmul %30, %34, %cst_17 {dimension_numbers = #tpu.dot_dimension_numbers<[2], [1], [1], [2], [0, 0, 0, 1, 1, 2], [0], [0]>} : vector<2x8x16xf32>, vector<2x16x32xf32>, vector<2x8x32xf32> -> vector<2x8x32xf32>
    %36 = arith.addf %28, %35 : vector<2x8x32xf32>
    %37 = vector.extract_strided_slice %18 {offsets = [0, 0, 32], sizes = [2, 8, 16], strides = [1, 1, 1]} : vector<2x8x128xf32> to vector<2x8x16xf32>
    %38 = vector.extract_strided_slice %17 {offsets = [0, 0, 32], sizes = [2, 8, 16], strides = [1, 1, 1]} : vector<2x8x128xf32> to vector<2x8x16xf32>
    %39 = vector.extract_strided_slice %19 {offsets = [0, 0, 16], sizes = [2, 8, 8], strides = [1, 1, 1]} : vector<2x8x32xf32> to vector<2x8x8xf32>
    %cst_18 = arith.constant dense<0.000000e+00> : vector<2x16x8xf32>
    %40 = tpu.matmul %37, %39, %cst_18 {dimension_numbers = #tpu.dot_dimension_numbers<[1], [1], [2], [2], [0, 0, 0, 2, 1, 2], [0], [0]>} : vector<2x8x16xf32>, vector<2x8x8xf32>, vector<2x16x8xf32> -> vector<2x16x8xf32>
    %41 = vector.extract_strided_slice %21 {offsets = [16, 0], sizes = [8, 32], strides = [1, 1]} : vector<32x32xf32> to vector<8x32xf32>
    %cst_19 = arith.constant dense<0.000000e+00> : vector<2x16x32xf32>
    %42 = tpu.matmul %40, %41, %cst_19 {dimension_numbers = #tpu.dot_dimension_numbers<[2], [0], [0, 1], [1], [0, 0, 0, 1, 1, 1], [], []>} : vector<2x16x8xf32>, vector<8x32xf32>, vector<2x16x32xf32> -> vector<2x16x32xf32>
    %cst_20 = arith.constant dense<0.000000e+00> : vector<2x8x32xf32>
    %43 = tpu.matmul %38, %42, %cst_20 {dimension_numbers = #tpu.dot_dimension_numbers<[2], [1], [1], [2], [0, 0, 0, 1, 1, 2], [0], [0]>} : vector<2x8x16xf32>, vector<2x16x32xf32>, vector<2x8x32xf32> -> vector<2x8x32xf32>
    %44 = arith.addf %36, %43 : vector<2x8x32xf32>
    %45 = vector.extract_strided_slice %18 {offsets = [0, 0, 48], sizes = [2, 8, 16], strides = [1, 1, 1]} : vector<2x8x128xf32> to vector<2x8x16xf32>
    %46 = vector.extract_strided_slice %17 {offsets = [0, 0, 48], sizes = [2, 8, 16], strides = [1, 1, 1]} : vector<2x8x128xf32> to vector<2x8x16xf32>
    %47 = vector.extract_strided_slice %19 {offsets = [0, 0, 24], sizes = [2, 8, 8], strides = [1, 1, 1]} : vector<2x8x32xf32> to vector<2x8x8xf32>
    %cst_21 = arith.constant dense<0.000000e+00> : vector<2x16x8xf32>
    %48 = tpu.matmul %45, %47, %cst_21 {dimension_numbers = #tpu.dot_dimension_numbers<[1], [1], [2], [2], [0, 0, 0, 2, 1, 2], [0], [0]>} : vector<2x8x16xf32>, vector<2x8x8xf32>, vector<2x16x8xf32> -> vector<2x16x8xf32>
    %49 = vector.extract_strided_slice %21 {offsets = [24, 0], sizes = [8, 32], strides = [1, 1]} : vector<32x32xf32> to vector<8x32xf32>
    %cst_22 = arith.constant dense<0.000000e+00> : vector<2x16x32xf32>
    %50 = tpu.matmul %48, %49, %cst_22 {dimension_numbers = #tpu.dot_dimension_numbers<[2], [0], [0, 1], [1], [0, 0, 0, 1, 1, 1], [], []>} : vector<2x16x8xf32>, vector<8x32xf32>, vector<2x16x32xf32> -> vector<2x16x32xf32>
    %cst_23 = arith.constant dense<0.000000e+00> : vector<2x8x32xf32>
    %51 = tpu.matmul %46, %50, %cst_23 {dimension_numbers = #tpu.dot_dimension_numbers<[2], [1], [1], [2], [0, 0, 0, 1, 1, 2], [0], [0]>} : vector<2x8x16xf32>, vector<2x16x32xf32>, vector<2x8x32xf32> -> vector<2x8x32xf32>
    %52 = arith.addf %44, %51 : vector<2x8x32xf32>
    %53 = vector.shape_cast %52 : vector<2x8x32xf32> to vector<16x32xf32>
    %c0_24 = arith.constant 0 : index
    %c0_25 = arith.constant 0 : index
    %c0_26 = arith.constant 0 : index
    %54 = vector.load %arg6[%c0_24, %c0_25, %c0_26] : memref<1x1x32xf32, #tpu.memory_space<vmem>>, vector<1x1x32xf32>
    %55 = vector.shape_cast %54 : vector<1x1x32xf32> to vector<1x32xf32>
    %56 = vector.broadcast %55 : vector<1x32xf32> to vector<16x32xf32>
    %57 = arith.addf %53, %56 : vector<16x32xf32>
    %58 = arith.addf %4, %57 : vector<16x32xf32>
    %c0_27 = arith.constant 0 : index
    %c0_28 = arith.constant 0 : index
    %c0_29 = arith.constant 0 : index
    %59 = vector.load %arg7[%c0_27, %c0_28, %c0_29] : memref<1x1x32xf32, #tpu.memory_space<vmem>>, vector<1x1x32xf32>
    %60 = vector.shape_cast %59 : vector<1x1x32xf32> to vector<1x32xf32>
    %c0_30 = arith.constant 0 : index
    %c0_31 = arith.constant 0 : index
    %c0_32 = arith.constant 0 : index
    %61 = vector.load %arg8[%c0_30, %c0_31, %c0_32] : memref<1x1x32xf32, #tpu.memory_space<vmem>>, vector<1x1x32xf32>
    %62 = vector.shape_cast %61 : vector<1x1x32xf32> to vector<1x32xf32>
    %cst_33 = arith.constant dense<0.000000e+00> : vector<16xf32>
    %63 = vector.multi_reduction <add>, %58, %cst_33 [1] : vector<16x32xf32> to vector<16xf32>
    %64 = vector.shape_cast %63 : vector<16xf32> to vector<16x1xf32>
    %cst_34 = arith.constant 3.200000e+01 : f32
    %65 = vector.broadcast %cst_34 : f32 to vector<16x1xf32>
    %66 = arith.divf %64, %65 : vector<16x1xf32>
    %67 = arith.mulf %58, %58 : vector<16x32xf32>
    %cst_35 = arith.constant dense<0.000000e+00> : vector<16xf32>
    %68 = vector.multi_reduction <add>, %67, %cst_35 [1] : vector<16x32xf32> to vector<16xf32>
    %69 = vector.shape_cast %68 : vector<16xf32> to vector<16x1xf32>
    %cst_36 = arith.constant 3.200000e+01 : f32
    %70 = vector.broadcast %cst_36 : f32 to vector<16x1xf32>
    %71 = arith.divf %69, %70 : vector<16x1xf32>
    %72 = arith.mulf %66, %66 : vector<16x1xf32>
    %73 = arith.subf %71, %72 : vector<16x1xf32>
    %74 = vector.broadcast %66 : vector<16x1xf32> to vector<16x32xf32>
    %75 = arith.subf %58, %74 : vector<16x32xf32>
    %cst_37 = arith.constant 9.99999974E-6 : f32
    %76 = vector.broadcast %cst_37 : f32 to vector<16x1xf32>
    %77 = arith.addf %73, %76 : vector<16x1xf32>
    %78 = math.rsqrt %77 : vector<16x1xf32>
    %79 = vector.broadcast %78 : vector<16x1xf32> to vector<16x32xf32>
    %80 = arith.mulf %75, %79 : vector<16x32xf32>
    %81 = vector.broadcast %60 : vector<1x32xf32> to vector<16x32xf32>
    %82 = arith.mulf %80, %81 : vector<16x32xf32>
    %83 = vector.broadcast %62 : vector<1x32xf32> to vector<16x32xf32>
    %84 = arith.addf %82, %83 : vector<16x32xf32>
    %c0_38 = arith.constant 0 : index
    %c0_39 = arith.constant 0 : index
    %c0_40 = arith.constant 0 : index
    %85 = vector.load %arg9[%c0_38, %c0_39, %c0_40] : memref<1x32x64xf32, #tpu.memory_space<vmem>>, vector<1x32x64xf32>
    %86 = vector.shape_cast %85 : vector<1x32x64xf32> to vector<32x64xf32>
    %cst_41 = arith.constant dense<0.000000e+00> : vector<16x64xf32>
    %87 = tpu.matmul %84, %86, %cst_41 {dimension_numbers = #tpu.dot_dimension_numbers<[1], [0], [0], [1], [0, 0, 1, 1], [], []>} : vector<16x32xf32>, vector<32x64xf32>, vector<16x64xf32> -> vector<16x64xf32>
    %c0_42 = arith.constant 0 : index
    %c0_43 = arith.constant 0 : index
    %c0_44 = arith.constant 0 : index
    %88 = vector.load %arg10[%c0_42, %c0_43, %c0_44] : memref<1x1x64xf32, #tpu.memory_space<vmem>>, vector<1x1x64xf32>
    %89 = vector.shape_cast %88 : vector<1x1x64xf32> to vector<1x64xf32>
    %90 = vector.broadcast %89 : vector<1x64xf32> to vector<16x64xf32>
    %91 = arith.addf %87, %90 : vector<16x64xf32>
    %cst_45 = arith.constant 5.000000e-01 : f32
    %92 = vector.broadcast %cst_45 : f32 to vector<16x64xf32>
    %93 = arith.mulf %92, %91 : vector<16x64xf32>
    %cst_46 = arith.constant 0.707106769 : f32
    %94 = vector.broadcast %cst_46 : f32 to vector<16x64xf32>
    %95 = arith.mulf %91, %94 : vector<16x64xf32>
    %96 = math.erf %95 : vector<16x64xf32>
    %cst_47 = arith.constant 1.000000e+00 : f32
    %97 = vector.broadcast %cst_47 : f32 to vector<16x64xf32>
    %98 = arith.addf %97, %96 : vector<16x64xf32>
    %99 = arith.mulf %93, %98 : vector<16x64xf32>
    %c0_48 = arith.constant 0 : index
    %c0_49 = arith.constant 0 : index
    %c0_50 = arith.constant 0 : index
    %100 = vector.load %arg11[%c0_48, %c0_49, %c0_50] : memref<1x64x32xf32, #tpu.memory_space<vmem>>, vector<1x64x32xf32>
    %101 = vector.shape_cast %100 : vector<1x64x32xf32> to vector<64x32xf32>
    %cst_51 = arith.constant dense<0.000000e+00> : vector<16x32xf32>
    %102 = tpu.matmul %99, %101, %cst_51 {dimension_numbers = #tpu.dot_dimension_numbers<[1], [0], [0], [1], [0, 0, 1, 1], [], []>} : vector<16x64xf32>, vector<64x32xf32>, vector<16x32xf32> -> vector<16x32xf32>
    %c0_52 = arith.constant 0 : index
    %c0_53 = arith.constant 0 : index
    %c0_54 = arith.constant 0 : index
    %103 = vector.load %arg12[%c0_52, %c0_53, %c0_54] : memref<1x1x32xf32, #tpu.memory_space<vmem>>, vector<1x1x32xf32>
    %104 = vector.shape_cast %103 : vector<1x1x32xf32> to vector<1x32xf32>
    %105 = vector.broadcast %104 : vector<1x32xf32> to vector<16x32xf32>
    %106 = arith.addf %102, %105 : vector<16x32xf32>
    %107 = arith.addf %84, %106 : vector<16x32xf32>
    %c0_55 = arith.constant 0 : index
    %c0_56 = arith.constant 0 : index
    %c0_57 = arith.constant 0 : index
    %108 = vector.load %arg13[%c0_55, %c0_56, %c0_57] : memref<1x1x32xf32, #tpu.memory_space<vmem>>, vector<1x1x32xf32>
    %109 = vector.shape_cast %108 : vector<1x1x32xf32> to vector<1x32xf32>
    %c0_58 = arith.constant 0 : index
    %c0_59 = arith.constant 0 : index
    %c0_60 = arith.constant 0 : index
    %110 = vector.load %arg14[%c0_58, %c0_59, %c0_60] : memref<1x1x32xf32, #tpu.memory_space<vmem>>, vector<1x1x32xf32>
    %111 = vector.shape_cast %110 : vector<1x1x32xf32> to vector<1x32xf32>
    %cst_61 = arith.constant dense<0.000000e+00> : vector<16xf32>
    %112 = vector.multi_reduction <add>, %107, %cst_61 [1] : vector<16x32xf32> to vector<16xf32>
    %113 = vector.shape_cast %112 : vector<16xf32> to vector<16x1xf32>
    %cst_62 = arith.constant 3.200000e+01 : f32
    %114 = vector.broadcast %cst_62 : f32 to vector<16x1xf32>
    %115 = arith.divf %113, %114 : vector<16x1xf32>
    %116 = arith.mulf %107, %107 : vector<16x32xf32>
    %cst_63 = arith.constant dense<0.000000e+00> : vector<16xf32>
    %117 = vector.multi_reduction <add>, %116, %cst_63 [1] : vector<16x32xf32> to vector<16xf32>
    %118 = vector.shape_cast %117 : vector<16xf32> to vector<16x1xf32>
    %cst_64 = arith.constant 3.200000e+01 : f32
    %119 = vector.broadcast %cst_64 : f32 to vector<16x1xf32>
    %120 = arith.divf %118, %119 : vector<16x1xf32>
    %121 = arith.mulf %115, %115 : vector<16x1xf32>
    %122 = arith.subf %120, %121 : vector<16x1xf32>
    %123 = vector.broadcast %115 : vector<16x1xf32> to vector<16x32xf32>
    %124 = arith.subf %107, %123 : vector<16x32xf32>
    %cst_65 = arith.constant 9.99999974E-6 : f32
    %125 = vector.broadcast %cst_65 : f32 to vector<16x1xf32>
    %126 = arith.addf %122, %125 : vector<16x1xf32>
    %127 = math.rsqrt %126 : vector<16x1xf32>
    %128 = vector.broadcast %127 : vector<16x1xf32> to vector<16x32xf32>
    %129 = arith.mulf %124, %128 : vector<16x32xf32>
    %130 = vector.broadcast %109 : vector<1x32xf32> to vector<16x32xf32>
    %131 = arith.mulf %129, %130 : vector<16x32xf32>
    %132 = vector.broadcast %111 : vector<1x32xf32> to vector<16x32xf32>
    %133 = arith.addf %131, %132 : vector<16x32xf32>
    %134 = vector.shape_cast %133 : vector<16x32xf32> to vector<2x8x32xf32>
    %c0_66 = arith.constant 0 : index
    %c0_67 = arith.constant 0 : index
    %c0_68 = arith.constant 0 : index
    %135 = vector.load %arg15[%c0_66, %c0_67, %c0_68] : memref<2x8x32xf32, #tpu.memory_space<vmem>>, vector<2x8x32xf32>
    tpu.vector_store %arg15[%c0_66, %c0_67, %c0_68], %134 {strides = array<i32>} : memref<2x8x32xf32, #tpu.memory_space<vmem>>, vector<2x8x32xf32>,
    return
  }
  func.func @transform_0(%arg0: i32, %arg1: i32) -> (i32, i32, i32) {
    %c0_i32 = arith.constant 0 : i32
    %c0_i32_0 = arith.constant 0 : i32
    %c0_i32_1 = arith.constant 0 : i32
    return %arg0, %c0_i32, %c0_i32_0 : i32, i32, i32
  }
  func.func @transform_1(%arg0: i32, %arg1: i32) -> (i32, i32, i32) {
    %c0_i32 = arith.constant 0 : i32
    %c0_i32_0 = arith.constant 0 : i32
    %c0_i32_1 = arith.constant 0 : i32
    return %arg1, %c0_i32, %c0_i32_0 : i32, i32, i32
  }
  func.func @transform_2(%arg0: i32, %arg1: i32) -> (i32, i32, i32) {
    %c0_i32 = arith.constant 0 : i32
    %c0_i32_0 = arith.constant 0 : i32
    %c0_i32_1 = arith.constant 0 : i32
    return %arg1, %c0_i32, %c0_i32_0 : i32, i32, i32
  }
  func.func @transform_3(%arg0: i32, %arg1: i32) -> (i32, i32, i32) {
    %c0_i32 = arith.constant 0 : i32
    %c0_i32_0 = arith.constant 0 : i32
    %c0_i32_1 = arith.constant 0 : i32
    return %arg1, %c0_i32, %c0_i32_0 : i32, i32, i32
  }
  func.func @transform_4(%arg0: i32, %arg1: i32) -> (i32, i32, i32) {
    %c0_i32 = arith.constant 0 : i32
    %c0_i32_0 = arith.constant 0 : i32
    %c0_i32_1 = arith.constant 0 : i32
    return %arg1, %c0_i32, %c0_i32_0 : i32, i32, i32
  }
  func.func @transform_5(%arg0: i32, %arg1: i32) -> (i32, i32, i32) {
    %c0_i32 = arith.constant 0 : i32
    %c0_i32_0 = arith.constant 0 : i32
    %c0_i32_1 = arith.constant 0 : i32
    return %arg1, %c0_i32, %c0_i32_0 : i32, i32, i32
  }
  func.func @transform_6(%arg0: i32, %arg1: i32) -> (i32, i32, i32) {
    %c0_i32 = arith.constant 0 : i32
    %c0_i32_0 = arith.constant 0 : i32
    %c0_i32_1 = arith.constant 0 : i32
    return %arg1, %c0_i32, %c0_i32_0 : i32, i32, i32
  }
  func.func @transform_7(%arg0: i32, %arg1: i32) -> (i32, i32, i32) {
    %c0_i32 = arith.constant 0 : i32
    %c0_i32_0 = arith.constant 0 : i32
    %c0_i32_1 = arith.constant 0 : i32
    return %arg1, %c0_i32, %c0_i32_0 : i32, i32, i32
  }
  func.func @transform_8(%arg0: i32, %arg1: i32) -> (i32, i32, i32) {
    %c0_i32 = arith.constant 0 : i32
    %c0_i32_0 = arith.constant 0 : i32
    %c0_i32_1 = arith.constant 0 : i32
    return %arg1, %c0_i32, %c0_i32_0 : i32, i32, i32
  }
  func.func @transform_9(%arg0: i32, %arg1: i32) -> (i32, i32, i32) {
    %c0_i32 = arith.constant 0 : i32
    %c0_i32_0 = arith.constant 0 : i32
    %c0_i32_1 = arith.constant 0 : i32
    return %arg1, %c0_i32, %c0_i32_0 : i32, i32, i32
  }
  func.func @transform_10(%arg0: i32, %arg1: i32) -> (i32, i32, i32) {
    %c0_i32 = arith.constant 0 : i32
    %c0_i32_0 = arith.constant 0 : i32
    %c0_i32_1 = arith.constant 0 : i32
    return %arg1, %c0_i32, %c0_i32_0 : i32, i32, i32
  }
  func.func @transform_11(%arg0: i32, %arg1: i32) -> (i32, i32, i32) {
    %c0_i32 = arith.constant 0 : i32
    %c0_i32_0 = arith.constant 0 : i32
    %c0_i32_1 = arith.constant 0 : i32
    return %arg1, %c0_i32, %c0_i32_0 : i32, i32, i32
  }
  func.func @transform_12(%arg0: i32, %arg1: i32) -> (i32, i32, i32) {
    %c0_i32 = arith.constant 0 : i32
    %c0_i32_0 = arith.constant 0 : i32
    %c0_i32_1 = arith.constant 0 : i32
    return %arg1, %c0_i32, %c0_i32_0 : i32, i32, i32
  }
  func.func @transform_13(%arg0: i32, %arg1: i32) -> (i32, i32, i32) {
    %c0_i32 = arith.constant 0 : i32
    %c0_i32_0 = arith.constant 0 : i32
    %c0_i32_1 = arith.constant 0 : i32
    return %arg0, %c0_i32, %c0_i32_0 : i32, i32, i32
  }
}

</mosaic_0001>

<llo_original>
// kernel: tpu_custom_call.1
$region0: #{tpu_custom_call.1}
  #allocation0 [shape = 'u32[]', space=smem, size = 0x4, offset = 0x4, fixed_abs, tag = 'smem constant byte address 0x4 - core index']
  #allocation1 [shape = 'u32[144,128]{1,0:T(1,128)}', space=vmem, size = 0x12000, scoped, tag = 'internal scratch']
  %s0 = inlined_call_operand.hbm [shape: f32[2,8,32], index: 0, kind: input, shape index: {}]
  %s1 = inlined_call_operand.vmem [shape: f32[2,32,288], index: 1, kind: input, shape index: {}]
  %s2 = inlined_call_operand.vmem [shape: f32[2,1,288], index: 2, kind: input, shape index: {}]
  %s3 = inlined_call_operand.hbm [shape: f32[2,32,32], index: 3, kind: input, shape index: {}]
  %s4 = inlined_call_operand.vmem [shape: f32[2,1,32], index: 4, kind: input, shape index: {}]
  %s5 = inlined_call_operand.vmem [shape: f32[2,1,32], index: 5, kind: input, shape index: {}]
  %s6 = inlined_call_operand.vmem [shape: f32[2,1,32], index: 6, kind: input, shape index: {}]
  %s7 = inlined_call_operand.hbm [shape: f32[2,32,64], index: 7, kind: input, shape index: {}]
  %s8 = inlined_call_operand.vmem [shape: f32[2,1,64], index: 8, kind: input, shape index: {}]
  %s9 = inlined_call_operand.vmem [shape: f32[2,64,32], index: 9, kind: input, shape index: {}]
  %s10 = inlined_call_operand.vmem [shape: f32[2,1,32], index: 10, kind: input, shape index: {}]
  %s11 = inlined_call_operand.vmem [shape: f32[2,1,32], index: 11, kind: input, shape index: {}]
  %s12 = inlined_call_operand.vmem [shape: f32[2,1,32], index: 12, kind: input, shape index: {}]
  %s13 = inlined_call_operand.hbm [shape: f32[2,8,32], index: 13, kind: output, shape index: {}]
  %s14 = sld [smem:[#allocation0]]
  $region101: #{tpu_custom_call.1} parent=0
    _
  %s16 = ssub.s32 1, %s14
  %s17 = scalar_select 0, %s16, %s14
  $region1: #{tpu_custom_call.1} parent=0
    #allocation2 [shape = 'u8[8192]{0}', space=vmem, size = 0x2000, scoped, tag = 'input window, operand 0, single buffered']
    #allocation3 [shape = 's32[2]{0}', space=sflag, size = 0x8, scoped, tag = 'scoped memory for tpu_custom_call.1']
    #allocation4 [shape = 's32[2]{0}', space=sflag, size = 0x8, scoped, tag = 'scoped memory for tpu_custom_call.1']
    #allocation5 [shape = 'u8[32768]{0}', space=vmem, size = 0x8000, scoped, tag = 'input window, operand 3']
    #allocation6 [shape = 's32[2]{0}', space=sflag, size = 0x8, scoped, tag = 'scoped memory for tpu_custom_call.1']
    #allocation7 [shape = 'u8[32768]{0}', space=vmem, size = 0x8000, scoped, tag = 'input window, operand 7']
    #allocation8 [shape = 'u8[8192]{0}', space=vmem, size = 0x2000, scoped, tag = 'output window, operand 0, single buffered']
    %18 = vsyncpa [#allocation3], 0
    %19 = vsyncpa [#allocation6], 0
    %s20 = scalar_lea.sflag [#allocation6], 1
    %21 = vsyncpa %s20, 0
    %22 = vsyncpa [#allocation4], 0
    loop: start=0, step=1, limit=4
    $region2: #{tpu_custom_call.1} parent=1 // loop_pre_header
      _
    $region3: #{tpu_custom_call.1} parent=1 // loop_header
      %s24 = sphi 0, %s28
      %p25 = scmp.ge.s32.totalorder %s24, 4
      %s31 = sphi 0, %s43
      %s32 = sphi 0, %s39
      %s33 = sphi 0, %s31
      %s34 = sphi 0, %s32
      %s35 = sphi 0, %s33
      %s36 = sphi 0, %s34
      %s46 = sphi 0, %s48
      %s49 = sphi 0, %s46
      %s50 = sphi 0, %s49
      %s66 = sphi 0, %s50
      %s72 = sphi 0, %s74
      %s75 = sphi 0, %s72
      %s76 = sphi 0, %s75
      %s92 = sphi 0, %s76
      %s98 = sphi 0, %s100
      %s101 = sphi 0, %s98
      %s102 = sphi 0, %s101
      %s118 = sphi 0, %s102
      %s124 = sphi 0, %s126
      %s127 = sphi 0, %s124
      %s128 = sphi 0, %s127
      %s144 = sphi 0, %s128
      %s150 = sphi 0, %s152
      %s153 = sphi 0, %s150
      %s154 = sphi 0, %s153
      %s170 = sphi 0, %s154
      %s176 = sphi 0, %s178
      %s179 = sphi 0, %s176
      %s180 = sphi 0, %s179
      %s196 = sphi 0, %s180
      %s202 = sphi 0, %s204
      %s205 = sphi 0, %s202
      %s206 = sphi 0, %s205
      %s222 = sphi 0, %s206
      %s228 = sphi 0, %s230
      %s231 = sphi 0, %s228
      %s232 = sphi 0, %s231
      %s248 = sphi 0, %s232
      %s254 = sphi 0, %s256
      %s257 = sphi 0, %s254
      %s258 = sphi 0, %s257
      %s274 = sphi 0, %s258
      %s280 = sphi 0, %s282
      %s283 = sphi 0, %s280
      %s284 = sphi 0, %s283
      %s300 = sphi 0, %s284
      %s306 = sphi 0, %s308
      %s309 = sphi 0, %s306
      %s310 = sphi 0, %s309
      %s326 = sphi 0, %s310
      %s332 = sphi 0, %s334
      %s335 = sphi 0, %s332
      %s336 = sphi 0, %s335
      %s352 = sphi 0, %s336
      %s358 = sphi 0, %s360
      %s361 = sphi 0, %s358
      %s362 = sphi 0, %s361
      %s378 = sphi 0, %s362
      %s384 = sphi 0, %s386
      %s387 = sphi 0, %s384
      %s388 = sphi 0, %s387
      %s404 = sphi 0, %s388
    $region4: #{tpu_custom_call.1} parent=1 // loop_header_branch
      %27 = sbr.rel (%p25) target = $region8
    $region5: #{tpu_custom_call.1} parent=1 // loop_body
      %s29 = ssub.s32 %s24, 1
      %s30 = ssub.s32 %s24, 2
      %s37 = sadd.s32 1, %s32
      %p38 = scmp.ge.s32.totalorder %s37, 2
      %s39 = scalar_select %p38, 0, %s37
      %s40 = sadd.s32 1, %s31
      %s41 = scalar_select %p38, %s40, %s31
      %p42 = scmp.ge.s32.totalorder %s41, 1
      %s43 = scalar_select %p42, 0, %s41
      %s44 = ssub.s32 %s31, %s43
      %p45 = scmp.eq.s32.totalorder %s44, 0
      %s47 = sadd.s32 %s46, 1
      %s48 = scalar_select %p45, %s46, %s47
      %p51 = pneg %p45
      %p52 = scmp.eq.s32.totalorder %s24, 1
      %p53 = por %p51, %p52
      %p54 = scmp.ne.s32.totalorder %s46, %s49
      %p55 = scmp.eq.s32.totalorder %s24, 0
      %p56 = por %p54, %p55
      %p57 = scmp.ne.s32.totalorder %s46, %s49
      %p58 = scmp.eq.s32.totalorder %s29, 1
      %p59 = por %p57, %p58
      %p60 = scmp.ne.s32.totalorder %s49, %s50
      %p61 = scmp.eq.s32.totalorder %s29, 0
      %p62 = por %p60, %p61
      %p63 = scmp.ne.s32.totalorder %s49, %s50
      %p64 = scmp.eq.s32.totalorder %s30, 1
      %p65 = por %p63, %p64
      %p67 = scmp.ne.s32.totalorder %s50, %s66
      %p68 = scmp.eq.s32.totalorder %s30, 0
      %p69 = por %p67, %p68
      %s70 = ssub.s32 %s32, %s39
      %p71 = scmp.eq.s32.totalorder %s70, 0
      %s73 = sadd.s32 %s72, 1
      %s74 = scalar_select %p71, %s72, %s73
      %p77 = pneg %p71
      %p78 = scmp.eq.s32.totalorder %s24, 1
      %p79 = por %p77, %p78
      %p80 = scmp.ne.s32.totalorder %s72, %s75
      %p81 = scmp.eq.s32.totalorder %s24, 0
      %p82 = por %p80, %p81
      %p83 = scmp.ne.s32.totalorder %s72, %s75
      %p84 = scmp.eq.s32.totalorder %s29, 1
      %p85 = por %p83, %p84
      %p86 = scmp.ne.s32.totalorder %s75, %s76
      %p87 = scmp.eq.s32.totalorder %s29, 0
      %p88 = por %p86, %p87
      %p89 = scmp.ne.s32.totalorder %s75, %s76
      %p90 = scmp.eq.s32.totalorder %s30, 1
      %p91 = por %p89, %p90
      %p93 = scmp.ne.s32.totalorder %s76, %s92
      %p94 = scmp.eq.s32.totalorder %s30, 0
      %p95 = por %p93, %p94
      %s96 = ssub.s32 %s32, %s39
      %p97 = scmp.eq.s32.totalorder %s96, 0
      %s99 = sadd.s32 %s98, 1
      %s100 = scalar_select %p97, %s98, %s99
      %p103 = pneg %p97
      %p104 = scmp.eq.s32.totalorder %s24, 1
      %p105 = por %p103, %p104
      %p106 = scmp.ne.s32.totalorder %s98, %s101
      %p107 = scmp.eq.s32.totalorder %s24, 0
      %p108 = por %p106, %p107
      %p109 = scmp.ne.s32.totalorder %s98, %s101
      %p110 = scmp.eq.s32.totalorder %s29, 1
      %p111 = por %p109, %p110
      %p112 = scmp.ne.s32.totalorder %s101, %s102
      %p113 = scmp.eq.s32.totalorder %s29, 0
      %p114 = por %p112, %p113
      %p115 = scmp.ne.s32.totalorder %s101, %s102
      %p116 = scmp.eq.s32.totalorder %s30, 1
      %p117 = por %p115, %p116
      %p119 = scmp.ne.s32.totalorder %s102, %s118
      %p120 = scmp.eq.s32.totalorder %s30, 0
      %p121 = por %p119, %p120
      %s122 = ssub.s32 %s32, %s39
      %p123 = scmp.eq.s32.totalorder %s122, 0
      %s125 = sadd.s32 %s124, 1
      %s126 = scalar_select %p123, %s124, %s125
      %p129 = pneg %p123
      %p130 = scmp.eq.s32.totalorder %s24, 1
      %p131 = por %p129, %p130
      %p132 = scmp.ne.s32.totalorder %s124, %s127
      %p133 = scmp.eq.s32.totalorder %s24, 0
      %p134 = por %p132, %p133
      %p135 = scmp.ne.s32.totalorder %s124, %s127
      %p136 = scmp.eq.s32.totalorder %s29, 1
      %p137 = por %p135, %p136
      %p138 = scmp.ne.s32.totalorder %s127, %s128
      %p139 = scmp.eq.s32.totalorder %s29, 0
      %p140 = por %p138, %p139
      %p141 = scmp.ne.s32.totalorder %s127, %s128
      %p142 = scmp.eq.s32.totalorder %s30, 1
      %p143 = por %p141, %p142
      %p145 = scmp.ne.s32.totalorder %s128, %s144
      %p146 = scmp.eq.s32.totalorder %s30, 0
      %p147 = por %p145, %p146
      %s148 = ssub.s32 %s32, %s39
      %p149 = scmp.eq.s32.totalorder %s148, 0
      %s151 = sadd.s32 %s150, 1
      %s152 = scalar_select %p149, %s150, %s151
      %p155 = pneg %p149
      %p156 = scmp.eq.s32.totalorder %s24, 1
      %p157 = por %p155, %p156
      %p158 = scmp.ne.s32.totalorder %s150, %s153
      %p159 = scmp.eq.s32.totalorder %s24, 0
      %p160 = por %p158, %p159
      %p161 = scmp.ne.s32.totalorder %s150, %s153
      %p162 = scmp.eq.s32.totalorder %s29, 1
      %p163 = por %p161, %p162
      %p164 = scmp.ne.s32.totalorder %s153, %s154
      %p165 = scmp.eq.s32.totalorder %s29, 0
      %p166 = por %p164, %p165
      %p167 = scmp.ne.s32.totalorder %s153, %s154
      %p168 = scmp.eq.s32.totalorder %s30, 1
      %p169 = por %p167, %p168
      %p171 = scmp.ne.s32.totalorder %s154, %s170
      %p172 = scmp.eq.s32.totalorder %s30, 0
      %p173 = por %p171, %p172
      %s174 = ssub.s32 %s32, %s39
      %p175 = scmp.eq.s32.totalorder %s174, 0
      %s177 = sadd.s32 %s176, 1
      %s178 = scalar_select %p175, %s176, %s177
      %p181 = pneg %p175
      %p182 = scmp.eq.s32.totalorder %s24, 1
      %p183 = por %p181, %p182
      %p184 = scmp.ne.s32.totalorder %s176, %s179
      %p185 = scmp.eq.s32.totalorder %s24, 0
      %p186 = por %p184, %p185
      %p187 = scmp.ne.s32.totalorder %s176, %s179
      %p188 = scmp.eq.s32.totalorder %s29, 1
      %p189 = por %p187, %p188
      %p190 = scmp.ne.s32.totalorder %s179, %s180
      %p191 = scmp.eq.s32.totalorder %s29, 0
      %p192 = por %p190, %p191
      %p193 = scmp.ne.s32.totalorder %s179, %s180
      %p194 = scmp.eq.s32.totalorder %s30, 1
      %p195 = por %p193, %p194
      %p197 = scmp.ne.s32.totalorder %s180, %s196
      %p198 = scmp.eq.s32.totalorder %s30, 0
      %p199 = por %p197, %p198
      %s200 = ssub.s32 %s32, %s39
      %p201 = scmp.eq.s32.totalorder %s200, 0
      %s203 = sadd.s32 %s202, 1
      %s204 = scalar_select %p201, %s202, %s203
      %p207 = pneg %p201
      %p208 = scmp.eq.s32.totalorder %s24, 1
      %p209 = por %p207, %p208
      %p210 = scmp.ne.s32.totalorder %s202, %s205
      %p211 = scmp.eq.s32.totalorder %s24, 0
      %p212 = por %p210, %p211
      %p213 = scmp.ne.s32.totalorder %s202, %s205
      %p214 = scmp.eq.s32.totalorder %s29, 1
      %p215 = por %p213, %p214
      %p216 = scmp.ne.s32.totalorder %s205, %s206
      %p217 = scmp.eq.s32.totalorder %s29, 0
      %p218 = por %p216, %p217
      %p219 = scmp.ne.s32.totalorder %s205, %s206
      %p220 = scmp.eq.s32.totalorder %s30, 1
      %p221 = por %p219, %p220
      %p223 = scmp.ne.s32.totalorder %s206, %s222
      %p224 = scmp.eq.s32.totalorder %s30, 0
      %p225 = por %p223, %p224
      %s226 = ssub.s32 %s32, %s39
      %p227 = scmp.eq.s32.totalorder %s226, 0
      %s229 = sadd.s32 %s228, 1
      %s230 = scalar_select %p227, %s228, %s229
      %p233 = pneg %p227
      %p234 = scmp.eq.s32.totalorder %s24, 1
      %p235 = por %p233, %p234
      %p236 = scmp.ne.s32.totalorder %s228, %s231
      %p237 = scmp.eq.s32.totalorder %s24, 0
      %p238 = por %p236, %p237
      %p239 = scmp.ne.s32.totalorder %s228, %s231
      %p240 = scmp.eq.s32.totalorder %s29, 1
      %p241 = por %p239, %p240
      %p242 = scmp.ne.s32.totalorder %s231, %s232
      %p243 = scmp.eq.s32.totalorder %s29, 0
      %p244 = por %p242, %p243
      %p245 = scmp.ne.s32.totalorder %s231, %s232
      %p246 = scmp.eq.s32.totalorder %s30, 1
      %p247 = por %p245, %p246
      %p249 = scmp.ne.s32.totalorder %s232, %s248
      %p250 = scmp.eq.s32.totalorder %s30, 0
      %p251 = por %p249, %p250
      %s252 = ssub.s32 %s32, %s39
      %p253 = scmp.eq.s32.totalorder %s252, 0
      %s255 = sadd.s32 %s254, 1
      %s256 = scalar_select %p253, %s254, %s255
      %p259 = pneg %p253
      %p260 = scmp.eq.s32.totalorder %s24, 1
      %p261 = por %p259, %p260
      %p262 = scmp.ne.s32.totalorder %s254, %s257
      %p263 = scmp.eq.s32.totalorder %s24, 0
      %p264 = por %p262, %p263
      %p265 = scmp.ne.s32.totalorder %s254, %s257
      %p266 = scmp.eq.s32.totalorder %s29, 1
      %p267 = por %p265, %p266
      %p268 = scmp.ne.s32.totalorder %s257, %s258
      %p269 = scmp.eq.s32.totalorder %s29, 0
      %p270 = por %p268, %p269
      %p271 = scmp.ne.s32.totalorder %s257, %s258
      %p272 = scmp.eq.s32.totalorder %s30, 1
      %p273 = por %p271, %p272
      %p275 = scmp.ne.s32.totalorder %s258, %s274
      %p276 = scmp.eq.s32.totalorder %s30, 0
      %p277 = por %p275, %p276
      %s278 = ssub.s32 %s32, %s39
      %p279 = scmp.eq.s32.totalorder %s278, 0
      %s281 = sadd.s32 %s280, 1
      %s282 = scalar_select %p279, %s280, %s281
      %p285 = pneg %p279
      %p286 = scmp.eq.s32.totalorder %s24, 1
      %p287 = por %p285, %p286
      %p288 = scmp.ne.s32.totalorder %s280, %s283
      %p289 = scmp.eq.s32.totalorder %s24, 0
      %p290 = por %p288, %p289
      %p291 = scmp.ne.s32.totalorder %s280, %s283
      %p292 = scmp.eq.s32.totalorder %s29, 1
      %p293 = por %p291, %p292
      %p294 = scmp.ne.s32.totalorder %s283, %s284
      %p295 = scmp.eq.s32.totalorder %s29, 0
      %p296 = por %p294, %p295
      %p297 = scmp.ne.s32.totalorder %s283, %s284
      %p298 = scmp.eq.s32.totalorder %s30, 1
      %p299 = por %p297, %p298
      %p301 = scmp.ne.s32.totalorder %s284, %s300
      %p302 = scmp.eq.s32.totalorder %s30, 0
      %p303 = por %p301, %p302
      %s304 = ssub.s32 %s32, %s39
      %p305 = scmp.eq.s32.totalorder %s304, 0
      %s307 = sadd.s32 %s306, 1
      %s308 = scalar_select %p305, %s306, %s307
      %p311 = pneg %p305
      %p312 = scmp.eq.s32.totalorder %s24, 1
      %p313 = por %p311, %p312
      %p314 = scmp.ne.s32.totalorder %s306, %s309
      %p315 = scmp.eq.s32.totalorder %s24, 0
      %p316 = por %p314, %p315
      %p317 = scmp.ne.s32.totalorder %s306, %s309
      %p318 = scmp.eq.s32.totalorder %s29, 1
      %p319 = por %p317, %p318
      %p320 = scmp.ne.s32.totalorder %s309, %s310
      %p321 = scmp.eq.s32.totalorder %s29, 0
      %p322 = por %p320, %p321
      %p323 = scmp.ne.s32.totalorder %s309, %s310
      %p324 = scmp.eq.s32.totalorder %s30, 1
      %p325 = por %p323, %p324
      %p327 = scmp.ne.s32.totalorder %s310, %s326
      %p328 = scmp.eq.s32.totalorder %s30, 0
      %p329 = por %p327, %p328
      %s330 = ssub.s32 %s32, %s39
      %p331 = scmp.eq.s32.totalorder %s330, 0
      %s333 = sadd.s32 %s332, 1
      %s334 = scalar_select %p331, %s332, %s333
      %p337 = pneg %p331
      %p338 = scmp.eq.s32.totalorder %s24, 1
      %p339 = por %p337, %p338
      %p340 = scmp.ne.s32.totalorder %s332, %s335
      %p341 = scmp.eq.s32.totalorder %s24, 0
      %p342 = por %p340, %p341
      %p343 = scmp.ne.s32.totalorder %s332, %s335
      %p344 = scmp.eq.s32.totalorder %s29, 1
      %p345 = por %p343, %p344
      %p346 = scmp.ne.s32.totalorder %s335, %s336
      %p347 = scmp.eq.s32.totalorder %s29, 0
      %p348 = por %p346, %p347
      %p349 = scmp.ne.s32.totalorder %s335, %s336
      %p350 = scmp.eq.s32.totalorder %s30, 1
      %p351 = por %p349, %p350
      %p353 = scmp.ne.s32.totalorder %s336, %s352
      %p354 = scmp.eq.s32.totalorder %s30, 0
      %p355 = por %p353, %p354
      %s356 = ssub.s32 %s32, %s39
      %p357 = scmp.eq.s32.totalorder %s356, 0
      %s359 = sadd.s32 %s358, 1
      %s360 = scalar_select %p357, %s358, %s359
      %p363 = pneg %p357
      %p364 = scmp.eq.s32.totalorder %s24, 1
      %p365 = por %p363, %p364
      %p366 = scmp.ne.s32.totalorder %s358, %s361
      %p367 = scmp.eq.s32.totalorder %s24, 0
      %p368 = por %p366, %p367
      %p369 = scmp.ne.s32.totalorder %s358, %s361
      %p370 = scmp.eq.s32.totalorder %s29, 1
      %p371 = por %p369, %p370
      %p372 = scmp.ne.s32.totalorder %s361, %s362
      %p373 = scmp.eq.s32.totalorder %s29, 0
      %p374 = por %p372, %p373
      %p375 = scmp.ne.s32.totalorder %s361, %s362
      %p376 = scmp.eq.s32.totalorder %s30, 1
      %p377 = por %p375, %p376
      %p379 = scmp.ne.s32.totalorder %s362, %s378
      %p380 = scmp.eq.s32.totalorder %s30, 0
      %p381 = por %p379, %p380
      %s382 = ssub.s32 %s31, %s43
      %p383 = scmp.eq.s32.totalorder %s382, 0
      %s385 = sadd.s32 %s384, 1
      %s386 = scalar_select %p383, %s384, %s385
      %p389 = pneg %p383
      %p390 = scmp.eq.s32.totalorder %s24, 1
      %p391 = por %p389, %p390
      %p392 = scmp.ne.s32.totalorder %s384, %s387
      %p393 = scmp.eq.s32.totalorder %s24, 0
      %p394 = por %p392, %p393
      %p395 = scmp.ne.s32.totalorder %s384, %s387
      %p396 = scmp.eq.s32.totalorder %s29, 1
      %p397 = por %p395, %p396
      %p398 = scmp.ne.s32.totalorder %s387, %s388
      %p399 = scmp.eq.s32.totalorder %s29, 0
      %p400 = por %p398, %p399
      %p401 = scmp.ne.s32.totalorder %s387, %s388
      %p402 = scmp.eq.s32.totalorder %s30, 1
      %p403 = por %p401, %p402
      %p405 = scmp.ne.s32.totalorder %s388, %s404
      %p406 = scmp.eq.s32.totalorder %s30, 0
      %p407 = por %p405, %p406
      %p408 = scmp.le.s32.totalorder 1, %s24
      %p409 = scmp.lt.s32.totalorder %s24, 3
      %p410 = pnand %p408, %p409
      %p411 = pneg %p410
      // Predicated region
      $region9: #{tpu_custom_call.1} parent=5 // pred_check
        _
      $region10: #{tpu_custom_call.1} parent=5 // pred_check_branch
        %413 = sbr.rel (%p410) target = $region12
      $region11: #{tpu_custom_call.1} parent=5 // pred_region
        %s414 = ssub.s32 %s24, 1
        // Predicated region
        $region13: #{tpu_custom_call.1} parent=11 // pred_check
          %p415 = pneg %p62
        $region14: #{tpu_custom_call.1} parent=11 // pred_check_branch
          %417 = sbr.rel (%p415) target = $region16
        $region15: #{tpu_custom_call.1} parent=11 // pred_region
          %s418 = smul.u32 2, %s33
          %s420 = ssub.s32 256, 256
          %421 = vsyncadd [#allocation3], %s420
          %s422 = smul.addr %s418, 128
          %s423 = scalar_lea.hbm %s0, %s422
          %s424 = sshll.u32 [#allocation2], 4
          %s425 = int_to_ptr.vmem [resolvable:$true] %s424
          %430 = dma.hbm_to_vmem [thread:$0]  %s423, 256, %s425, [#allocation3], 128, 128, 8
        $region16: #{tpu_custom_call.1} parent=11 // pred_fallthru
          _
      $region12: #{tpu_custom_call.1} parent=5 // pred_fallthru
        _
      %p431 = scmp.lt.s32.totalorder %s24, 2
      // Predicated region
      $region17: #{tpu_custom_call.1} parent=5 // pred_check
        %p432 = pneg %p431
      $region18: #{tpu_custom_call.1} parent=5 // pred_check_branch
        %434 = sbr.rel (%p432) target = $region20
      $region19: #{tpu_custom_call.1} parent=5 // pred_region
        // Predicated region
        $region21: #{tpu_custom_call.1} parent=19 // pred_check
          %p435 = pneg %p82
        $region22: #{tpu_custom_call.1} parent=19 // pred_check_branch
          %437 = sbr.rel (%p435) target = $region24
        $region23: #{tpu_custom_call.1} parent=19 // pred_region
          %p438 = scmp.lt.s32.totalorder %s32, 1
          %s439 = scalar_select %p438, %s32, 1
          %s440 = smul.addr %s439, 12
          %s441 = smul.addr %s440, 8
          %s442 = scalar_lea.vmem %s1, %s441
        $region24: #{tpu_custom_call.1} parent=19 // pred_fallthru
          _
        // Predicated region
        $region25: #{tpu_custom_call.1} parent=19 // pred_check
          %p443 = pneg %p108
        $region26: #{tpu_custom_call.1} parent=19 // pred_check_branch
          %445 = sbr.rel (%p443) target = $region28
        $region27: #{tpu_custom_call.1} parent=19 // pred_region
          %p446 = scmp.lt.s32.totalorder %s32, 1
          %s447 = scalar_select %p446, %s32, 1
          %s448 = smul.addr %s447, 3
          %s449 = scalar_lea.vmem %s2, %s448
        $region28: #{tpu_custom_call.1} parent=19 // pred_fallthru
          _
        // Predicated region
        $region29: #{tpu_custom_call.1} parent=19 // pred_check
          %p450 = pneg %p134
        $region30: #{tpu_custom_call.1} parent=19 // pred_check_branch
          %452 = sbr.rel (%p450) target = $region32
        $region31: #{tpu_custom_call.1} parent=19 // pred_region
          %s453 = sand.u32 %s24, 1
          %s454 = scalar_lea.sflag [#allocation6], %s453
          %s455 = sand.u32 %s124, 1
          %s456 = smul.addr %s455, 32
          %s457 = scalar_lea.vmem [#allocation5], %s456
          %s459 = ssub.s32 512, 512
          %460 = vsyncadd %s454, %s459
          %s461 = smul.addr %s32, 4
          %s462 = smul.addr %s461, 128
          %s463 = scalar_lea.hbm %s3, %s462
          %s464 = sshll.u32 %s457, 4
          %s465 = int_to_ptr.vmem [resolvable:$true] %s464
          %470 = dma.hbm_to_vmem [thread:$0]  %s463, 512, %s465, %s454, 128, 128, 8
        $region32: #{tpu_custom_call.1} parent=19 // pred_fallthru
          _
        // Predicated region
        $region33: #{tpu_custom_call.1} parent=19 // pred_check
          %p471 = pneg %p160
        $region34: #{tpu_custom_call.1} parent=19 // pred_check_branch
          %473 = sbr.rel (%p471) target = $region36
        $region35: #{tpu_custom_call.1} parent=19 // pred_region
          %p474 = scmp.lt.s32.totalorder %s32, 1
          %s475 = scalar_select %p474, %s32, 1
          %s476 = scalar_lea.vmem %s4, %s475
        $region36: #{tpu_custom_call.1} parent=19 // pred_fallthru
          _
        // Predicated region
        $region37: #{tpu_custom_call.1} parent=19 // pred_check
          %p477 = pneg %p186
        $region38: #{tpu_custom_call.1} parent=19 // pred_check_branch
          %479 = sbr.rel (%p477) target = $region40
        $region39: #{tpu_custom_call.1} parent=19 // pred_region
          %p480 = scmp.lt.s32.totalorder %s32, 1
          %s481 = scalar_select %p480, %s32, 1
          %s482 = scalar_lea.vmem %s5, %s481
        $region40: #{tpu_custom_call.1} parent=19 // pred_fallthru
          _
        // Predicated region
        $region41: #{tpu_custom_call.1} parent=19 // pred_check
          %p483 = pneg %p212
        $region42: #{tpu_custom_call.1} parent=19 // pred_check_branch
          %485 = sbr.rel (%p483) target = $region44
        $region43: #{tpu_custom_call.1} parent=19 // pred_region
          %p486 = scmp.lt.s32.totalorder %s32, 1
          %s487 = scalar_select %p486, %s32, 1
          %s488 = scalar_lea.vmem %s6, %s487
        $region44: #{tpu_custom_call.1} parent=19 // pred_fallthru
          _
        // Predicated region
        $region45: #{tpu_custom_call.1} parent=19 // pred_check
          %p489 = pneg %p238
        $region46: #{tpu_custom_call.1} parent=19 // pred_check_branch
          %491 = sbr.rel (%p489) target = $region48
        $region47: #{tpu_custom_call.1} parent=19 // pred_region
          %s492 = sand.u32 %s24, 1
          %s493 = scalar_lea.sflag [#allocation6], %s492
          %s494 = sand.u32 %s228, 1
          %s495 = smul.addr %s494, 32
          %s496 = scalar_lea.vmem [#allocation7], %s495
          %s498 = ssub.s32 512, 512
          %499 = vsyncadd %s493, %s498
          %s500 = smul.addr %s32, 4
          %s501 = smul.addr %s500, 128
          %s502 = scalar_lea.hbm %s7, %s501
          %s503 = sshll.u32 %s496, 4
          %s504 = int_to_ptr.vmem [resolvable:$true] %s503
          %509 = dma.hbm_to_vmem [thread:$0]  %s502, 512, %s504, %s493, 128, 128, 8
        $region48: #{tpu_custom_call.1} parent=19 // pred_fallthru
          _
        // Predicated region
        $region49: #{tpu_custom_call.1} parent=19 // pred_check
          %p510 = pneg %p264
        $region50: #{tpu_custom_call.1} parent=19 // pred_check_branch
          %512 = sbr.rel (%p510) target = $region52
        $region51: #{tpu_custom_call.1} parent=19 // pred_region
          %p513 = scmp.lt.s32.totalorder %s32, 1
          %s514 = scalar_select %p513, %s32, 1
          %s515 = scalar_lea.vmem %s8, %s514
        $region52: #{tpu_custom_call.1} parent=19 // pred_fallthru
          _
        // Predicated region
        $region53: #{tpu_custom_call.1} parent=19 // pred_check
          %p516 = pneg %p290
        $region54: #{tpu_custom_call.1} parent=19 // pred_check_branch
          %518 = sbr.rel (%p516) target = $region56
        $region55: #{tpu_custom_call.1} parent=19 // pred_region
          %p519 = scmp.lt.s32.totalorder %s32, 1
          %s520 = scalar_select %p519, %s32, 1
          %s521 = smul.addr %s520, 8
          %s522 = smul.addr %s521, 8
          %s523 = scalar_lea.vmem %s9, %s522
        $region56: #{tpu_custom_call.1} parent=19 // pred_fallthru
          _
        // Predicated region
        $region57: #{tpu_custom_call.1} parent=19 // pred_check
          %p524 = pneg %p316
        $region58: #{tpu_custom_call.1} parent=19 // pred_check_branch
          %526 = sbr.rel (%p524) target = $region60
        $region59: #{tpu_custom_call.1} parent=19 // pred_region
          %p527 = scmp.lt.s32.totalorder %s32, 1
          %s528 = scalar_select %p527, %s32, 1
          %s529 = scalar_lea.vmem %s10, %s528
        $region60: #{tpu_custom_call.1} parent=19 // pred_fallthru
          _
        // Predicated region
        $region61: #{tpu_custom_call.1} parent=19 // pred_check
          %p530 = pneg %p342
        $region62: #{tpu_custom_call.1} parent=19 // pred_check_branch
          %532 = sbr.rel (%p530) target = $region64
        $region63: #{tpu_custom_call.1} parent=19 // pred_region
          %p533 = scmp.lt.s32.totalorder %s32, 1
          %s534 = scalar_select %p533, %s32, 1
          %s535 = scalar_lea.vmem %s11, %s534
        $region64: #{tpu_custom_call.1} parent=19 // pred_fallthru
          _
        // Predicated region
        $region65: #{tpu_custom_call.1} parent=19 // pred_check
          %p536 = pneg %p368
        $region66: #{tpu_custom_call.1} parent=19 // pred_check_branch
          %538 = sbr.rel (%p536) target = $region68
        $region67: #{tpu_custom_call.1} parent=19 // pred_region
          %p539 = scmp.lt.s32.totalorder %s32, 1
          %s540 = scalar_select %p539, %s32, 1
          %s541 = scalar_lea.vmem %s12, %s540
        $region68: #{tpu_custom_call.1} parent=19 // pred_fallthru
          _
      $region20: #{tpu_custom_call.1} parent=5 // pred_fallthru
        _
      %p542 = scmp.le.s32.totalorder 1, %s24
      %p543 = scmp.lt.s32.totalorder %s24, 3
      %p544 = pnand %p542, %p543
      %p545 = pneg %p544
      // Predicated region
      $region69: #{tpu_custom_call.1} parent=5 // pred_check
        _
      $region70: #{tpu_custom_call.1} parent=5 // pred_check_branch
        %547 = sbr.rel (%p544) target = $region72
      $region71: #{tpu_custom_call.1} parent=5 // pred_region
        %s548 = ssub.s32 %s24, 1
        // Predicated region
        $region73: #{tpu_custom_call.1} parent=71 // pred_check
          %p549 = pneg %p62
        $region74: #{tpu_custom_call.1} parent=71 // pred_check_branch
          %551 = sbr.rel (%p549) target = $region76
        $region75: #{tpu_custom_call.1} parent=71 // pred_region
          %552 = dma.done [#allocation3], 256
        $region76: #{tpu_custom_call.1} parent=71 // pred_fallthru
          _
        %s553 = sand.u32 %s29, 1
        %s554 = scalar_lea.sflag [#allocation6], %s553
        %s555 = sand.u32 %s127, 1
        %s556 = smul.addr %s555, 32
        %s557 = scalar_lea.vmem [#allocation5], %s556
        // Predicated region
        $region77: #{tpu_custom_call.1} parent=71 // pred_check
          %p558 = pneg %p140
        $region78: #{tpu_custom_call.1} parent=71 // pred_check_branch
          %560 = sbr.rel (%p558) target = $region80
        $region79: #{tpu_custom_call.1} parent=71 // pred_region
          %561 = dma.done %s554, 512
        $region80: #{tpu_custom_call.1} parent=71 // pred_fallthru
          _
        %s562 = sand.u32 %s29, 1
        %s563 = scalar_lea.sflag [#allocation6], %s562
        %s564 = sand.u32 %s231, 1
        %s565 = smul.addr %s564, 32
        %s566 = scalar_lea.vmem [#allocation7], %s565
        // Predicated region
        $region81: #{tpu_custom_call.1} parent=71 // pred_check
          %p567 = pneg %p244
        $region82: #{tpu_custom_call.1} parent=71 // pred_check_branch
          %569 = sbr.rel (%p567) target = $region84
        $region83: #{tpu_custom_call.1} parent=71 // pred_region
          %570 = dma.done %s563, 512
        $region84: #{tpu_custom_call.1} parent=71 // pred_fallthru
          _
        %p571 = pneg %p62
        %p572 = pneg %p59
        %p573 = scmp.lt.s32.totalorder %s34, 1
        %s574 = scalar_select %p573, %s34, 1
        %s575 = smul.addr %s574, 12
        %s576 = smul.addr %s575, 8
        %s577 = scalar_lea.vmem %s1, %s576
        %p578 = pneg %p88
        %p579 = pneg %p85
        %p580 = scmp.lt.s32.totalorder %s34, 1
        %s581 = scalar_select %p580, %s34, 1
        %s582 = smul.addr %s581, 3
        %s583 = scalar_lea.vmem %s2, %s582
        %p584 = pneg %p114
        %p585 = pneg %p111
        %s586 = sand.u32 %s29, 1
        %s587 = scalar_lea.sflag [#allocation6], %s586
        %s588 = sand.u32 %s127, 1
        %s589 = smul.addr %s588, 32
        %s590 = scalar_lea.vmem [#allocation5], %s589
        %p591 = pneg %p140
        %p592 = pneg %p137
        %p593 = scmp.lt.s32.totalorder %s34, 1
        %s594 = scalar_select %p593, %s34, 1
        %s595 = scalar_lea.vmem %s4, %s594
        %p596 = pneg %p166
        %p597 = pneg %p163
        %p598 = scmp.lt.s32.totalorder %s34, 1
        %s599 = scalar_select %p598, %s34, 1
        %s600 = scalar_lea.vmem %s5, %s599
        %p601 = pneg %p192
        %p602 = pneg %p189
        %p603 = scmp.lt.s32.totalorder %s34, 1
        %s604 = scalar_select %p603, %s34, 1
        %s605 = scalar_lea.vmem %s6, %s604
        %p606 = pneg %p218
        %p607 = pneg %p215
        %s608 = sand.u32 %s29, 1
        %s609 = scalar_lea.sflag [#allocation6], %s608
        %s610 = sand.u32 %s231, 1
        %s611 = smul.addr %s610, 32
        %s612 = scalar_lea.vmem [#allocation7], %s611
        %p613 = pneg %p244
        %p614 = pneg %p241
        %p615 = scmp.lt.s32.totalorder %s34, 1
        %s616 = scalar_select %p615, %s34, 1
        %s617 = scalar_lea.vmem %s8, %s616
        %p618 = pneg %p270
        %p619 = pneg %p267
        %p620 = scmp.lt.s32.totalorder %s34, 1
        %s621 = scalar_select %p620, %s34, 1
        %s622 = smul.addr %s621, 8
        %s623 = smul.addr %s622, 8
        %s624 = scalar_lea.vmem %s9, %s623
        %p625 = pneg %p296
        %p626 = pneg %p293
        %p627 = scmp.lt.s32.totalorder %s34, 1
        %s628 = scalar_select %p627, %s34, 1
        %s629 = scalar_lea.vmem %s10, %s628
        %p630 = pneg %p322
        %p631 = pneg %p319
        %p632 = scmp.lt.s32.totalorder %s34, 1
        %s633 = scalar_select %p632, %s34, 1
        %s634 = scalar_lea.vmem %s11, %s633
        %p635 = pneg %p348
        %p636 = pneg %p345
        %p637 = scmp.lt.s32.totalorder %s34, 1
        %s638 = scalar_select %p637, %s34, 1
        %s639 = scalar_lea.vmem %s12, %s638
        %p640 = pneg %p374
        %p641 = pneg %p371
        %p642 = pneg %p400
        %p643 = pneg %p397
        %s644 = smul.u32 2, %s33
        %p645 = scmp.lt.s32.totalorder %s34, 1
        %s646 = scalar_select %p645, %s34, 1
        %s647 = smul.addr %s646, 12
        %s648 = smul.addr %s647, 8
        %s649 = scalar_lea.vmem %s1, %s648
        %p650 = scmp.lt.s32.totalorder %s34, 1
        %s651 = scalar_select %p650, %s34, 1
        %s652 = smul.addr %s651, 3
        %s653 = scalar_lea.vmem %s2, %s652
        %p654 = scmp.lt.s32.totalorder %s34, 1
        %s655 = scalar_select %p654, %s34, 1
        %s656 = scalar_lea.vmem %s4, %s655
        %p657 = scmp.lt.s32.totalorder %s34, 1
        %s658 = scalar_select %p657, %s34, 1
        %s659 = scalar_lea.vmem %s5, %s658
        %p660 = scmp.lt.s32.totalorder %s34, 1
        %s661 = scalar_select %p660, %s34, 1
        %s662 = scalar_lea.vmem %s6, %s661
        %p663 = scmp.lt.s32.totalorder %s34, 1
        %s664 = scalar_select %p663, %s34, 1
        %s665 = scalar_lea.vmem %s8, %s664
        %p666 = scmp.lt.s32.totalorder %s34, 1
        %s667 = scalar_select %p666, %s34, 1
        %s668 = smul.addr %s667, 8
        %s669 = smul.addr %s668, 8
        %s670 = scalar_lea.vmem %s9, %s669
        %p671 = scmp.lt.s32.totalorder %s34, 1
        %s672 = scalar_select %p671, %s34, 1
        %s673 = scalar_lea.vmem %s10, %s672
        %p674 = scmp.lt.s32.totalorder %s34, 1
        %s675 = scalar_select %p674, %s34, 1
        %s676 = scalar_lea.vmem %s11, %s675
        %p677 = scmp.lt.s32.totalorder %s34, 1
        %s678 = scalar_select %p677, %s34, 1
        %s679 = scalar_lea.vmem %s12, %s678
        %s680 = smul.u32 2, %s33
        %p681 = scmp.eq.s32.totalorder %s34, 0
        // Predicated region
        $region85: #{tpu_custom_call.1} parent=71 // pred_check
          %p682 = pneg %p681
        $region86: #{tpu_custom_call.1} parent=71 // pred_check_branch
          %684 = sbr.rel (%p682) target = $region88
        $region87: #{tpu_custom_call.1} parent=71 // pred_region
          %v685 = vld [vmem:[#allocation2] sm:$0xff]
          %v686 = vld [vmem:[#allocation2 + $0x8] sm:$0xff]
          %vm687 = vcmask 261120
          %688 = vst.msk [vmem:[#allocation8] sm:$0xff] %vm687, %v685
          %689 = vst.msk [vmem:[#allocation8 + $0x8] sm:$0xff] %vm687, %v686
        $region88: #{tpu_custom_call.1} parent=71 // pred_fallthru
          _
        %v690 = vld [vmem:[#allocation8] sm:$0xff]
        %v691 = vld [vmem:[#allocation8 + $0x8] sm:$0xff]
        %v692 = vld [vmem:[%s649] sm:$0xff]
        %v693 = vld [vmem:[%s649 + $0x8] sm:$0xff]
        %v694 = vld [vmem:[%s649 + $0x10] sm:$0xff]
        %v695 = vld [vmem:[%s649 + $0x18] sm:$0xff]
        %v696 = vld [vmem:[%s649 + $0x20] sm:$0xff]
        %v697 = vld [vmem:[%s649 + $0x28] sm:$0xff]
        %v698 = vld [vmem:[%s649 + $0x30] sm:$0xff]
        %v699 = vld [vmem:[%s649 + $0x38] sm:$0xff]
        %v700 = vld [vmem:[%s649 + $0x40] sm:$0xff]
        %v701 = vld [vmem:[%s649 + $0x48] sm:$0xff]
        %v702 = vld [vmem:[%s649 + $0x50] sm:$0xff]
        %v703 = vld [vmem:[%s649 + $0x58] sm:$0xff]
        %v704 = vld [vmem:[%s653] sm:$0x7]
        %v706 = vlaneseq
        %v707 = vshrl.u32 %v706, 7
        %v708 = vsub.s32 0, %v707
        %v709 = vrot.slane %v704, %v708
        %v710 = vlaneseq
        %v711 = vshrl.u32 %v710, 7
        %v712 = vsub.s32 1, %v711
        %v713 = vrot.slane %v704, %v712
        %v714 = vlaneseq
        %v715 = vshrl.u32 %v714, 7
        %v716 = vsub.s32 2, %v715
        %v717 = vrot.slane %v704, %v716
        %vm721 = vcmask 261120
        %v723 = vsel %vm721, %v690, 0
        %v726 = vsel %vm721, %v691, 0
        %728 = vmatprep.subr.mxu0 %v693
        %729 = vmatpush1.msra.mxu0 %v692
        %730 = vmatprep.subr.mxu0 %v696
        %731 = vmatpush1.msra.mxu0 %v695
        %732 = vmatprep.subr.mxu0 %v699
        %733 = vmatpush1.msra.mxu0 %v698
        %734 = vmatprep.subr.mxu0 %v702
        %735 = vmatpush1.msra.mxu0 %v701
        %736 = vmatprep.subr.mxu0 0.0
        %737 = vmatpush1.msra.mxu0 0.0
        %738 = vmatprep.subr.mxu0 0.0
        %739 = vmatpush1.msra.mxu0 0.0
        %740 = vmatprep.subr.mxu0 0.0
        %741 = vmatpush1.msra.mxu0 0.0
        %742 = vmatprep.subr.mxu0 0.0
        %743 = vmatpush1.msra.mxu0 0.0
        %744 = vmatprep.subr.mxu0 0.0
        %745 = vmatpush1.msra.mxu0 0.0
        %746 = vmatprep.subr.mxu0 0.0
        %747 = vmatpush1.msra.mxu0 0.0
        %748 = vmatprep.subr.mxu0 0.0
        %749 = vmatpush1.msra.mxu0 0.0
        %750 = vmatprep.subr.mxu0 0.0
        %751 = vmatpush1.msra.mxu0 0.0
        %752 = vmatprep.subr.mxu0 0.0
        %753 = vmatpush1.msra.mxu0 0.0
        %754 = vmatprep.subr.mxu0 0.0
        %755 = vmatpush1.msra.mxu0 0.0
        %756 = vmatprep.subr.mxu0 0.0
        %757 = vmatpush1.msra.mxu0 0.0
        %758 = vmatprep.subr.mxu0 0.0
        %759 = vmatpush1.msra.mxu0 0.0
        %760 = vmatprep.subr.mxu0 0.0
        %761 = vmatpush1.msra.mxu0 0.0
        %762 = vmatprep.subr.mxu0 0.0
        %763 = vmatpush1.msra.mxu0 0.0
        %764 = vmatprep.subr.mxu0 0.0
        %765 = vmatpush1.msra.mxu0 0.0
        %766 = vmatprep.subr.mxu0 0.0
        %767 = vmatpush1.msra.mxu0 0.0
        %768 = vmatprep.subr.mxu0 0.0
        %769 = vmatpush1.msra.mxu0 0.0
        %770 = vmatprep.subr.mxu0 0.0
        %771 = vmatpush1.msra.mxu0 0.0
        %772 = vmatprep.subr.mxu0 0.0
        %773 = vmatpush1.msra.mxu0 0.0
        %774 = vmatprep.subr.mxu0 0.0
        %775 = vmatpush1.msra.mxu0 0.0
        %776 = vmatprep.subr.mxu0 0.0
        %777 = vmatpush1.msra.mxu0 0.0
        %778 = vmatprep.subr.mxu0 0.0
        %779 = vmatpush1.msra.mxu0 0.0
        %780 = vmatprep.subr.mxu0 0.0
        %781 = vmatpush1.msra.mxu0 0.0
        %782 = vmatprep.subr.mxu0 0.0
        %783 = vmatpush1.msra.mxu0 0.0
        %784 = vmatprep.subr.mxu0 0.0
        %785 = vmatpush1.msra.mxu0 0.0
        %786 = vmatprep.subr.mxu0 0.0
        %787 = vmatpush1.msra.mxu0 0.0
        %788 = vmatprep.subr.mxu0 0.0
        %789 = vmatpush1.msra.mxu0 0.0
        %790 = vmatprep.subr.mxu0 0.0
        %791 = vmatpush1.msra.mxu0 0.0
        %792 = vmatprep.mubr.f32.mxu0 0.0
        %793 = vmatmul.mubr.f32.gmra.mrb[0].mxu0 %v723
        %v794 = vpop.f32.mrb[0].mxu0
        %v795 = vadd.f32 %v709, %v794
        %v796 = vpop.f32.mrb[0].mxu0
        %v797 = vadd.f32 %v713, %v796
        %798 = vmatprep.mubr.f32.mxu0 0.0
        %799 = vmatmul.mubr.f32.gmra.mrb[0].mxu0 %v726
        %v800 = vpop.f32.mrb[0].mxu0
        %v801 = vadd.f32 %v709, %v800
        %v802 = vpop.f32.mrb[0].mxu0
        %v803 = vadd.f32 %v713, %v802
        %804 = vdwg.mxu0
        %805 = vmatprep.subr.mxu0 0.0
        %806 = vmatpush1.msra.mxu0 %v694
        %807 = vmatprep.subr.mxu0 0.0
        %808 = vmatpush1.msra.mxu0 %v697
        %809 = vmatprep.subr.mxu0 0.0
        %810 = vmatpush1.msra.mxu0 %v700
        %811 = vmatprep.subr.mxu0 0.0
        %812 = vmatpush1.msra.mxu0 %v703
        %813 = vmatprep.subr.mxu0 0.0
        %814 = vmatpush1.msra.mxu0 0.0
        %815 = vmatprep.subr.mxu0 0.0
        %816 = vmatpush1.msra.mxu0 0.0
        %817 = vmatprep.subr.mxu0 0.0
        %818 = vmatpush1.msra.mxu0 0.0
        %819 = vmatprep.subr.mxu0 0.0
        %820 = vmatpush1.msra.mxu0 0.0
        %821 = vmatprep.subr.mxu0 0.0
        %822 = vmatpush1.msra.mxu0 0.0
        %823 = vmatprep.subr.mxu0 0.0
        %824 = vmatpush1.msra.mxu0 0.0
        %825 = vmatprep.subr.mxu0 0.0
        %826 = vmatpush1.msra.mxu0 0.0
        %827 = vmatprep.subr.mxu0 0.0
        %828 = vmatpush1.msra.mxu0 0.0
        %829 = vmatprep.subr.mxu0 0.0
        %830 = vmatpush1.msra.mxu0 0.0
        %831 = vmatprep.subr.mxu0 0.0
        %832 = vmatpush1.msra.mxu0 0.0
        %833 = vmatprep.subr.mxu0 0.0
        %834 = vmatpush1.msra.mxu0 0.0
        %835 = vmatprep.subr.mxu0 0.0
        %836 = vmatpush1.msra.mxu0 0.0
        %837 = vmatprep.subr.mxu0 0.0
        %838 = vmatpush1.msra.mxu0 0.0
        %839 = vmatprep.subr.mxu0 0.0
        %840 = vmatpush1.msra.mxu0 0.0
        %841 = vmatprep.subr.mxu0 0.0
        %842 = vmatpush1.msra.mxu0 0.0
        %843 = vmatprep.subr.mxu0 0.0
        %844 = vmatpush1.msra.mxu0 0.0
        %845 = vmatprep.subr.mxu0 0.0
        %846 = vmatpush1.msra.mxu0 0.0
        %847 = vmatprep.subr.mxu0 0.0
        %848 = vmatpush1.msra.mxu0 0.0
        %849 = vmatprep.subr.mxu0 0.0
        %850 = vmatpush1.msra.mxu0 0.0
        %851 = vmatprep.subr.mxu0 0.0
        %852 = vmatpush1.msra.mxu0 0.0
        %853 = vmatprep.subr.mxu0 0.0
        %854 = vmatpush1.msra.mxu0 0.0
        %855 = vmatprep.subr.mxu0 0.0
        %856 = vmatpush1.msra.mxu0 0.0
        %857 = vmatprep.subr.mxu0 0.0
        %858 = vmatpush1.msra.mxu0 0.0
        %859 = vmatprep.subr.mxu0 0.0
        %860 = vmatpush1.msra.mxu0 0.0
        %861 = vmatprep.subr.mxu0 0.0
        %862 = vmatpush1.msra.mxu0 0.0
        %863 = vmatprep.subr.mxu0 0.0
        %864 = vmatpush1.msra.mxu0 0.0
        %865 = vmatprep.subr.mxu0 0.0
        %866 = vmatpush1.msra.mxu0 0.0
        %867 = vmatprep.subr.mxu0 0.0
        %868 = vmatpush1.msra.mxu0 0.0
        %869 = vmatprep.mubr.f32.mxu0 0.0
        %870 = vmatmul.mubr.f32.gmra.mrb[0].mxu0 %v723
        %v871 = vpop.f32.mrb[0].mxu0
        %v872 = vadd.f32 %v717, %v871
        %v873 = vpop.f32.mrb[0].mxu0
        %874 = vmatprep.mubr.f32.mxu0 0.0
        %875 = vmatmul.mubr.f32.gmra.mrb[0].mxu0 %v726
        %v876 = vpop.f32.mrb[0].mxu0
        %v877 = vadd.f32 %v717, %v876
        %v878 = vpop.f32.mrb[0].mxu0
        %879 = vdwg.mxu0
        %v880 = vand.u32 2147483647, %v795
        %vm881 = vcmp.le.f32.partialorder %v880, 0.7853982
        %vm882 = vcmp.lt.s32.totalorder %v795, 0
        %v883 = vand.u32 %v795, 2139095040
        %v884 = vshrl.u32 %v883, 23
        %v885 = vsub.s32 %v884, 127
        %v886 = vand.u32 2147483647, %v795
        %v887 = vand.u32 %v886, 8388607
        %v888 = vor.u32 %v887, 8388608
        %v889 = vsub.s32 0, %v888
        %v890 = vadd.s32 %v885, 1
        %vm891 = vcmp.gt.s32.totalorder %v890, 0
        %v892 = vsel %vm891, %v890, 0
        %v893 = vshrl.u32 %v892, 5
        %v894 = vand.u32 %v892, 31
        %v895 = vsub.s32 32, %v894
        %v896 = vshrl.u32 683565275, %v895
        %v897 = vshll.u32 683565275, %v894
        %v898 = vshrl.u32 2475754826, %v895
        %v899 = vor.u32 %v897, %v898
        %v900 = vshll.u32 2475754826, %v894
        %v901 = vshrl.u32 2131351028, %v895
        %v902 = vor.u32 %v900, %v901
        %v903 = vshll.u32 2131351028, %v894
        %v904 = vshrl.u32 2102212464, %v895
        %v905 = vor.u32 %v903, %v904
        %v906 = vshll.u32 2102212464, %v894
        %v907 = vshrl.u32 920167782, %v895
        %v908 = vor.u32 %v906, %v907
        %v909 = vshll.u32 920167782, %v894
        %v910 = vshrl.u32 1326507024, %v895
        %v911 = vor.u32 %v909, %v910
        %vm912 = vcmp.lt.s32.totalorder %v893, 1
        %vm913 = vcmp.lt.s32.totalorder %v893, 2
        %vm914 = vcmp.lt.s32.totalorder %v893, 3
        %vm915 = vcmp.lt.s32.totalorder %v893, 4
        %v916 = vsel %vm912, %v896, %v899
        %v917 = vsel %vm915, %v905, 2102212464
        %v918 = vsel %vm914, %v902, %v917
        %v919 = vsel %vm913, %v916, %v918
        %v920 = vsel %vm912, %v899, %v902
        %v921 = vsel %vm915, %v908, 920167782
        %v922 = vsel %vm914, %v905, %v921
        %v923 = vsel %vm913, %v920, %v922
        %v924 = vsel %vm912, %v902, %v905
        %v925 = vsel %vm915, %v911, 1326507024
        %v926 = vsel %vm914, %v908, %v925
        %v927 = vsel %vm913, %v924, %v926
        %v928 = vshll.u32 %v888, 8
        %v929 = vmul.u32.u64.compose %v928, %v927
        %v930 = vextract.low.u32 %v929
        %v931 = vextract.high.u32 %v929
        %v932 = vmul.u32.u64.compose %v928, %v923
        %v933 = vextract.low.u32 %v932
        %v934 = vextract.high.u32 %v932
        %v935 = vmul.u32 %v928, %v919
        %v936 = vadd.s32 %v931, %v933
        %vm937 = vc.u32 %v931, %v933
        %v938 = vadd.s32 %v934, 1
        %v939 = vsel %vm937, %v938, %v934
        %v940 = vadd.s32 %v935, %v939
        %v941 = vadd.s32 %v940, 536870912
        %v942 = vshrl.u32 %v941, 30
        %v943 = vshll.u32 %v942, 30
        %v944 = vsub.s32 %v940, %v943
        %vm945 = vcmp.lt.s32.totalorder %v944, 0
        %v946 = vsub.s32 0, %v944
        %v947 = vsel %vm945, %v946, %v944
        %v948 = vclz %v947
        %v949 = vsub.s32 %v948, 2
        %vm950 = vcmp.gt.s32.totalorder 0, %v949
        %v951 = vsel %vm950, 0, %v949
        %v952 = vsub.s32 32, %v951
        %v953 = vshll.u32 %v944, %v951
        %v954 = vshrl.u32 %v936, %v952
        %v955 = vor.u32 %v953, %v954
        %v956 = vsub.s32 4294967266, %v951
        %v957 = vadd.s32 %v956, 127
        %v958 = vshll.u32 %v957, 23
        %v959 = vor.u32 4788187, %v958
        %v960 = vand.u32 2147483647, %v959
        %v962 = vcvt.s32.f32 %v955
        %v963 = vmul.f32 %v962, %v960
        %v964 = vxor.u32 %v963, 2147483648
        %v965 = vsel %vm882, %v964, %v963
        %v966 = vsub.s32 4, %v942
        %v967 = vsel %vm882, %v966, %v942
        %v968 = vsel %vm881, %v795, %v965
        %v969 = vsel %vm881, 0, %v967
        %v970 = vcosq.f32.pop %v968
        %v971 = vsinq.f32.pop %v968
        %vm972 = vweird.f32 %v795
        %v973 = vand.u32 %v969, 3
        %vm974 = vcmp.lt.s32.totalorder %v973, 2
        %vm975 = vcmp.eq.s32.totalorder %v973, 0
        %v976 = vxor.u32 %v971, 2147483648
        %v977 = vsel %vm975, %v970, %v976
        %vm978 = vcmp.eq.s32.totalorder %v973, 2
        %v979 = vxor.u32 %v970, 2147483648
        %v980 = vsel %vm978, %v979, %v971
        %v981 = vsel %vm974, %v977, %v980
        %v982 = vsel %vm972, nan, %v981
        %v983 = vand.u32 2147483647, %v801
        %vm984 = vcmp.le.f32.partialorder %v983, 0.7853982
        %vm985 = vcmp.lt.s32.totalorder %v801, 0
        %v986 = vand.u32 %v801, 2139095040
        %v987 = vshrl.u32 %v986, 23
        %v988 = vsub.s32 %v987, 127
        %v989 = vand.u32 2147483647, %v801
        %v990 = vand.u32 %v989, 8388607
        %v991 = vor.u32 %v990, 8388608
        %v992 = vsub.s32 0, %v991
        %v993 = vadd.s32 %v988, 1
        %vm994 = vcmp.gt.s32.totalorder %v993, 0
        %v995 = vsel %vm994, %v993, 0
        %v996 = vshrl.u32 %v995, 5
        %v997 = vand.u32 %v995, 31
        %v998 = vsub.s32 32, %v997
        %v999 = vshrl.u32 683565275, %v998
        %v1000 = vshll.u32 683565275, %v997
        %v1001 = vshrl.u32 2475754826, %v998
        %v1002 = vor.u32 %v1000, %v1001
        %v1003 = vshll.u32 2475754826, %v997
        %v1004 = vshrl.u32 2131351028, %v998
        %v1005 = vor.u32 %v1003, %v1004
        %v1006 = vshll.u32 2131351028, %v997
        %v1007 = vshrl.u32 2102212464, %v998
        %v1008 = vor.u32 %v1006, %v1007
        %v1009 = vshll.u32 2102212464, %v997
        %v1010 = vshrl.u32 920167782, %v998
        %v1011 = vor.u32 %v1009, %v1010
        %v1012 = vshll.u32 920167782, %v997
        %v1013 = vshrl.u32 1326507024, %v998
        %v1014 = vor.u32 %v1012, %v1013
        %vm1015 = vcmp.lt.s32.totalorder %v996, 1
        %vm1016 = vcmp.lt.s32.totalorder %v996, 2
        %vm1017 = vcmp.lt.s32.totalorder %v996, 3
        %vm1018 = vcmp.lt.s32.totalorder %v996, 4
        %v1019 = vsel %vm1015, %v999, %v1002
        %v1020 = vsel %vm1018, %v1008, 2102212464
        %v1021 = vsel %vm1017, %v1005, %v1020
        %v1022 = vsel %vm1016, %v1019, %v1021
        %v1023 = vsel %vm1015, %v1002, %v1005
        %v1024 = vsel %vm1018, %v1011, 920167782
        %v1025 = vsel %vm1017, %v1008, %v1024
        %v1026 = vsel %vm1016, %v1023, %v1025
        %v1027 = vsel %vm1015, %v1005, %v1008
        %v1028 = vsel %vm1018, %v1014, 1326507024
        %v1029 = vsel %vm1017, %v1011, %v1028
        %v1030 = vsel %vm1016, %v1027, %v1029
        %v1031 = vshll.u32 %v991, 8
        %v1032 = vmul.u32.u64.compose %v1031, %v1030
        %v1033 = vextract.low.u32 %v1032
        %v1034 = vextract.high.u32 %v1032
        %v1035 = vmul.u32.u64.compose %v1031, %v1026
        %v1036 = vextract.low.u32 %v1035
        %v1037 = vextract.high.u32 %v1035
        %v1038 = vmul.u32 %v1031, %v1022
        %v1039 = vadd.s32 %v1034, %v1036
        %vm1040 = vc.u32 %v1034, %v1036
        %v1041 = vadd.s32 %v1037, 1
        %v1042 = vsel %vm1040, %v1041, %v1037
        %v1043 = vadd.s32 %v1038, %v1042
        %v1044 = vadd.s32 %v1043, 536870912
        %v1045 = vshrl.u32 %v1044, 30
        %v1046 = vshll.u32 %v1045, 30
        %v1047 = vsub.s32 %v1043, %v1046
        %vm1048 = vcmp.lt.s32.totalorder %v1047, 0
        %v1049 = vsub.s32 0, %v1047
        %v1050 = vsel %vm1048, %v1049, %v1047
        %v1051 = vclz %v1050
        %v1052 = vsub.s32 %v1051, 2
        %vm1053 = vcmp.gt.s32.totalorder 0, %v1052
        %v1054 = vsel %vm1053, 0, %v1052
        %v1055 = vsub.s32 32, %v1054
        %v1056 = vshll.u32 %v1047, %v1054
        %v1057 = vshrl.u32 %v1039, %v1055
        %v1058 = vor.u32 %v1056, %v1057
        %v1059 = vsub.s32 4294967266, %v1054
        %v1060 = vadd.s32 %v1059, 127
        %v1061 = vshll.u32 %v1060, 23
        %v1062 = vor.u32 4788187, %v1061
        %v1063 = vand.u32 2147483647, %v1062
        %v1065 = vcvt.s32.f32 %v1058
        %v1066 = vmul.f32 %v1065, %v1063
        %v1067 = vxor.u32 %v1066, 2147483648
        %v1068 = vsel %vm985, %v1067, %v1066
        %v1069 = vsub.s32 4, %v1045
        %v1070 = vsel %vm985, %v1069, %v1045
        %v1071 = vsel %vm984, %v801, %v1068
        %v1072 = vsel %vm984, 0, %v1070
        %v1073 = vcosq.f32.pop %v1071
        %v1074 = vsinq.f32.pop %v1071
        %vm1075 = vweird.f32 %v801
        %v1076 = vand.u32 %v1072, 3
        %vm1077 = vcmp.lt.s32.totalorder %v1076, 2
        %vm1078 = vcmp.eq.s32.totalorder %v1076, 0
        %v1079 = vxor.u32 %v1074, 2147483648
        %v1080 = vsel %vm1078, %v1073, %v1079
        %vm1081 = vcmp.eq.s32.totalorder %v1076, 2
        %v1082 = vxor.u32 %v1073, 2147483648
        %v1083 = vsel %vm1081, %v1082, %v1074
        %v1084 = vsel %vm1077, %v1080, %v1083
        %v1085 = vsel %vm1075, nan, %v1084
        %v1086 = vand.u32 2147483647, %v797
        %vm1087 = vcmp.le.f32.partialorder %v1086, 0.7853982
        %vm1088 = vcmp.lt.s32.totalorder %v797, 0
        %v1089 = vand.u32 %v797, 2139095040
        %v1090 = vshrl.u32 %v1089, 23
        %v1091 = vsub.s32 %v1090, 127
        %v1092 = vand.u32 2147483647, %v797
        %v1093 = vand.u32 %v1092, 8388607
        %v1094 = vor.u32 %v1093, 8388608
        %v1095 = vsub.s32 0, %v1094
        %v1096 = vadd.s32 %v1091, 1
        %vm1097 = vcmp.gt.s32.totalorder %v1096, 0
        %v1098 = vsel %vm1097, %v1096, 0
        %v1099 = vshrl.u32 %v1098, 5
        %v1100 = vand.u32 %v1098, 31
        %v1101 = vsub.s32 32, %v1100
        %v1102 = vshrl.u32 683565275, %v1101
        %v1103 = vshll.u32 683565275, %v1100
        %v1104 = vshrl.u32 2475754826, %v1101
        %v1105 = vor.u32 %v1103, %v1104
        %v1106 = vshll.u32 2475754826, %v1100
        %v1107 = vshrl.u32 2131351028, %v1101
        %v1108 = vor.u32 %v1106, %v1107
        %v1109 = vshll.u32 2131351028, %v1100
        %v1110 = vshrl.u32 2102212464, %v1101
        %v1111 = vor.u32 %v1109, %v1110
        %v1112 = vshll.u32 2102212464, %v1100
        %v1113 = vshrl.u32 920167782, %v1101
        %v1114 = vor.u32 %v1112, %v1113
        %v1115 = vshll.u32 920167782, %v1100
        %v1116 = vshrl.u32 1326507024, %v1101
        %v1117 = vor.u32 %v1115, %v1116
        %vm1118 = vcmp.lt.s32.totalorder %v1099, 1
        %vm1119 = vcmp.lt.s32.totalorder %v1099, 2
        %vm1120 = vcmp.lt.s32.totalorder %v1099, 3
        %vm1121 = vcmp.lt.s32.totalorder %v1099, 4
        %v1122 = vsel %vm1118, %v1102, %v1105
        %v1123 = vsel %vm1121, %v1111, 2102212464
        %v1124 = vsel %vm1120, %v1108, %v1123
        %v1125 = vsel %vm1119, %v1122, %v1124
        %v1126 = vsel %vm1118, %v1105, %v1108
        %v1127 = vsel %vm1121, %v1114, 920167782
        %v1128 = vsel %vm1120, %v1111, %v1127
        %v1129 = vsel %vm1119, %v1126, %v1128
        %v1130 = vsel %vm1118, %v1108, %v1111
        %v1131 = vsel %vm1121, %v1117, 1326507024
        %v1132 = vsel %vm1120, %v1114, %v1131
        %v1133 = vsel %vm1119, %v1130, %v1132
        %v1134 = vshll.u32 %v1094, 8
        %v1135 = vmul.u32.u64.compose %v1134, %v1133
        %v1136 = vextract.low.u32 %v1135
        %v1137 = vextract.high.u32 %v1135
        %v1138 = vmul.u32.u64.compose %v1134, %v1129
        %v1139 = vextract.low.u32 %v1138
        %v1140 = vextract.high.u32 %v1138
        %v1141 = vmul.u32 %v1134, %v1125
        %v1142 = vadd.s32 %v1137, %v1139
        %vm1143 = vc.u32 %v1137, %v1139
        %v1144 = vadd.s32 %v1140, 1
        %v1145 = vsel %vm1143, %v1144, %v1140
        %v1146 = vadd.s32 %v1141, %v1145
        %v1147 = vadd.s32 %v1146, 536870912
        %v1148 = vshrl.u32 %v1147, 30
        %v1149 = vshll.u32 %v1148, 30
        %v1150 = vsub.s32 %v1146, %v1149
        %vm1151 = vcmp.lt.s32.totalorder %v1150, 0
        %v1152 = vsub.s32 0, %v1150
        %v1153 = vsel %vm1151, %v1152, %v1150
        %v1154 = vclz %v1153
        %v1155 = vsub.s32 %v1154, 2
        %vm1156 = vcmp.gt.s32.totalorder 0, %v1155
        %v1157 = vsel %vm1156, 0, %v1155
        %v1158 = vsub.s32 32, %v1157
        %v1159 = vshll.u32 %v1150, %v1157
        %v1160 = vshrl.u32 %v1142, %v1158
        %v1161 = vor.u32 %v1159, %v1160
        %v1162 = vsub.s32 4294967266, %v1157
        %v1163 = vadd.s32 %v1162, 127
        %v1164 = vshll.u32 %v1163, 23
        %v1165 = vor.u32 4788187, %v1164
        %v1166 = vand.u32 2147483647, %v1165
        %v1168 = vcvt.s32.f32 %v1161
        %v1169 = vmul.f32 %v1168, %v1166
        %v1170 = vxor.u32 %v1169, 2147483648
        %v1171 = vsel %vm1088, %v1170, %v1169
        %v1172 = vsub.s32 4, %v1148
        %v1173 = vsel %vm1088, %v1172, %v1148
        %v1174 = vsel %vm1087, %v797, %v1171
        %v1175 = vsel %vm1087, 0, %v1173
        %v1176 = vcosq.f32.pop %v1174
        %v1177 = vsinq.f32.pop %v1174
        %vm1178 = vweird.f32 %v797
        %v1179 = vand.u32 %v1175, 3
        %vm1180 = vcmp.lt.s32.totalorder %v1179, 2
        %vm1181 = vcmp.eq.s32.totalorder %v1179, 0
        %v1182 = vxor.u32 %v1177, 2147483648
        %v1183 = vsel %vm1181, %v1176, %v1182
        %vm1184 = vcmp.eq.s32.totalorder %v1179, 2
        %v1185 = vxor.u32 %v1176, 2147483648
        %v1186 = vsel %vm1184, %v1185, %v1177
        %v1187 = vsel %vm1180, %v1183, %v1186
        %v1188 = vsel %vm1178, nan, %v1187
        %v1189 = vand.u32 2147483647, %v803
        %vm1190 = vcmp.le.f32.partialorder %v1189, 0.7853982
        %vm1191 = vcmp.lt.s32.totalorder %v803, 0
        %v1192 = vand.u32 %v803, 2139095040
        %v1193 = vshrl.u32 %v1192, 23
        %v1194 = vsub.s32 %v1193, 127
        %v1195 = vand.u32 2147483647, %v803
        %v1196 = vand.u32 %v1195, 8388607
        %v1197 = vor.u32 %v1196, 8388608
        %v1198 = vsub.s32 0, %v1197
        %v1199 = vadd.s32 %v1194, 1
        %vm1200 = vcmp.gt.s32.totalorder %v1199, 0
        %v1201 = vsel %vm1200, %v1199, 0
        %v1202 = vshrl.u32 %v1201, 5
        %v1203 = vand.u32 %v1201, 31
        %v1204 = vsub.s32 32, %v1203
        %v1205 = vshrl.u32 683565275, %v1204
        %v1206 = vshll.u32 683565275, %v1203
        %v1207 = vshrl.u32 2475754826, %v1204
        %v1208 = vor.u32 %v1206, %v1207
        %v1209 = vshll.u32 2475754826, %v1203
        %v1210 = vshrl.u32 2131351028, %v1204
        %v1211 = vor.u32 %v1209, %v1210
        %v1212 = vshll.u32 2131351028, %v1203
        %v1213 = vshrl.u32 2102212464, %v1204
        %v1214 = vor.u32 %v1212, %v1213
        %v1215 = vshll.u32 2102212464, %v1203
        %v1216 = vshrl.u32 920167782, %v1204
        %v1217 = vor.u32 %v1215, %v1216
        %v1218 = vshll.u32 920167782, %v1203
        %v1219 = vshrl.u32 1326507024, %v1204
        %v1220 = vor.u32 %v1218, %v1219
        %vm1221 = vcmp.lt.s32.totalorder %v1202, 1
        %vm1222 = vcmp.lt.s32.totalorder %v1202, 2
        %vm1223 = vcmp.lt.s32.totalorder %v1202, 3
        %vm1224 = vcmp.lt.s32.totalorder %v1202, 4
        %v1225 = vsel %vm1221, %v1205, %v1208
        %v1226 = vsel %vm1224, %v1214, 2102212464
        %v1227 = vsel %vm1223, %v1211, %v1226
        %v1228 = vsel %vm1222, %v1225, %v1227
        %v1229 = vsel %vm1221, %v1208, %v1211
        %v1230 = vsel %vm1224, %v1217, 920167782
        %v1231 = vsel %vm1223, %v1214, %v1230
        %v1232 = vsel %vm1222, %v1229, %v1231
        %v1233 = vsel %vm1221, %v1211, %v1214
        %v1234 = vsel %vm1224, %v1220, 1326507024
        %v1235 = vsel %vm1223, %v1217, %v1234
        %v1236 = vsel %vm1222, %v1233, %v1235
        %v1237 = vshll.u32 %v1197, 8
        %v1238 = vmul.u32.u64.compose %v1237, %v1236
        %v1239 = vextract.low.u32 %v1238
        %v1240 = vextract.high.u32 %v1238
        %v1241 = vmul.u32.u64.compose %v1237, %v1232
        %v1242 = vextract.low.u32 %v1241
        %v1243 = vextract.high.u32 %v1241
        %v1244 = vmul.u32 %v1237, %v1228
        %v1245 = vadd.s32 %v1240, %v1242
        %vm1246 = vc.u32 %v1240, %v1242
        %v1247 = vadd.s32 %v1243, 1
        %v1248 = vsel %vm1246, %v1247, %v1243
        %v1249 = vadd.s32 %v1244, %v1248
        %v1250 = vadd.s32 %v1249, 536870912
        %v1251 = vshrl.u32 %v1250, 30
        %v1252 = vshll.u32 %v1251, 30
        %v1253 = vsub.s32 %v1249, %v1252
        %vm1254 = vcmp.lt.s32.totalorder %v1253, 0
        %v1255 = vsub.s32 0, %v1253
        %v1256 = vsel %vm1254, %v1255, %v1253
        %v1257 = vclz %v1256
        %v1258 = vsub.s32 %v1257, 2
        %vm1259 = vcmp.gt.s32.totalorder 0, %v1258
        %v1260 = vsel %vm1259, 0, %v1258
        %v1261 = vsub.s32 32, %v1260
        %v1262 = vshll.u32 %v1253, %v1260
        %v1263 = vshrl.u32 %v1245, %v1261
        %v1264 = vor.u32 %v1262, %v1263
        %v1265 = vsub.s32 4294967266, %v1260
        %v1266 = vadd.s32 %v1265, 127
        %v1267 = vshll.u32 %v1266, 23
        %v1268 = vor.u32 4788187, %v1267
        %v1269 = vand.u32 2147483647, %v1268
        %v1271 = vcvt.s32.f32 %v1264
        %v1272 = vmul.f32 %v1271, %v1269
        %v1273 = vxor.u32 %v1272, 2147483648
        %v1274 = vsel %vm1191, %v1273, %v1272
        %v1275 = vsub.s32 4, %v1251
        %v1276 = vsel %vm1191, %v1275, %v1251
        %v1277 = vsel %vm1190, %v803, %v1274
        %v1278 = vsel %vm1190, 0, %v1276
        %v1279 = vcosq.f32.pop %v1277
        %v1280 = vsinq.f32.pop %v1277
        %vm1281 = vweird.f32 %v803
        %v1282 = vand.u32 %v1278, 3
        %vm1283 = vcmp.lt.s32.totalorder %v1282, 2
        %vm1284 = vcmp.eq.s32.totalorder %v1282, 0
        %v1285 = vxor.u32 %v1280, 2147483648
        %v1286 = vsel %vm1284, %v1279, %v1285
        %vm1287 = vcmp.eq.s32.totalorder %v1282, 2
        %v1288 = vxor.u32 %v1279, 2147483648
        %v1289 = vsel %vm1287, %v1288, %v1280
        %v1290 = vsel %vm1283, %v1286, %v1289
        %v1291 = vsel %vm1281, nan, %v1290
        %v1292 = vld [vmem:[%s557] sm:$0xff]
        %v1293 = vld [vmem:[%s557 + $0x8] sm:$0xff]
        %v1294 = vld [vmem:[%s557 + $0x10] sm:$0xff]
        %v1295 = vld [vmem:[%s557 + $0x18] sm:$0xff]
        %1296 = vxpose.xlu0.b32.start [1/16] %v1188, 128
        %1297 = vxpose.xlu0.b32.cont [2/16] 0.0, 128
        %1298 = vxpose.xlu0.b32.cont [3/16] 0.0, 128
        %1299 = vxpose.xlu0.b32.cont [4/16] 0.0, 128
        %1300 = vxpose.xlu0.b32.cont [5/16] 0.0, 128
        %1301 = vxpose.xlu0.b32.cont [6/16] 0.0, 128
        %1302 = vxpose.xlu0.b32.cont [7/16] 0.0, 128
        %1303 = vxpose.xlu0.b32.cont [8/16] 0.0, 128
        %1304 = vxpose.xlu0.b32.cont [9/16] 0.0, 128
        %1305 = vxpose.xlu0.b32.cont [10/16] 0.0, 128
        %1306 = vxpose.xlu0.b32.cont [11/16] 0.0, 128
        %1307 = vxpose.xlu0.b32.cont [12/16] 0.0, 128
        %1308 = vxpose.xlu0.b32.cont [13/16] 0.0, 128
        %1309 = vxpose.xlu0.b32.cont [14/16] 0.0, 128
        %1310 = vxpose.xlu0.b32.cont [15/16] 0.0, 128
        %1311 = vxpose.xlu0.b32.end [16/16] 0.0, 128
        %v1312 = vpop.trf.xlu0
        %v1313 = vpop.trf.xlu0
        %v1314 = vpop.trf.xlu0
        %v1315 = vpop.trf.xlu0
        %v1316 = vpop.trf.xlu0
        %v1317 = vpop.trf.xlu0
        %v1318 = vpop.trf.xlu0
        %v1319 = vpop.trf.xlu0
        %v1320 = vpop.trf.xlu0
        %v1321 = vpop.trf.xlu0
        %v1322 = vpop.trf.xlu0
        %v1323 = vpop.trf.xlu0
        %v1324 = vpop.trf.xlu0
        %v1325 = vpop.trf.xlu0
        %v1326 = vpop.trf.xlu0
        %v1327 = vpop.trf.xlu0
        %vm1328 = vcmask 64512
        %v1330 = vsel %vm1328, %v1312, 0
        %v1333 = vsel %vm1328, %v1313, 0
        %1335 = vmatprep.subr.mxu0 0.0
        %1336 = vmatpush1.msra.mxu0 %v872
        %1337 = vmatprep.subr.mxu0 0.0
        %1338 = vmatpush1.msra.mxu0 0.0
        %1339 = vmatprep.subr.mxu0 0.0
        %1340 = vmatpush1.msra.mxu0 0.0
        %1341 = vmatprep.subr.mxu0 0.0
        %1342 = vmatpush1.msra.mxu0 0.0
        %1343 = vmatprep.subr.mxu0 0.0
        %1344 = vmatpush1.msra.mxu0 0.0
        %1345 = vmatprep.subr.mxu0 0.0
        %1346 = vmatpush1.msra.mxu0 0.0
        %1347 = vmatprep.subr.mxu0 0.0
        %1348 = vmatpush1.msra.mxu0 0.0
        %1349 = vmatprep.subr.mxu0 0.0
        %1350 = vmatpush1.msra.mxu0 0.0
        %1351 = vmatprep.subr.mxu0 0.0
        %1352 = vmatpush1.msra.mxu0 0.0
        %1353 = vmatprep.subr.mxu0 0.0
        %1354 = vmatpush1.msra.mxu0 0.0
        %1355 = vmatprep.subr.mxu0 0.0
        %1356 = vmatpush1.msra.mxu0 0.0
        %1357 = vmatprep.subr.mxu0 0.0
        %1358 = vmatpush1.msra.mxu0 0.0
        %1359 = vmatprep.subr.mxu0 0.0
        %1360 = vmatpush1.msra.mxu0 0.0
        %1361 = vmatprep.subr.mxu0 0.0
        %1362 = vmatpush1.msra.mxu0 0.0
        %1363 = vmatprep.subr.mxu0 0.0
        %1364 = vmatpush1.msra.mxu0 0.0
        %1365 = vmatprep.subr.mxu0 0.0
        %1366 = vmatpush1.msra.mxu0 0.0
        %1367 = vmatprep.subr.mxu0 0.0
        %1368 = vmatpush1.msra.mxu0 0.0
        %1369 = vmatprep.subr.mxu0 0.0
        %1370 = vmatpush1.msra.mxu0 0.0
        %1371 = vmatprep.subr.mxu0 0.0
        %1372 = vmatpush1.msra.mxu0 0.0
        %1373 = vmatprep.subr.mxu0 0.0
        %1374 = vmatpush1.msra.mxu0 0.0
        %1375 = vmatprep.subr.mxu0 0.0
        %1376 = vmatpush1.msra.mxu0 0.0
        %1377 = vmatprep.subr.mxu0 0.0
        %1378 = vmatpush1.msra.mxu0 0.0
        %1379 = vmatprep.subr.mxu0 0.0
        %1380 = vmatpush1.msra.mxu0 0.0
        %1381 = vmatprep.subr.mxu0 0.0
        %1382 = vmatpush1.msra.mxu0 0.0
        %1383 = vmatprep.subr.mxu0 0.0
        %1384 = vmatpush1.msra.mxu0 0.0
        %1385 = vmatprep.subr.mxu0 0.0
        %1386 = vmatpush1.msra.mxu0 0.0
        %1387 = vmatprep.subr.mxu0 0.0
        %1388 = vmatpush1.msra.mxu0 0.0
        %1389 = vmatprep.subr.mxu0 0.0
        %1390 = vmatpush1.msra.mxu0 0.0
        %1391 = vmatprep.subr.mxu0 0.0
        %1392 = vmatpush1.msra.mxu0 0.0
        %1393 = vmatprep.subr.mxu0 0.0
        %1394 = vmatpush1.msra.mxu0 0.0
        %1395 = vmatprep.subr.mxu0 0.0
        %1396 = vmatpush1.msra.mxu0 0.0
        %1397 = vmatprep.subr.mxu0 0.0
        %1398 = vmatpush1.msra.mxu0 0.0
        %1399 = vmatprep.mubr.f32.mxu0 0.0
        %1400 = vmatmul.mubr.f32.gmra.mrb[0].mxu0 %v1330
        %v1401 = vpop.f32.mrb[0].mxu0
        %v1402 = vadd.f32 0.0, %v1401
        %v1403 = vpop.f32.mrb[0].mxu0
        %1404 = vmatprep.mubr.f32.mxu0 0.0
        %1405 = vmatmul.mubr.f32.gmra.mrb[0].mxu0 %v1333
        %v1406 = vpop.f32.mrb[0].mxu0
        %v1407 = vadd.f32 0.0, %v1406
        %v1408 = vpop.f32.mrb[0].mxu0
        %1409 = vdwg.mxu0
        %1410 = vxpose.xlu0.b32.start [1/16] %v1291, 128
        %1411 = vxpose.xlu0.b32.cont [2/16] 0.0, 128
        %1412 = vxpose.xlu0.b32.cont [3/16] 0.0, 128
        %1413 = vxpose.xlu0.b32.cont [4/16] 0.0, 128
        %1414 = vxpose.xlu0.b32.cont [5/16] 0.0, 128
        %1415 = vxpose.xlu0.b32.cont [6/16] 0.0, 128
        %1416 = vxpose.xlu0.b32.cont [7/16] 0.0, 128
        %1417 = vxpose.xlu0.b32.cont [8/16] 0.0, 128
        %1418 = vxpose.xlu0.b32.cont [9/16] 0.0, 128
        %1419 = vxpose.xlu0.b32.cont [10/16] 0.0, 128
        %1420 = vxpose.xlu0.b32.cont [11/16] 0.0, 128
        %1421 = vxpose.xlu0.b32.cont [12/16] 0.0, 128
        %1422 = vxpose.xlu0.b32.cont [13/16] 0.0, 128
        %1423 = vxpose.xlu0.b32.cont [14/16] 0.0, 128
        %1424 = vxpose.xlu0.b32.cont [15/16] 0.0, 128
        %1425 = vxpose.xlu0.b32.end [16/16] 0.0, 128
        %v1426 = vpop.trf.xlu0
        %v1427 = vpop.trf.xlu0
        %v1428 = vpop.trf.xlu0
        %v1429 = vpop.trf.xlu0
        %v1430 = vpop.trf.xlu0
        %v1431 = vpop.trf.xlu0
        %v1432 = vpop.trf.xlu0
        %v1433 = vpop.trf.xlu0
        %v1434 = vpop.trf.xlu0
        %v1435 = vpop.trf.xlu0
        %v1436 = vpop.trf.xlu0
        %v1437 = vpop.trf.xlu0
        %v1438 = vpop.trf.xlu0
        %v1439 = vpop.trf.xlu0
        %v1440 = vpop.trf.xlu0
        %v1441 = vpop.trf.xlu0
        %v1443 = vsel %vm1328, %v1426, 0
        %v1446 = vsel %vm1328, %v1427, 0
        %1448 = vmatprep.subr.mxu0 0.0
        %1449 = vmatpush1.msra.mxu0 %v877
        %1450 = vmatprep.subr.mxu0 0.0
        %1451 = vmatpush1.msra.mxu0 0.0
        %1452 = vmatprep.subr.mxu0 0.0
        %1453 = vmatpush1.msra.mxu0 0.0
        %1454 = vmatprep.subr.mxu0 0.0
        %1455 = vmatpush1.msra.mxu0 0.0
        %1456 = vmatprep.subr.mxu0 0.0
        %1457 = vmatpush1.msra.mxu0 0.0
        %1458 = vmatprep.subr.mxu0 0.0
        %1459 = vmatpush1.msra.mxu0 0.0
        %1460 = vmatprep.subr.mxu0 0.0
        %1461 = vmatpush1.msra.mxu0 0.0
        %1462 = vmatprep.subr.mxu0 0.0
        %1463 = vmatpush1.msra.mxu0 0.0
        %1464 = vmatprep.subr.mxu0 0.0
        %1465 = vmatpush1.msra.mxu0 0.0
        %1466 = vmatprep.subr.mxu0 0.0
        %1467 = vmatpush1.msra.mxu0 0.0
        %1468 = vmatprep.subr.mxu0 0.0
        %1469 = vmatpush1.msra.mxu0 0.0
        %1470 = vmatprep.subr.mxu0 0.0
        %1471 = vmatpush1.msra.mxu0 0.0
        %1472 = vmatprep.subr.mxu0 0.0
        %1473 = vmatpush1.msra.mxu0 0.0
        %1474 = vmatprep.subr.mxu0 0.0
        %1475 = vmatpush1.msra.mxu0 0.0
        %1476 = vmatprep.subr.mxu0 0.0
        %1477 = vmatpush1.msra.mxu0 0.0
        %1478 = vmatprep.subr.mxu0 0.0
        %1479 = vmatpush1.msra.mxu0 0.0
        %1480 = vmatprep.subr.mxu0 0.0
        %1481 = vmatpush1.msra.mxu0 0.0
        %1482 = vmatprep.subr.mxu0 0.0
        %1483 = vmatpush1.msra.mxu0 0.0
        %1484 = vmatprep.subr.mxu0 0.0
        %1485 = vmatpush1.msra.mxu0 0.0
        %1486 = vmatprep.subr.mxu0 0.0
        %1487 = vmatpush1.msra.mxu0 0.0
        %1488 = vmatprep.subr.mxu0 0.0
        %1489 = vmatpush1.msra.mxu0 0.0
        %1490 = vmatprep.subr.mxu0 0.0
        %1491 = vmatpush1.msra.mxu0 0.0
        %1492 = vmatprep.subr.mxu0 0.0
        %1493 = vmatpush1.msra.mxu0 0.0
        %1494 = vmatprep.subr.mxu0 0.0
        %1495 = vmatpush1.msra.mxu0 0.0
        %1496 = vmatprep.subr.mxu0 0.0
        %1497 = vmatpush1.msra.mxu0 0.0
        %1498 = vmatprep.subr.mxu0 0.0
        %1499 = vmatpush1.msra.mxu0 0.0
        %1500 = vmatprep.subr.mxu0 0.0
        %1501 = vmatpush1.msra.mxu0 0.0
        %1502 = vmatprep.subr.mxu0 0.0
        %1503 = vmatpush1.msra.mxu0 0.0
        %1504 = vmatprep.subr.mxu0 0.0
        %1505 = vmatpush1.msra.mxu0 0.0
        %1506 = vmatprep.subr.mxu0 0.0
        %1507 = vmatpush1.msra.mxu0 0.0
        %1508 = vmatprep.subr.mxu0 0.0
        %1509 = vmatpush1.msra.mxu0 0.0
        %1510 = vmatprep.subr.mxu0 0.0
        %1511 = vmatpush1.msra.mxu0 0.0
        %1512 = vmatprep.mubr.f32.mxu0 0.0
        %1513 = vmatmul.mubr.f32.gmra.mrb[0].mxu0 %v1443
        %v1514 = vpop.f32.mrb[0].mxu0
        %v1515 = vadd.f32 0.0, %v1514
        %v1516 = vpop.f32.mrb[0].mxu0
        %1517 = vmatprep.mubr.f32.mxu0 0.0
        %1518 = vmatmul.mubr.f32.gmra.mrb[0].mxu0 %v1446
        %v1519 = vpop.f32.mrb[0].mxu0
        %v1520 = vadd.f32 0.0, %v1519
        %v1521 = vpop.f32.mrb[0].mxu0
        %1522 = vdwg.mxu0
        %v1524 = vsel %vm1328, %v1402, 0
        %v1527 = vsel %vm1328, %v1407, 0
        %v1530 = vsel %vm1328, %v1515, 0
        %v1533 = vsel %vm1328, %v1520, 0
        %1535 = vmatprep.subr.mxu0 0.0
        %1536 = vmatpush1.msra.mxu0 %v1292
        %1537 = vmatprep.subr.mxu0 0.0
        %1538 = vmatpush1.msra.mxu0 0.0
        %1539 = vmatprep.subr.mxu0 0.0
        %1540 = vmatpush1.msra.mxu0 0.0
        %1541 = vmatprep.subr.mxu0 0.0
        %1542 = vmatpush1.msra.mxu0 0.0
        %1543 = vmatprep.subr.mxu0 0.0
        %1544 = vmatpush1.msra.mxu0 0.0
        %1545 = vmatprep.subr.mxu0 0.0
        %1546 = vmatpush1.msra.mxu0 0.0
        %1547 = vmatprep.subr.mxu0 0.0
        %1548 = vmatpush1.msra.mxu0 0.0
        %1549 = vmatprep.subr.mxu0 0.0
        %1550 = vmatpush1.msra.mxu0 0.0
        %1551 = vmatprep.subr.mxu0 0.0
        %1552 = vmatpush1.msra.mxu0 0.0
        %1553 = vmatprep.subr.mxu0 0.0
        %1554 = vmatpush1.msra.mxu0 0.0
        %1555 = vmatprep.subr.mxu0 0.0
        %1556 = vmatpush1.msra.mxu0 0.0
        %1557 = vmatprep.subr.mxu0 0.0
        %1558 = vmatpush1.msra.mxu0 0.0
        %1559 = vmatprep.subr.mxu0 0.0
        %1560 = vmatpush1.msra.mxu0 0.0
        %1561 = vmatprep.subr.mxu0 0.0
        %1562 = vmatpush1.msra.mxu0 0.0
        %1563 = vmatprep.subr.mxu0 0.0
        %1564 = vmatpush1.msra.mxu0 0.0
        %1565 = vmatprep.subr.mxu0 0.0
        %1566 = vmatpush1.msra.mxu0 0.0
        %1567 = vmatprep.subr.mxu0 0.0
        %1568 = vmatpush1.msra.mxu0 0.0
        %1569 = vmatprep.subr.mxu0 0.0
        %1570 = vmatpush1.msra.mxu0 0.0
        %1571 = vmatprep.subr.mxu0 0.0
        %1572 = vmatpush1.msra.mxu0 0.0
        %1573 = vmatprep.subr.mxu0 0.0
        %1574 = vmatpush1.msra.mxu0 0.0
        %1575 = vmatprep.subr.mxu0 0.0
        %1576 = vmatpush1.msra.mxu0 0.0
        %1577 = vmatprep.subr.mxu0 0.0
        %1578 = vmatpush1.msra.mxu0 0.0
        %1579 = vmatprep.subr.mxu0 0.0
        %1580 = vmatpush1.msra.mxu0 0.0
        %1581 = vmatprep.subr.mxu0 0.0
        %1582 = vmatpush1.msra.mxu0 0.0
        %1583 = vmatprep.subr.mxu0 0.0
        %1584 = vmatpush1.msra.mxu0 0.0
        %1585 = vmatprep.subr.mxu0 0.0
        %1586 = vmatpush1.msra.mxu0 0.0
        %1587 = vmatprep.subr.mxu0 0.0
        %1588 = vmatpush1.msra.mxu0 0.0
        %1589 = vmatprep.subr.mxu0 0.0
        %1590 = vmatpush1.msra.mxu0 0.0
        %1591 = vmatprep.subr.mxu0 0.0
        %1592 = vmatpush1.msra.mxu0 0.0
        %1593 = vmatprep.subr.mxu0 0.0
        %1594 = vmatpush1.msra.mxu0 0.0
        %1595 = vmatprep.subr.mxu0 0.0
        %1596 = vmatpush1.msra.mxu0 0.0
        %1597 = vmatprep.subr.mxu0 0.0
        %1598 = vmatpush1.msra.mxu0 0.0
        %1599 = vmatprep.mubr.f32.mxu0 0.0
        %1600 = vmatmul.mubr.f32.gmra.mrb[0].mxu0 %v1524
        %v1601 = vpop.f32.mrb[0].mxu0
        %v1602 = vadd.f32 0.0, %v1601
        %v1603 = vpop.f32.mrb[0].mxu0
        %1604 = vmatprep.mubr.f32.mxu0 0.0
        %1605 = vmatmul.mubr.f32.gmra.mrb[0].mxu0 %v1527
        %v1606 = vpop.f32.mrb[0].mxu0
        %v1607 = vadd.f32 0.0, %v1606
        %v1608 = vpop.f32.mrb[0].mxu0
        %1609 = vmatprep.mubr.f32.mxu0 0.0
        %1610 = vmatmul.mubr.f32.gmra.mrb[0].mxu0 %v1530
        %v1611 = vpop.f32.mrb[0].mxu0
        %v1612 = vadd.f32 0.0, %v1611
        %v1613 = vpop.f32.mrb[0].mxu0
        %1614 = vmatprep.mubr.f32.mxu0 0.0
        %1615 = vmatmul.mubr.f32.gmra.mrb[0].mxu0 %v1533
        %v1616 = vpop.f32.mrb[0].mxu0
        %v1617 = vadd.f32 0.0, %v1616
        %v1618 = vpop.f32.mrb[0].mxu0
        %1619 = vdwg.mxu0
        %1621 = vrot.lane.b32.xlu0 %v1188, 112
        %v1622 = vpop.permute.xlu0 %1621
        %1624 = vxpose.xlu0.b32.start [1/16] %v1622, 128
        %1625 = vxpose.xlu0.b32.cont [2/16] 0.0, 128
        %1626 = vxpose.xlu0.b32.cont [3/16] 0.0, 128
        %1627 = vxpose.xlu0.b32.cont [4/16] 0.0, 128
        %1628 = vxpose.xlu0.b32.cont [5/16] 0.0, 128
        %1629 = vxpose.xlu0.b32.cont [6/16] 0.0, 128
        %1630 = vxpose.xlu0.b32.cont [7/16] 0.0, 128
        %1631 = vxpose.xlu0.b32.cont [8/16] 0.0, 128
        %1632 = vxpose.xlu0.b32.cont [9/16] 0.0, 128
        %1633 = vxpose.xlu0.b32.cont [10/16] 0.0, 128
        %1634 = vxpose.xlu0.b32.cont [11/16] 0.0, 128
        %1635 = vxpose.xlu0.b32.cont [12/16] 0.0, 128
        %1636 = vxpose.xlu0.b32.cont [13/16] 0.0, 128
        %1637 = vxpose.xlu0.b32.cont [14/16] 0.0, 128
        %1638 = vxpose.xlu0.b32.cont [15/16] 0.0, 128
        %1639 = vxpose.xlu0.b32.end [16/16] 0.0, 128
        %v1640 = vpop.trf.xlu0
        %v1641 = vpop.trf.xlu0
        %v1642 = vpop.trf.xlu0
        %v1643 = vpop.trf.xlu0
        %v1644 = vpop.trf.xlu0
        %v1645 = vpop.trf.xlu0
        %v1646 = vpop.trf.xlu0
        %v1647 = vpop.trf.xlu0
        %v1648 = vpop.trf.xlu0
        %v1649 = vpop.trf.xlu0
        %v1650 = vpop.trf.xlu0
        %v1651 = vpop.trf.xlu0
        %v1652 = vpop.trf.xlu0
        %v1653 = vpop.trf.xlu0
        %v1654 = vpop.trf.xlu0
        %v1655 = vpop.trf.xlu0
        %1657 = vrot.lane.b32.xlu0 %v872, 120
        %v1658 = vpop.permute.xlu0 %1657
        %v1661 = vsel %vm1328, %v1640, 0
        %v1664 = vsel %vm1328, %v1641, 0
        %1666 = vmatprep.subr.mxu0 0.0
        %1667 = vmatpush1.msra.mxu0 %v1658
        %1668 = vmatprep.subr.mxu0 0.0
        %1669 = vmatpush1.msra.mxu0 0.0
        %1670 = vmatprep.subr.mxu0 0.0
        %1671 = vmatpush1.msra.mxu0 0.0
        %1672 = vmatprep.subr.mxu0 0.0
        %1673 = vmatpush1.msra.mxu0 0.0
        %1674 = vmatprep.subr.mxu0 0.0
        %1675 = vmatpush1.msra.mxu0 0.0
        %1676 = vmatprep.subr.mxu0 0.0
        %1677 = vmatpush1.msra.mxu0 0.0
        %1678 = vmatprep.subr.mxu0 0.0
        %1679 = vmatpush1.msra.mxu0 0.0
        %1680 = vmatprep.subr.mxu0 0.0
        %1681 = vmatpush1.msra.mxu0 0.0
        %1682 = vmatprep.subr.mxu0 0.0
        %1683 = vmatpush1.msra.mxu0 0.0
        %1684 = vmatprep.subr.mxu0 0.0
        %1685 = vmatpush1.msra.mxu0 0.0
        %1686 = vmatprep.subr.mxu0 0.0
        %1687 = vmatpush1.msra.mxu0 0.0
        %1688 = vmatprep.subr.mxu0 0.0
        %1689 = vmatpush1.msra.mxu0 0.0
        %1690 = vmatprep.subr.mxu0 0.0
        %1691 = vmatpush1.msra.mxu0 0.0
        %1692 = vmatprep.subr.mxu0 0.0
        %1693 = vmatpush1.msra.mxu0 0.0
        %1694 = vmatprep.subr.mxu0 0.0
        %1695 = vmatpush1.msra.mxu0 0.0
        %1696 = vmatprep.subr.mxu0 0.0
        %1697 = vmatpush1.msra.mxu0 0.0
        %1698 = vmatprep.subr.mxu0 0.0
        %1699 = vmatpush1.msra.mxu0 0.0
        %1700 = vmatprep.subr.mxu0 0.0
        %1701 = vmatpush1.msra.mxu0 0.0
        %1702 = vmatprep.subr.mxu0 0.0
        %1703 = vmatpush1.msra.mxu0 0.0
        %1704 = vmatprep.subr.mxu0 0.0
        %1705 = vmatpush1.msra.mxu0 0.0
        %1706 = vmatprep.subr.mxu0 0.0
        %1707 = vmatpush1.msra.mxu0 0.0
        %1708 = vmatprep.subr.mxu0 0.0
        %1709 = vmatpush1.msra.mxu0 0.0
        %1710 = vmatprep.subr.mxu0 0.0
        %1711 = vmatpush1.msra.mxu0 0.0
        %1712 = vmatprep.subr.mxu0 0.0
        %1713 = vmatpush1.msra.mxu0 0.0
        %1714 = vmatprep.subr.mxu0 0.0
        %1715 = vmatpush1.msra.mxu0 0.0
        %1716 = vmatprep.subr.mxu0 0.0
        %1717 = vmatpush1.msra.mxu0 0.0
        %1718 = vmatprep.subr.mxu0 0.0
        %1719 = vmatpush1.msra.mxu0 0.0
        %1720 = vmatprep.subr.mxu0 0.0
        %1721 = vmatpush1.msra.mxu0 0.0
        %1722 = vmatprep.subr.mxu0 0.0
        %1723 = vmatpush1.msra.mxu0 0.0
        %1724 = vmatprep.subr.mxu0 0.0
        %1725 = vmatpush1.msra.mxu0 0.0
        %1726 = vmatprep.subr.mxu0 0.0
        %1727 = vmatpush1.msra.mxu0 0.0
        %1728 = vmatprep.subr.mxu0 0.0
        %1729 = vmatpush1.msra.mxu0 0.0
        %1730 = vmatprep.mubr.f32.mxu0 0.0
        %1731 = vmatmul.mubr.f32.gmra.mrb[0].mxu0 %v1661
        %v1732 = vpop.f32.mrb[0].mxu0
        %v1733 = vadd.f32 0.0, %v1732
        %v1734 = vpop.f32.mrb[0].mxu0
        %1735 = vmatprep.mubr.f32.mxu0 0.0
        %1736 = vmatmul.mubr.f32.gmra.mrb[0].mxu0 %v1664
        %v1737 = vpop.f32.mrb[0].mxu0
        %v1738 = vadd.f32 0.0, %v1737
        %v1739 = vpop.f32.mrb[0].mxu0
        %1740 = vdwg.mxu0
        %1742 = vrot.lane.b32.xlu0 %v1291, 112
        %v1743 = vpop.permute.xlu0 %1742
        %1745 = vxpose.xlu0.b32.start [1/16] %v1743, 128
        %1746 = vxpose.xlu0.b32.cont [2/16] 0.0, 128
        %1747 = vxpose.xlu0.b32.cont [3/16] 0.0, 128
        %1748 = vxpose.xlu0.b32.cont [4/16] 0.0, 128
        %1749 = vxpose.xlu0.b32.cont [5/16] 0.0, 128
        %1750 = vxpose.xlu0.b32.cont [6/16] 0.0, 128
        %1751 = vxpose.xlu0.b32.cont [7/16] 0.0, 128
        %1752 = vxpose.xlu0.b32.cont [8/16] 0.0, 128
        %1753 = vxpose.xlu0.b32.cont [9/16] 0.0, 128
        %1754 = vxpose.xlu0.b32.cont [10/16] 0.0, 128
        %1755 = vxpose.xlu0.b32.cont [11/16] 0.0, 128
        %1756 = vxpose.xlu0.b32.cont [12/16] 0.0, 128
        %1757 = vxpose.xlu0.b32.cont [13/16] 0.0, 128
        %1758 = vxpose.xlu0.b32.cont [14/16] 0.0, 128
        %1759 = vxpose.xlu0.b32.cont [15/16] 0.0, 128
        %1760 = vxpose.xlu0.b32.end [16/16] 0.0, 128
        %v1761 = vpop.trf.xlu0
        %v1762 = vpop.trf.xlu0
        %v1763 = vpop.trf.xlu0
        %v1764 = vpop.trf.xlu0
        %v1765 = vpop.trf.xlu0
        %v1766 = vpop.trf.xlu0
        %v1767 = vpop.trf.xlu0
        %v1768 = vpop.trf.xlu0
        %v1769 = vpop.trf.xlu0
        %v1770 = vpop.trf.xlu0
        %v1771 = vpop.trf.xlu0
        %v1772 = vpop.trf.xlu0
        %v1773 = vpop.trf.xlu0
        %v1774 = vpop.trf.xlu0
        %v1775 = vpop.trf.xlu0
        %v1776 = vpop.trf.xlu0
        %1778 = vrot.lane.b32.xlu0 %v877, 120
        %v1779 = vpop.permute.xlu0 %1778
        %v1782 = vsel %vm1328, %v1761, 0
        %v1785 = vsel %vm1328, %v1762, 0
        %1787 = vmatprep.subr.mxu0 0.0
        %1788 = vmatpush1.msra.mxu0 %v1779
        %1789 = vmatprep.subr.mxu0 0.0
        %1790 = vmatpush1.msra.mxu0 0.0
        %1791 = vmatprep.subr.mxu0 0.0
        %1792 = vmatpush1.msra.mxu0 0.0
        %1793 = vmatprep.subr.mxu0 0.0
        %1794 = vmatpush1.msra.mxu0 0.0
        %1795 = vmatprep.subr.mxu0 0.0
        %1796 = vmatpush1.msra.mxu0 0.0
        %1797 = vmatprep.subr.mxu0 0.0
        %1798 = vmatpush1.msra.mxu0 0.0
        %1799 = vmatprep.subr.mxu0 0.0
        %1800 = vmatpush1.msra.mxu0 0.0
        %1801 = vmatprep.subr.mxu0 0.0
        %1802 = vmatpush1.msra.mxu0 0.0
        %1803 = vmatprep.subr.mxu0 0.0
        %1804 = vmatpush1.msra.mxu0 0.0
        %1805 = vmatprep.subr.mxu0 0.0
        %1806 = vmatpush1.msra.mxu0 0.0
        %1807 = vmatprep.subr.mxu0 0.0
        %1808 = vmatpush1.msra.mxu0 0.0
        %1809 = vmatprep.subr.mxu0 0.0
        %1810 = vmatpush1.msra.mxu0 0.0
        %1811 = vmatprep.subr.mxu0 0.0
        %1812 = vmatpush1.msra.mxu0 0.0
        %1813 = vmatprep.subr.mxu0 0.0
        %1814 = vmatpush1.msra.mxu0 0.0
        %1815 = vmatprep.subr.mxu0 0.0
        %1816 = vmatpush1.msra.mxu0 0.0
        %1817 = vmatprep.subr.mxu0 0.0
        %1818 = vmatpush1.msra.mxu0 0.0
        %1819 = vmatprep.subr.mxu0 0.0
        %1820 = vmatpush1.msra.mxu0 0.0
        %1821 = vmatprep.subr.mxu0 0.0
        %1822 = vmatpush1.msra.mxu0 0.0
        %1823 = vmatprep.subr.mxu0 0.0
        %1824 = vmatpush1.msra.mxu0 0.0
        %1825 = vmatprep.subr.mxu0 0.0
        %1826 = vmatpush1.msra.mxu0 0.0
        %1827 = vmatprep.subr.mxu0 0.0
        %1828 = vmatpush1.msra.mxu0 0.0
        %1829 = vmatprep.subr.mxu0 0.0
        %1830 = vmatpush1.msra.mxu0 0.0
        %1831 = vmatprep.subr.mxu0 0.0
        %1832 = vmatpush1.msra.mxu0 0.0
        %1833 = vmatprep.subr.mxu0 0.0
        %1834 = vmatpush1.msra.mxu0 0.0
        %1835 = vmatprep.subr.mxu0 0.0
        %1836 = vmatpush1.msra.mxu0 0.0
        %1837 = vmatprep.subr.mxu0 0.0
        %1838 = vmatpush1.msra.mxu0 0.0
        %1839 = vmatprep.subr.mxu0 0.0
        %1840 = vmatpush1.msra.mxu0 0.0
        %1841 = vmatprep.subr.mxu0 0.0
        %1842 = vmatpush1.msra.mxu0 0.0
        %1843 = vmatprep.subr.mxu0 0.0
        %1844 = vmatpush1.msra.mxu0 0.0
        %1845 = vmatprep.subr.mxu0 0.0
        %1846 = vmatpush1.msra.mxu0 0.0
        %1847 = vmatprep.subr.mxu0 0.0
        %1848 = vmatpush1.msra.mxu0 0.0
        %1849 = vmatprep.subr.mxu0 0.0
        %1850 = vmatpush1.msra.mxu0 0.0
        %1851 = vmatprep.mubr.f32.mxu0 0.0
        %1852 = vmatmul.mubr.f32.gmra.mrb[0].mxu0 %v1782
        %v1853 = vpop.f32.mrb[0].mxu0
        %v1854 = vadd.f32 0.0, %v1853
        %v1855 = vpop.f32.mrb[0].mxu0
        %1856 = vmatprep.mubr.f32.mxu0 0.0
        %1857 = vmatmul.mubr.f32.gmra.mrb[0].mxu0 %v1785
        %v1858 = vpop.f32.mrb[0].mxu0
        %v1859 = vadd.f32 0.0, %v1858
        %v1860 = vpop.f32.mrb[0].mxu0
        %1861 = vdwg.mxu0
        %v1863 = vsel %vm1328, %v1733, 0
        %v1866 = vsel %vm1328, %v1738, 0
        %v1869 = vsel %vm1328, %v1854, 0
        %v1872 = vsel %vm1328, %v1859, 0
        %1874 = vmatprep.subr.mxu0 0.0
        %1875 = vmatpush1.msra.mxu0 %v1293
        %1876 = vmatprep.subr.mxu0 0.0
        %1877 = vmatpush1.msra.mxu0 0.0
        %1878 = vmatprep.subr.mxu0 0.0
        %1879 = vmatpush1.msra.mxu0 0.0
        %1880 = vmatprep.subr.mxu0 0.0
        %1881 = vmatpush1.msra.mxu0 0.0
        %1882 = vmatprep.subr.mxu0 0.0
        %1883 = vmatpush1.msra.mxu0 0.0
        %1884 = vmatprep.subr.mxu0 0.0
        %1885 = vmatpush1.msra.mxu0 0.0
        %1886 = vmatprep.subr.mxu0 0.0
        %1887 = vmatpush1.msra.mxu0 0.0
        %1888 = vmatprep.subr.mxu0 0.0
        %1889 = vmatpush1.msra.mxu0 0.0
        %1890 = vmatprep.subr.mxu0 0.0
        %1891 = vmatpush1.msra.mxu0 0.0
        %1892 = vmatprep.subr.mxu0 0.0
        %1893 = vmatpush1.msra.mxu0 0.0
        %1894 = vmatprep.subr.mxu0 0.0
        %1895 = vmatpush1.msra.mxu0 0.0
        %1896 = vmatprep.subr.mxu0 0.0
        %1897 = vmatpush1.msra.mxu0 0.0
        %1898 = vmatprep.subr.mxu0 0.0
        %1899 = vmatpush1.msra.mxu0 0.0
        %1900 = vmatprep.subr.mxu0 0.0
        %1901 = vmatpush1.msra.mxu0 0.0
        %1902 = vmatprep.subr.mxu0 0.0
        %1903 = vmatpush1.msra.mxu0 0.0
        %1904 = vmatprep.subr.mxu0 0.0
        %1905 = vmatpush1.msra.mxu0 0.0
        %1906 = vmatprep.subr.mxu0 0.0
        %1907 = vmatpush1.msra.mxu0 0.0
        %1908 = vmatprep.subr.mxu0 0.0
        %1909 = vmatpush1.msra.mxu0 0.0
        %1910 = vmatprep.subr.mxu0 0.0
        %1911 = vmatpush1.msra.mxu0 0.0
        %1912 = vmatprep.subr.mxu0 0.0
        %1913 = vmatpush1.msra.mxu0 0.0
        %1914 = vmatprep.subr.mxu0 0.0
        %1915 = vmatpush1.msra.mxu0 0.0
        %1916 = vmatprep.subr.mxu0 0.0
        %1917 = vmatpush1.msra.mxu0 0.0
        %1918 = vmatprep.subr.mxu0 0.0
        %1919 = vmatpush1.msra.mxu0 0.0
        %1920 = vmatprep.subr.mxu0 0.0
        %1921 = vmatpush1.msra.mxu0 0.0
        %1922 = vmatprep.subr.mxu0 0.0
        %1923 = vmatpush1.msra.mxu0 0.0
        %1924 = vmatprep.subr.mxu0 0.0
        %1925 = vmatpush1.msra.mxu0 0.0
        %1926 = vmatprep.subr.mxu0 0.0
        %1927 = vmatpush1.msra.mxu0 0.0
        %1928 = vmatprep.subr.mxu0 0.0
        %1929 = vmatpush1.msra.mxu0 0.0
        %1930 = vmatprep.subr.mxu0 0.0
        %1931 = vmatpush1.msra.mxu0 0.0
        %1932 = vmatprep.subr.mxu0 0.0
        %1933 = vmatpush1.msra.mxu0 0.0
        %1934 = vmatprep.subr.mxu0 0.0
        %1935 = vmatpush1.msra.mxu0 0.0
        %1936 = vmatprep.subr.mxu0 0.0
        %1937 = vmatpush1.msra.mxu0 0.0
        %1938 = vmatprep.mubr.f32.mxu0 0.0
        %1939 = vmatmul.mubr.f32.gmra.mrb[0].mxu0 %v1863
        %v1940 = vpop.f32.mrb[0].mxu0
        %v1941 = vadd.f32 0.0, %v1940
        %v1942 = vpop.f32.mrb[0].mxu0
        %1943 = vmatprep.mubr.f32.mxu0 0.0
        %1944 = vmatmul.mubr.f32.gmra.mrb[0].mxu0 %v1866
        %v1945 = vpop.f32.mrb[0].mxu0
        %v1946 = vadd.f32 0.0, %v1945
        %v1947 = vpop.f32.mrb[0].mxu0
        %1948 = vmatprep.mubr.f32.mxu0 0.0
        %1949 = vmatmul.mubr.f32.gmra.mrb[0].mxu0 %v1869
        %v1950 = vpop.f32.mrb[0].mxu0
        %v1951 = vadd.f32 0.0, %v1950
        %v1952 = vpop.f32.mrb[0].mxu0
        %1953 = vmatprep.mubr.f32.mxu0 0.0
        %1954 = vmatmul.mubr.f32.gmra.mrb[0].mxu0 %v1872
        %v1955 = vpop.f32.mrb[0].mxu0
        %v1956 = vadd.f32 0.0, %v1955
        %v1957 = vpop.f32.mrb[0].mxu0
        %1958 = vdwg.mxu0
        %1960 = vrot.lane.b32.xlu0 %v982, 112
        %v1961 = vpop.permute.xlu0 %1960
        %vm1962 = vcmask 130048
        %v1963 = vsel %vm1962, %v1961, 0
        %1965 = vmatprep.subr.mxu0 0.0
        %1966 = vmatpush1.msra.mxu0 %v1941
        %1967 = vmatprep.subr.mxu0 0.0
        %1968 = vmatpush1.msra.mxu0 %v1946
        %1969 = vmatprep.subr.mxu0 0.0
        %1970 = vmatpush1.msra.mxu0 0.0
        %1971 = vmatprep.subr.mxu0 0.0
        %1972 = vmatpush1.msra.mxu0 0.0
        %1973 = vmatprep.subr.mxu0 0.0
        %1974 = vmatpush1.msra.mxu0 0.0
        %1975 = vmatprep.subr.mxu0 0.0
        %1976 = vmatpush1.msra.mxu0 0.0
        %1977 = vmatprep.subr.mxu0 0.0
        %1978 = vmatpush1.msra.mxu0 0.0
        %1979 = vmatprep.subr.mxu0 0.0
        %1980 = vmatpush1.msra.mxu0 0.0
        %1981 = vmatprep.subr.mxu0 0.0
        %1982 = vmatpush1.msra.mxu0 0.0
        %1983 = vmatprep.subr.mxu0 0.0
        %1984 = vmatpush1.msra.mxu0 0.0
        %1985 = vmatprep.subr.mxu0 0.0
        %1986 = vmatpush1.msra.mxu0 0.0
        %1987 = vmatprep.subr.mxu0 0.0
        %1988 = vmatpush1.msra.mxu0 0.0
        %1989 = vmatprep.subr.mxu0 0.0
        %1990 = vmatpush1.msra.mxu0 0.0
        %1991 = vmatprep.subr.mxu0 0.0
        %1992 = vmatpush1.msra.mxu0 0.0
        %1993 = vmatprep.subr.mxu0 0.0
        %1994 = vmatpush1.msra.mxu0 0.0
        %1995 = vmatprep.subr.mxu0 0.0
        %1996 = vmatpush1.msra.mxu0 0.0
        %1997 = vmatprep.subr.mxu0 0.0
        %1998 = vmatpush1.msra.mxu0 0.0
        %1999 = vmatprep.subr.mxu0 0.0
        %2000 = vmatpush1.msra.mxu0 0.0
        %2001 = vmatprep.subr.mxu0 0.0
        %2002 = vmatpush1.msra.mxu0 0.0
        %2003 = vmatprep.subr.mxu0 0.0
        %2004 = vmatpush1.msra.mxu0 0.0
        %2005 = vmatprep.subr.mxu0 0.0
        %2006 = vmatpush1.msra.mxu0 0.0
        %2007 = vmatprep.subr.mxu0 0.0
        %2008 = vmatpush1.msra.mxu0 0.0
        %2009 = vmatprep.subr.mxu0 0.0
        %2010 = vmatpush1.msra.mxu0 0.0
        %2011 = vmatprep.subr.mxu0 0.0
        %2012 = vmatpush1.msra.mxu0 0.0
        %2013 = vmatprep.subr.mxu0 0.0
        %2014 = vmatpush1.msra.mxu0 0.0
        %2015 = vmatprep.subr.mxu0 0.0
        %2016 = vmatpush1.msra.mxu0 0.0
        %2017 = vmatprep.subr.mxu0 0.0
        %2018 = vmatpush1.msra.mxu0 0.0
        %2019 = vmatprep.subr.mxu0 0.0
        %2020 = vmatpush1.msra.mxu0 0.0
        %2021 = vmatprep.subr.mxu0 0.0
        %2022 = vmatpush1.msra.mxu0 0.0
        %2023 = vmatprep.subr.mxu0 0.0
        %2024 = vmatpush1.msra.mxu0 0.0
        %2025 = vmatprep.subr.mxu0 0.0
        %2026 = vmatpush1.msra.mxu0 0.0
        %2027 = vmatprep.subr.mxu0 0.0
        %2028 = vmatpush1.msra.mxu0 0.0
        %2029 = vmatprep.mubr.f32.mxu0 0.0
        %2030 = vmatmul.mubr.f32.gmra.mrb[0].mxu0 %v1963
        %v2031 = vpop.f32.mrb[0].mxu0
        %v2032 = vadd.f32 0.0, %v2031
        %v2033 = vpop.f32.mrb[0].mxu0
        %2034 = vdwg.mxu0
        %2036 = vrot.lane.b32.xlu0 %v1085, 112
        %v2037 = vpop.permute.xlu0 %2036
        %v2038 = vsel %vm1962, %v2037, 0
        %2040 = vmatprep.subr.mxu0 0.0
        %2041 = vmatpush1.msra.mxu0 %v1951
        %2042 = vmatprep.subr.mxu0 0.0
        %2043 = vmatpush1.msra.mxu0 %v1956
        %2044 = vmatprep.subr.mxu0 0.0
        %2045 = vmatpush1.msra.mxu0 0.0
        %2046 = vmatprep.subr.mxu0 0.0
        %2047 = vmatpush1.msra.mxu0 0.0
        %2048 = vmatprep.subr.mxu0 0.0
        %2049 = vmatpush1.msra.mxu0 0.0
        %2050 = vmatprep.subr.mxu0 0.0
        %2051 = vmatpush1.msra.mxu0 0.0
        %2052 = vmatprep.subr.mxu0 0.0
        %2053 = vmatpush1.msra.mxu0 0.0
        %2054 = vmatprep.subr.mxu0 0.0
        %2055 = vmatpush1.msra.mxu0 0.0
        %2056 = vmatprep.subr.mxu0 0.0
        %2057 = vmatpush1.msra.mxu0 0.0
        %2058 = vmatprep.subr.mxu0 0.0
        %2059 = vmatpush1.msra.mxu0 0.0
        %2060 = vmatprep.subr.mxu0 0.0
        %2061 = vmatpush1.msra.mxu0 0.0
        %2062 = vmatprep.subr.mxu0 0.0
        %2063 = vmatpush1.msra.mxu0 0.0
        %2064 = vmatprep.subr.mxu0 0.0
        %2065 = vmatpush1.msra.mxu0 0.0
        %2066 = vmatprep.subr.mxu0 0.0
        %2067 = vmatpush1.msra.mxu0 0.0
        %2068 = vmatprep.subr.mxu0 0.0
        %2069 = vmatpush1.msra.mxu0 0.0
        %2070 = vmatprep.subr.mxu0 0.0
        %2071 = vmatpush1.msra.mxu0 0.0
        %2072 = vmatprep.subr.mxu0 0.0
        %2073 = vmatpush1.msra.mxu0 0.0
        %2074 = vmatprep.subr.mxu0 0.0
        %2075 = vmatpush1.msra.mxu0 0.0
        %2076 = vmatprep.subr.mxu0 0.0
        %2077 = vmatpush1.msra.mxu0 0.0
        %2078 = vmatprep.subr.mxu0 0.0
        %2079 = vmatpush1.msra.mxu0 0.0
        %2080 = vmatprep.subr.mxu0 0.0
        %2081 = vmatpush1.msra.mxu0 0.0
        %2082 = vmatprep.subr.mxu0 0.0
        %2083 = vmatpush1.msra.mxu0 0.0
        %2084 = vmatprep.subr.mxu0 0.0
        %2085 = vmatpush1.msra.mxu0 0.0
        %2086 = vmatprep.subr.mxu0 0.0
        %2087 = vmatpush1.msra.mxu0 0.0
        %2088 = vmatprep.subr.mxu0 0.0
        %2089 = vmatpush1.msra.mxu0 0.0
        %2090 = vmatprep.subr.mxu0 0.0
        %2091 = vmatpush1.msra.mxu0 0.0
        %2092 = vmatprep.subr.mxu0 0.0
        %2093 = vmatpush1.msra.mxu0 0.0
        %2094 = vmatprep.subr.mxu0 0.0
        %2095 = vmatpush1.msra.mxu0 0.0
        %2096 = vmatprep.subr.mxu0 0.0
        %2097 = vmatpush1.msra.mxu0 0.0
        %2098 = vmatprep.subr.mxu0 0.0
        %2099 = vmatpush1.msra.mxu0 0.0
        %2100 = vmatprep.subr.mxu0 0.0
        %2101 = vmatpush1.msra.mxu0 0.0
        %2102 = vmatprep.subr.mxu0 0.0
        %2103 = vmatpush1.msra.mxu0 0.0
        %2104 = vmatprep.mubr.f32.mxu0 0.0
        %2105 = vmatmul.mubr.f32.gmra.mrb[0].mxu0 %v2038
        %v2106 = vpop.f32.mrb[0].mxu0
        %v2107 = vadd.f32 0.0, %v2106
        %v2108 = vpop.f32.mrb[0].mxu0
        %2109 = vdwg.mxu0
        %v2110 = vsel %vm1962, %v982, 0
        %2112 = vmatprep.subr.mxu0 0.0
        %2113 = vmatpush1.msra.mxu0 %v1602
        %2114 = vmatprep.subr.mxu0 0.0
        %2115 = vmatpush1.msra.mxu0 %v1607
        %2116 = vmatprep.subr.mxu0 0.0
        %2117 = vmatpush1.msra.mxu0 0.0
        %2118 = vmatprep.subr.mxu0 0.0
        %2119 = vmatpush1.msra.mxu0 0.0
        %2120 = vmatprep.subr.mxu0 0.0
        %2121 = vmatpush1.msra.mxu0 0.0
        %2122 = vmatprep.subr.mxu0 0.0
        %2123 = vmatpush1.msra.mxu0 0.0
        %2124 = vmatprep.subr.mxu0 0.0
        %2125 = vmatpush1.msra.mxu0 0.0
        %2126 = vmatprep.subr.mxu0 0.0
        %2127 = vmatpush1.msra.mxu0 0.0
        %2128 = vmatprep.subr.mxu0 0.0
        %2129 = vmatpush1.msra.mxu0 0.0
        %2130 = vmatprep.subr.mxu0 0.0
        %2131 = vmatpush1.msra.mxu0 0.0
        %2132 = vmatprep.subr.mxu0 0.0
        %2133 = vmatpush1.msra.mxu0 0.0
        %2134 = vmatprep.subr.mxu0 0.0
        %2135 = vmatpush1.msra.mxu0 0.0
        %2136 = vmatprep.subr.mxu0 0.0
        %2137 = vmatpush1.msra.mxu0 0.0
        %2138 = vmatprep.subr.mxu0 0.0
        %2139 = vmatpush1.msra.mxu0 0.0
        %2140 = vmatprep.subr.mxu0 0.0
        %2141 = vmatpush1.msra.mxu0 0.0
        %2142 = vmatprep.subr.mxu0 0.0
        %2143 = vmatpush1.msra.mxu0 0.0
        %2144 = vmatprep.subr.mxu0 0.0
        %2145 = vmatpush1.msra.mxu0 0.0
        %2146 = vmatprep.subr.mxu0 0.0
        %2147 = vmatpush1.msra.mxu0 0.0
        %2148 = vmatprep.subr.mxu0 0.0
        %2149 = vmatpush1.msra.mxu0 0.0
        %2150 = vmatprep.subr.mxu0 0.0
        %2151 = vmatpush1.msra.mxu0 0.0
        %2152 = vmatprep.subr.mxu0 0.0
        %2153 = vmatpush1.msra.mxu0 0.0
        %2154 = vmatprep.subr.mxu0 0.0
        %2155 = vmatpush1.msra.mxu0 0.0
        %2156 = vmatprep.subr.mxu0 0.0
        %2157 = vmatpush1.msra.mxu0 0.0
        %2158 = vmatprep.subr.mxu0 0.0
        %2159 = vmatpush1.msra.mxu0 0.0
        %2160 = vmatprep.subr.mxu0 0.0
        %2161 = vmatpush1.msra.mxu0 0.0
        %2162 = vmatprep.subr.mxu0 0.0
        %2163 = vmatpush1.msra.mxu0 0.0
        %2164 = vmatprep.subr.mxu0 0.0
        %2165 = vmatpush1.msra.mxu0 0.0
        %2166 = vmatprep.subr.mxu0 0.0
        %2167 = vmatpush1.msra.mxu0 0.0
        %2168 = vmatprep.subr.mxu0 0.0
        %2169 = vmatpush1.msra.mxu0 0.0
        %2170 = vmatprep.subr.mxu0 0.0
        %2171 = vmatpush1.msra.mxu0 0.0
        %2172 = vmatprep.subr.mxu0 0.0
        %2173 = vmatpush1.msra.mxu0 0.0
        %2174 = vmatprep.subr.mxu0 0.0
        %2175 = vmatpush1.msra.mxu0 0.0
        %2176 = vmatprep.mubr.f32.mxu0 0.0
        %2177 = vmatmul.mubr.f32.gmra.mrb[0].mxu0 %v2110
        %v2178 = vpop.f32.mrb[0].mxu0
        %v2179 = vadd.f32 %v2032, %v2178
        %v2180 = vpop.f32.mrb[0].mxu0
        %2181 = vdwg.mxu0
        %v2182 = vsel %vm1962, %v1085, 0
        %2184 = vmatprep.subr.mxu0 0.0
        %2185 = vmatpush1.msra.mxu0 %v1612
        %2186 = vmatprep.subr.mxu0 0.0
        %2187 = vmatpush1.msra.mxu0 %v1617
        %2188 = vmatprep.subr.mxu0 0.0
        %2189 = vmatpush1.msra.mxu0 0.0
        %2190 = vmatprep.subr.mxu0 0.0
        %2191 = vmatpush1.msra.mxu0 0.0
        %2192 = vmatprep.subr.mxu0 0.0
        %2193 = vmatpush1.msra.mxu0 0.0
        %2194 = vmatprep.subr.mxu0 0.0
        %2195 = vmatpush1.msra.mxu0 0.0
        %2196 = vmatprep.subr.mxu0 0.0
        %2197 = vmatpush1.msra.mxu0 0.0
        %2198 = vmatprep.subr.mxu0 0.0
        %2199 = vmatpush1.msra.mxu0 0.0
        %2200 = vmatprep.subr.mxu0 0.0
        %2201 = vmatpush1.msra.mxu0 0.0
        %2202 = vmatprep.subr.mxu0 0.0
        %2203 = vmatpush1.msra.mxu0 0.0
        %2204 = vmatprep.subr.mxu0 0.0
        %2205 = vmatpush1.msra.mxu0 0.0
        %2206 = vmatprep.subr.mxu0 0.0
        %2207 = vmatpush1.msra.mxu0 0.0
        %2208 = vmatprep.subr.mxu0 0.0
        %2209 = vmatpush1.msra.mxu0 0.0
        %2210 = vmatprep.subr.mxu0 0.0
        %2211 = vmatpush1.msra.mxu0 0.0
        %2212 = vmatprep.subr.mxu0 0.0
        %2213 = vmatpush1.msra.mxu0 0.0
        %2214 = vmatprep.subr.mxu0 0.0
        %2215 = vmatpush1.msra.mxu0 0.0
        %2216 = vmatprep.subr.mxu0 0.0
        %2217 = vmatpush1.msra.mxu0 0.0
        %2218 = vmatprep.subr.mxu0 0.0
        %2219 = vmatpush1.msra.mxu0 0.0
        %2220 = vmatprep.subr.mxu0 0.0
        %2221 = vmatpush1.msra.mxu0 0.0
        %2222 = vmatprep.subr.mxu0 0.0
        %2223 = vmatpush1.msra.mxu0 0.0
        %2224 = vmatprep.subr.mxu0 0.0
        %2225 = vmatpush1.msra.mxu0 0.0
        %2226 = vmatprep.subr.mxu0 0.0
        %2227 = vmatpush1.msra.mxu0 0.0
        %2228 = vmatprep.subr.mxu0 0.0
        %2229 = vmatpush1.msra.mxu0 0.0
        %2230 = vmatprep.subr.mxu0 0.0
        %2231 = vmatpush1.msra.mxu0 0.0
        %2232 = vmatprep.subr.mxu0 0.0
        %2233 = vmatpush1.msra.mxu0 0.0
        %2234 = vmatprep.subr.mxu0 0.0
        %2235 = vmatpush1.msra.mxu0 0.0
        %2236 = vmatprep.subr.mxu0 0.0
        %2237 = vmatpush1.msra.mxu0 0.0
        %2238 = vmatprep.subr.mxu0 0.0
        %2239 = vmatpush1.msra.mxu0 0.0
        %2240 = vmatprep.subr.mxu0 0.0
        %2241 = vmatpush1.msra.mxu0 0.0
        %2242 = vmatprep.subr.mxu0 0.0
        %2243 = vmatpush1.msra.mxu0 0.0
        %2244 = vmatprep.subr.mxu0 0.0
        %2245 = vmatpush1.msra.mxu0 0.0
        %2246 = vmatprep.subr.mxu0 0.0
        %2247 = vmatpush1.msra.mxu0 0.0
        %2248 = vmatprep.mubr.f32.mxu0 0.0
        %2249 = vmatmul.mubr.f32.gmra.mrb[0].mxu0 %v2182
        %v2250 = vpop.f32.mrb[0].mxu0
        %v2251 = vadd.f32 %v2107, %v2250
        %v2252 = vpop.f32.mrb[0].mxu0
        %2253 = vdwg.mxu0
        %2254 = vrot.lane.b32.xlu0 %v1188, 96
        %v2255 = vpop.permute.xlu0 %2254
        %2257 = vxpose.xlu0.b32.start [1/16] %v2255, 128
        %2258 = vxpose.xlu0.b32.cont [2/16] 0.0, 128
        %2259 = vxpose.xlu0.b32.cont [3/16] 0.0, 128
        %2260 = vxpose.xlu0.b32.cont [4/16] 0.0, 128
        %2261 = vxpose.xlu0.b32.cont [5/16] 0.0, 128
        %2262 = vxpose.xlu0.b32.cont [6/16] 0.0, 128
        %2263 = vxpose.xlu0.b32.cont [7/16] 0.0, 128
        %2264 = vxpose.xlu0.b32.cont [8/16] 0.0, 128
        %2265 = vxpose.xlu0.b32.cont [9/16] 0.0, 128
        %2266 = vxpose.xlu0.b32.cont [10/16] 0.0, 128
        %2267 = vxpose.xlu0.b32.cont [11/16] 0.0, 128
        %2268 = vxpose.xlu0.b32.cont [12/16] 0.0, 128
        %2269 = vxpose.xlu0.b32.cont [13/16] 0.0, 128
        %2270 = vxpose.xlu0.b32.cont [14/16] 0.0, 128
        %2271 = vxpose.xlu0.b32.cont [15/16] 0.0, 128
        %2272 = vxpose.xlu0.b32.end [16/16] 0.0, 128
        %v2273 = vpop.trf.xlu0
        %v2274 = vpop.trf.xlu0
        %v2275 = vpop.trf.xlu0
        %v2276 = vpop.trf.xlu0
        %v2277 = vpop.trf.xlu0
        %v2278 = vpop.trf.xlu0
        %v2279 = vpop.trf.xlu0
        %v2280 = vpop.trf.xlu0
        %v2281 = vpop.trf.xlu0
        %v2282 = vpop.trf.xlu0
        %v2283 = vpop.trf.xlu0
        %v2284 = vpop.trf.xlu0
        %v2285 = vpop.trf.xlu0
        %v2286 = vpop.trf.xlu0
        %v2287 = vpop.trf.xlu0
        %v2288 = vpop.trf.xlu0
        %2289 = vrot.lane.b32.xlu0 %v872, 112
        %v2290 = vpop.permute.xlu0 %2289
        %v2293 = vsel %vm1328, %v2273, 0
        %v2296 = vsel %vm1328, %v2274, 0
        %2298 = vmatprep.subr.mxu0 0.0
        %2299 = vmatpush1.msra.mxu0 %v2290
        %2300 = vmatprep.subr.mxu0 0.0
        %2301 = vmatpush1.msra.mxu0 0.0
        %2302 = vmatprep.subr.mxu0 0.0
        %2303 = vmatpush1.msra.mxu0 0.0
        %2304 = vmatprep.subr.mxu0 0.0
        %2305 = vmatpush1.msra.mxu0 0.0
        %2306 = vmatprep.subr.mxu0 0.0
        %2307 = vmatpush1.msra.mxu0 0.0
        %2308 = vmatprep.subr.mxu0 0.0
        %2309 = vmatpush1.msra.mxu0 0.0
        %2310 = vmatprep.subr.mxu0 0.0
        %2311 = vmatpush1.msra.mxu0 0.0
        %2312 = vmatprep.subr.mxu0 0.0
        %2313 = vmatpush1.msra.mxu0 0.0
        %2314 = vmatprep.subr.mxu0 0.0
        %2315 = vmatpush1.msra.mxu0 0.0
        %2316 = vmatprep.subr.mxu0 0.0
        %2317 = vmatpush1.msra.mxu0 0.0
        %2318 = vmatprep.subr.mxu0 0.0
        %2319 = vmatpush1.msra.mxu0 0.0
        %2320 = vmatprep.subr.mxu0 0.0
        %2321 = vmatpush1.msra.mxu0 0.0
        %2322 = vmatprep.subr.mxu0 0.0
        %2323 = vmatpush1.msra.mxu0 0.0
        %2324 = vmatprep.subr.mxu0 0.0
        %2325 = vmatpush1.msra.mxu0 0.0
        %2326 = vmatprep.subr.mxu0 0.0
        %2327 = vmatpush1.msra.mxu0 0.0
        %2328 = vmatprep.subr.mxu0 0.0
        %2329 = vmatpush1.msra.mxu0 0.0
        %2330 = vmatprep.subr.mxu0 0.0
        %2331 = vmatpush1.msra.mxu0 0.0
        %2332 = vmatprep.subr.mxu0 0.0
        %2333 = vmatpush1.msra.mxu0 0.0
        %2334 = vmatprep.subr.mxu0 0.0
        %2335 = vmatpush1.msra.mxu0 0.0
        %2336 = vmatprep.subr.mxu0 0.0
        %2337 = vmatpush1.msra.mxu0 0.0
        %2338 = vmatprep.subr.mxu0 0.0
        %2339 = vmatpush1.msra.mxu0 0.0
        %2340 = vmatprep.subr.mxu0 0.0
        %2341 = vmatpush1.msra.mxu0 0.0
        %2342 = vmatprep.subr.mxu0 0.0
        %2343 = vmatpush1.msra.mxu0 0.0
        %2344 = vmatprep.subr.mxu0 0.0
        %2345 = vmatpush1.msra.mxu0 0.0
        %2346 = vmatprep.subr.mxu0 0.0
        %2347 = vmatpush1.msra.mxu0 0.0
        %2348 = vmatprep.subr.mxu0 0.0
        %2349 = vmatpush1.msra.mxu0 0.0
        %2350 = vmatprep.subr.mxu0 0.0
        %2351 = vmatpush1.msra.mxu0 0.0
        %2352 = vmatprep.subr.mxu0 0.0
        %2353 = vmatpush1.msra.mxu0 0.0
        %2354 = vmatprep.subr.mxu0 0.0
        %2355 = vmatpush1.msra.mxu0 0.0
        %2356 = vmatprep.subr.mxu0 0.0
        %2357 = vmatpush1.msra.mxu0 0.0
        %2358 = vmatprep.subr.mxu0 0.0
        %2359 = vmatpush1.msra.mxu0 0.0
        %2360 = vmatprep.subr.mxu0 0.0
        %2361 = vmatpush1.msra.mxu0 0.0
        %2362 = vmatprep.mubr.f32.mxu0 0.0
        %2363 = vmatmul.mubr.f32.gmra.mrb[0].mxu0 %v2293
        %v2364 = vpop.f32.mrb[0].mxu0
        %v2365 = vadd.f32 0.0, %v2364
        %v2366 = vpop.f32.mrb[0].mxu0
        %2367 = vmatprep.mubr.f32.mxu0 0.0
        %2368 = vmatmul.mubr.f32.gmra.mrb[0].mxu0 %v2296
        %v2369 = vpop.f32.mrb[0].mxu0
        %v2370 = vadd.f32 0.0, %v2369
        %v2371 = vpop.f32.mrb[0].mxu0
        %2372 = vdwg.mxu0
        %2373 = vrot.lane.b32.xlu0 %v1291, 96
        %v2374 = vpop.permute.xlu0 %2373
        %2376 = vxpose.xlu0.b32.start [1/16] %v2374, 128
        %2377 = vxpose.xlu0.b32.cont [2/16] 0.0, 128
        %2378 = vxpose.xlu0.b32.cont [3/16] 0.0, 128
        %2379 = vxpose.xlu0.b32.cont [4/16] 0.0, 128
        %2380 = vxpose.xlu0.b32.cont [5/16] 0.0, 128
        %2381 = vxpose.xlu0.b32.cont [6/16] 0.0, 128
        %2382 = vxpose.xlu0.b32.cont [7/16] 0.0, 128
        %2383 = vxpose.xlu0.b32.cont [8/16] 0.0, 128
        %2384 = vxpose.xlu0.b32.cont [9/16] 0.0, 128
        %2385 = vxpose.xlu0.b32.cont [10/16] 0.0, 128
        %2386 = vxpose.xlu0.b32.cont [11/16] 0.0, 128
        %2387 = vxpose.xlu0.b32.cont [12/16] 0.0, 128
        %2388 = vxpose.xlu0.b32.cont [13/16] 0.0, 128
        %2389 = vxpose.xlu0.b32.cont [14/16] 0.0, 128
        %2390 = vxpose.xlu0.b32.cont [15/16] 0.0, 128
        %2391 = vxpose.xlu0.b32.end [16/16] 0.0, 128
        %v2392 = vpop.trf.xlu0
        %v2393 = vpop.trf.xlu0
        %v2394 = vpop.trf.xlu0
        %v2395 = vpop.trf.xlu0
        %v2396 = vpop.trf.xlu0
        %v2397 = vpop.trf.xlu0
        %v2398 = vpop.trf.xlu0
        %v2399 = vpop.trf.xlu0
        %v2400 = vpop.trf.xlu0
        %v2401 = vpop.trf.xlu0
        %v2402 = vpop.trf.xlu0
        %v2403 = vpop.trf.xlu0
        %v2404 = vpop.trf.xlu0
        %v2405 = vpop.trf.xlu0
        %v2406 = vpop.trf.xlu0
        %v2407 = vpop.trf.xlu0
        %2408 = vrot.lane.b32.xlu0 %v877, 112
        %v2409 = vpop.permute.xlu0 %2408
        %v2412 = vsel %vm1328, %v2392, 0
        %v2415 = vsel %vm1328, %v2393, 0
        %2417 = vmatprep.subr.mxu0 0.0
        %2418 = vmatpush1.msra.mxu0 %v2409
        %2419 = vmatprep.subr.mxu0 0.0
        %2420 = vmatpush1.msra.mxu0 0.0
        %2421 = vmatprep.subr.mxu0 0.0
        %2422 = vmatpush1.msra.mxu0 0.0
        %2423 = vmatprep.subr.mxu0 0.0
        %2424 = vmatpush1.msra.mxu0 0.0
        %2425 = vmatprep.subr.mxu0 0.0
        %2426 = vmatpush1.msra.mxu0 0.0
        %2427 = vmatprep.subr.mxu0 0.0
        %2428 = vmatpush1.msra.mxu0 0.0
        %2429 = vmatprep.subr.mxu0 0.0
        %2430 = vmatpush1.msra.mxu0 0.0
        %2431 = vmatprep.subr.mxu0 0.0
        %2432 = vmatpush1.msra.mxu0 0.0
        %2433 = vmatprep.subr.mxu0 0.0
        %2434 = vmatpush1.msra.mxu0 0.0
        %2435 = vmatprep.subr.mxu0 0.0
        %2436 = vmatpush1.msra.mxu0 0.0
        %2437 = vmatprep.subr.mxu0 0.0
        %2438 = vmatpush1.msra.mxu0 0.0
        %2439 = vmatprep.subr.mxu0 0.0
        %2440 = vmatpush1.msra.mxu0 0.0
        %2441 = vmatprep.subr.mxu0 0.0
        %2442 = vmatpush1.msra.mxu0 0.0
        %2443 = vmatprep.subr.mxu0 0.0
        %2444 = vmatpush1.msra.mxu0 0.0
        %2445 = vmatprep.subr.mxu0 0.0
        %2446 = vmatpush1.msra.mxu0 0.0
        %2447 = vmatprep.subr.mxu0 0.0
        %2448 = vmatpush1.msra.mxu0 0.0
        %2449 = vmatprep.subr.mxu0 0.0
        %2450 = vmatpush1.msra.mxu0 0.0
        %2451 = vmatprep.subr.mxu0 0.0
        %2452 = vmatpush1.msra.mxu0 0.0
        %2453 = vmatprep.subr.mxu0 0.0
        %2454 = vmatpush1.msra.mxu0 0.0
        %2455 = vmatprep.subr.mxu0 0.0
        %2456 = vmatpush1.msra.mxu0 0.0
        %2457 = vmatprep.subr.mxu0 0.0
        %2458 = vmatpush1.msra.mxu0 0.0
        %2459 = vmatprep.subr.mxu0 0.0
        %2460 = vmatpush1.msra.mxu0 0.0
        %2461 = vmatprep.subr.mxu0 0.0
        %2462 = vmatpush1.msra.mxu0 0.0
        %2463 = vmatprep.subr.mxu0 0.0
        %2464 = vmatpush1.msra.mxu0 0.0
        %2465 = vmatprep.subr.mxu0 0.0
        %2466 = vmatpush1.msra.mxu0 0.0
        %2467 = vmatprep.subr.mxu0 0.0
        %2468 = vmatpush1.msra.mxu0 0.0
        %2469 = vmatprep.subr.mxu0 0.0
        %2470 = vmatpush1.msra.mxu0 0.0
        %2471 = vmatprep.subr.mxu0 0.0
        %2472 = vmatpush1.msra.mxu0 0.0
        %2473 = vmatprep.subr.mxu0 0.0
        %2474 = vmatpush1.msra.mxu0 0.0
        %2475 = vmatprep.subr.mxu0 0.0
        %2476 = vmatpush1.msra.mxu0 0.0
        %2477 = vmatprep.subr.mxu0 0.0
        %2478 = vmatpush1.msra.mxu0 0.0
        %2479 = vmatprep.subr.mxu0 0.0
        %2480 = vmatpush1.msra.mxu0 0.0
        %2481 = vmatprep.mubr.f32.mxu0 0.0
        %2482 = vmatmul.mubr.f32.gmra.mrb[0].mxu0 %v2412
        %v2483 = vpop.f32.mrb[0].mxu0
        %v2484 = vadd.f32 0.0, %v2483
        %v2485 = vpop.f32.mrb[0].mxu0
        %2486 = vmatprep.mubr.f32.mxu0 0.0
        %2487 = vmatmul.mubr.f32.gmra.mrb[0].mxu0 %v2415
        %v2488 = vpop.f32.mrb[0].mxu0
        %v2489 = vadd.f32 0.0, %v2488
        %v2490 = vpop.f32.mrb[0].mxu0
        %2491 = vdwg.mxu0
        %v2493 = vsel %vm1328, %v2365, 0
        %v2496 = vsel %vm1328, %v2370, 0
        %v2499 = vsel %vm1328, %v2484, 0
        %v2502 = vsel %vm1328, %v2489, 0
        %2504 = vmatprep.subr.mxu0 0.0
        %2505 = vmatpush1.msra.mxu0 %v1294
        %2506 = vmatprep.subr.mxu0 0.0
        %2507 = vmatpush1.msra.mxu0 0.0
        %2508 = vmatprep.subr.mxu0 0.0
        %2509 = vmatpush1.msra.mxu0 0.0
        %2510 = vmatprep.subr.mxu0 0.0
        %2511 = vmatpush1.msra.mxu0 0.0
        %2512 = vmatprep.subr.mxu0 0.0
        %2513 = vmatpush1.msra.mxu0 0.0
        %2514 = vmatprep.subr.mxu0 0.0
        %2515 = vmatpush1.msra.mxu0 0.0
        %2516 = vmatprep.subr.mxu0 0.0
        %2517 = vmatpush1.msra.mxu0 0.0
        %2518 = vmatprep.subr.mxu0 0.0
        %2519 = vmatpush1.msra.mxu0 0.0
        %2520 = vmatprep.subr.mxu0 0.0
        %2521 = vmatpush1.msra.mxu0 0.0
        %2522 = vmatprep.subr.mxu0 0.0
        %2523 = vmatpush1.msra.mxu0 0.0
        %2524 = vmatprep.subr.mxu0 0.0
        %2525 = vmatpush1.msra.mxu0 0.0
        %2526 = vmatprep.subr.mxu0 0.0
        %2527 = vmatpush1.msra.mxu0 0.0
        %2528 = vmatprep.subr.mxu0 0.0
        %2529 = vmatpush1.msra.mxu0 0.0
        %2530 = vmatprep.subr.mxu0 0.0
        %2531 = vmatpush1.msra.mxu0 0.0
        %2532 = vmatprep.subr.mxu0 0.0
        %2533 = vmatpush1.msra.mxu0 0.0
        %2534 = vmatprep.subr.mxu0 0.0
        %2535 = vmatpush1.msra.mxu0 0.0
        %2536 = vmatprep.subr.mxu0 0.0
        %2537 = vmatpush1.msra.mxu0 0.0
        %2538 = vmatprep.subr.mxu0 0.0
        %2539 = vmatpush1.msra.mxu0 0.0
        %2540 = vmatprep.subr.mxu0 0.0
        %2541 = vmatpush1.msra.mxu0 0.0
        %2542 = vmatprep.subr.mxu0 0.0
        %2543 = vmatpush1.msra.mxu0 0.0
        %2544 = vmatprep.subr.mxu0 0.0
        %2545 = vmatpush1.msra.mxu0 0.0
        %2546 = vmatprep.subr.mxu0 0.0
        %2547 = vmatpush1.msra.mxu0 0.0
        %2548 = vmatprep.subr.mxu0 0.0
        %2549 = vmatpush1.msra.mxu0 0.0
        %2550 = vmatprep.subr.mxu0 0.0
        %2551 = vmatpush1.msra.mxu0 0.0
        %2552 = vmatprep.subr.mxu0 0.0
        %2553 = vmatpush1.msra.mxu0 0.0
        %2554 = vmatprep.subr.mxu0 0.0
        %2555 = vmatpush1.msra.mxu0 0.0
        %2556 = vmatprep.subr.mxu0 0.0
        %2557 = vmatpush1.msra.mxu0 0.0
        %2558 = vmatprep.subr.mxu0 0.0
        %2559 = vmatpush1.msra.mxu0 0.0
        %2560 = vmatprep.subr.mxu0 0.0
        %2561 = vmatpush1.msra.mxu0 0.0
        %2562 = vmatprep.subr.mxu0 0.0
        %2563 = vmatpush1.msra.mxu0 0.0
        %2564 = vmatprep.subr.mxu0 0.0
        %2565 = vmatpush1.msra.mxu0 0.0
        %2566 = vmatprep.subr.mxu0 0.0
        %2567 = vmatpush1.msra.mxu0 0.0
        %2568 = vmatprep.mubr.f32.mxu0 0.0
        %2569 = vmatmul.mubr.f32.gmra.mrb[0].mxu0 %v2493
        %v2570 = vpop.f32.mrb[0].mxu0
        %v2571 = vadd.f32 0.0, %v2570
        %v2572 = vpop.f32.mrb[0].mxu0
        %2573 = vmatprep.mubr.f32.mxu0 0.0
        %2574 = vmatmul.mubr.f32.gmra.mrb[0].mxu0 %v2496
        %v2575 = vpop.f32.mrb[0].mxu0
        %v2576 = vadd.f32 0.0, %v2575
        %v2577 = vpop.f32.mrb[0].mxu0
        %2578 = vmatprep.mubr.f32.mxu0 0.0
        %2579 = vmatmul.mubr.f32.gmra.mrb[0].mxu0 %v2499
        %v2580 = vpop.f32.mrb[0].mxu0
        %v2581 = vadd.f32 0.0, %v2580
        %v2582 = vpop.f32.mrb[0].mxu0
        %2583 = vmatprep.mubr.f32.mxu0 0.0
        %2584 = vmatmul.mubr.f32.gmra.mrb[0].mxu0 %v2502
        %v2585 = vpop.f32.mrb[0].mxu0
        %v2586 = vadd.f32 0.0, %v2585
        %v2587 = vpop.f32.mrb[0].mxu0
        %2588 = vdwg.mxu0
        %2589 = vrot.lane.b32.xlu0 %v982, 96
        %v2590 = vpop.permute.xlu0 %2589
        %v2591 = vsel %vm1962, %v2590, 0
        %2593 = vmatprep.subr.mxu0 0.0
        %2594 = vmatpush1.msra.mxu0 %v2571
        %2595 = vmatprep.subr.mxu0 0.0
        %2596 = vmatpush1.msra.mxu0 %v2576
        %2597 = vmatprep.subr.mxu0 0.0
        %2598 = vmatpush1.msra.mxu0 0.0
        %2599 = vmatprep.subr.mxu0 0.0
        %2600 = vmatpush1.msra.mxu0 0.0
        %2601 = vmatprep.subr.mxu0 0.0
        %2602 = vmatpush1.msra.mxu0 0.0
        %2603 = vmatprep.subr.mxu0 0.0
        %2604 = vmatpush1.msra.mxu0 0.0
        %2605 = vmatprep.subr.mxu0 0.0
        %2606 = vmatpush1.msra.mxu0 0.0
        %2607 = vmatprep.subr.mxu0 0.0
        %2608 = vmatpush1.msra.mxu0 0.0
        %2609 = vmatprep.subr.mxu0 0.0
        %2610 = vmatpush1.msra.mxu0 0.0
        %2611 = vmatprep.subr.mxu0 0.0
        %2612 = vmatpush1.msra.mxu0 0.0
        %2613 = vmatprep.subr.mxu0 0.0
        %2614 = vmatpush1.msra.mxu0 0.0
        %2615 = vmatprep.subr.mxu0 0.0
        %2616 = vmatpush1.msra.mxu0 0.0
        %2617 = vmatprep.subr.mxu0 0.0
        %2618 = vmatpush1.msra.mxu0 0.0
        %2619 = vmatprep.subr.mxu0 0.0
        %2620 = vmatpush1.msra.mxu0 0.0
        %2621 = vmatprep.subr.mxu0 0.0
        %2622 = vmatpush1.msra.mxu0 0.0
        %2623 = vmatprep.subr.mxu0 0.0
        %2624 = vmatpush1.msra.mxu0 0.0
        %2625 = vmatprep.subr.mxu0 0.0
        %2626 = vmatpush1.msra.mxu0 0.0
        %2627 = vmatprep.subr.mxu0 0.0
        %2628 = vmatpush1.msra.mxu0 0.0
        %2629 = vmatprep.subr.mxu0 0.0
        %2630 = vmatpush1.msra.mxu0 0.0
        %2631 = vmatprep.subr.mxu0 0.0
        %2632 = vmatpush1.msra.mxu0 0.0
        %2633 = vmatprep.subr.mxu0 0.0
        %2634 = vmatpush1.msra.mxu0 0.0
        %2635 = vmatprep.subr.mxu0 0.0
        %2636 = vmatpush1.msra.mxu0 0.0
        %2637 = vmatprep.subr.mxu0 0.0
        %2638 = vmatpush1.msra.mxu0 0.0
        %2639 = vmatprep.subr.mxu0 0.0
        %2640 = vmatpush1.msra.mxu0 0.0
        %2641 = vmatprep.subr.mxu0 0.0
        %2642 = vmatpush1.msra.mxu0 0.0
        %2643 = vmatprep.subr.mxu0 0.0
        %2644 = vmatpush1.msra.mxu0 0.0
        %2645 = vmatprep.subr.mxu0 0.0
        %2646 = vmatpush1.msra.mxu0 0.0
        %2647 = vmatprep.subr.mxu0 0.0
        %2648 = vmatpush1.msra.mxu0 0.0
        %2649 = vmatprep.subr.mxu0 0.0
        %2650 = vmatpush1.msra.mxu0 0.0
        %2651 = vmatprep.subr.mxu0 0.0
        %2652 = vmatpush1.msra.mxu0 0.0
        %2653 = vmatprep.subr.mxu0 0.0
        %2654 = vmatpush1.msra.mxu0 0.0
        %2655 = vmatprep.subr.mxu0 0.0
        %2656 = vmatpush1.msra.mxu0 0.0
        %2657 = vmatprep.mubr.f32.mxu0 0.0
        %2658 = vmatmul.mubr.f32.gmra.mrb[0].mxu0 %v2591
        %v2659 = vpop.f32.mrb[0].mxu0
        %v2660 = vadd.f32 0.0, %v2659
        %v2661 = vpop.f32.mrb[0].mxu0
        %2662 = vdwg.mxu0
        %2663 = vrot.lane.b32.xlu0 %v1085, 96
        %v2664 = vpop.permute.xlu0 %2663
        %v2665 = vsel %vm1962, %v2664, 0
        %2667 = vmatprep.subr.mxu0 0.0
        %2668 = vmatpush1.msra.mxu0 %v2581
        %2669 = vmatprep.subr.mxu0 0.0
        %2670 = vmatpush1.msra.mxu0 %v2586
        %2671 = vmatprep.subr.mxu0 0.0
        %2672 = vmatpush1.msra.mxu0 0.0
        %2673 = vmatprep.subr.mxu0 0.0
        %2674 = vmatpush1.msra.mxu0 0.0
        %2675 = vmatprep.subr.mxu0 0.0
        %2676 = vmatpush1.msra.mxu0 0.0
        %2677 = vmatprep.subr.mxu0 0.0
        %2678 = vmatpush1.msra.mxu0 0.0
        %2679 = vmatprep.subr.mxu0 0.0
        %2680 = vmatpush1.msra.mxu0 0.0
        %2681 = vmatprep.subr.mxu0 0.0
        %2682 = vmatpush1.msra.mxu0 0.0
        %2683 = vmatprep.subr.mxu0 0.0
        %2684 = vmatpush1.msra.mxu0 0.0
        %2685 = vmatprep.subr.mxu0 0.0
        %2686 = vmatpush1.msra.mxu0 0.0
        %2687 = vmatprep.subr.mxu0 0.0
        %2688 = vmatpush1.msra.mxu0 0.0
        %2689 = vmatprep.subr.mxu0 0.0
        %2690 = vmatpush1.msra.mxu0 0.0
        %2691 = vmatprep.subr.mxu0 0.0
        %2692 = vmatpush1.msra.mxu0 0.0
        %2693 = vmatprep.subr.mxu0 0.0
        %2694 = vmatpush1.msra.mxu0 0.0
        %2695 = vmatprep.subr.mxu0 0.0
        %2696 = vmatpush1.msra.mxu0 0.0
        %2697 = vmatprep.subr.mxu0 0.0
        %2698 = vmatpush1.msra.mxu0 0.0
        %2699 = vmatprep.subr.mxu0 0.0
        %2700 = vmatpush1.msra.mxu0 0.0
        %2701 = vmatprep.subr.mxu0 0.0
        %2702 = vmatpush1.msra.mxu0 0.0
        %2703 = vmatprep.subr.mxu0 0.0
        %2704 = vmatpush1.msra.mxu0 0.0
        %2705 = vmatprep.subr.mxu0 0.0
        %2706 = vmatpush1.msra.mxu0 0.0
        %2707 = vmatprep.subr.mxu0 0.0
        %2708 = vmatpush1.msra.mxu0 0.0
        %2709 = vmatprep.subr.mxu0 0.0
        %2710 = vmatpush1.msra.mxu0 0.0
        %2711 = vmatprep.subr.mxu0 0.0
        %2712 = vmatpush1.msra.mxu0 0.0
        %2713 = vmatprep.subr.mxu0 0.0
        %2714 = vmatpush1.msra.mxu0 0.0
        %2715 = vmatprep.subr.mxu0 0.0
        %2716 = vmatpush1.msra.mxu0 0.0
        %2717 = vmatprep.subr.mxu0 0.0
        %2718 = vmatpush1.msra.mxu0 0.0
        %2719 = vmatprep.subr.mxu0 0.0
        %2720 = vmatpush1.msra.mxu0 0.0
        %2721 = vmatprep.subr.mxu0 0.0
        %2722 = vmatpush1.msra.mxu0 0.0
        %2723 = vmatprep.subr.mxu0 0.0
        %2724 = vmatpush1.msra.mxu0 0.0
        %2725 = vmatprep.subr.mxu0 0.0
        %2726 = vmatpush1.msra.mxu0 0.0
        %2727 = vmatprep.subr.mxu0 0.0
        %2728 = vmatpush1.msra.mxu0 0.0
        %2729 = vmatprep.subr.mxu0 0.0
        %2730 = vmatpush1.msra.mxu0 0.0
        %2731 = vmatprep.mubr.f32.mxu0 0.0
        %2732 = vmatmul.mubr.f32.gmra.mrb[0].mxu0 %v2665
        %v2733 = vpop.f32.mrb[0].mxu0
        %v2734 = vadd.f32 0.0, %v2733
        %v2735 = vpop.f32.mrb[0].mxu0
        %2736 = vdwg.mxu0
        %v2737 = vadd.f32 %v2179, %v2660
        %v2738 = vadd.f32 %v2251, %v2734
        %2739 = vrot.lane.b32.xlu0 %v1188, 80
        %v2740 = vpop.permute.xlu0 %2739
        %2742 = vxpose.xlu0.b32.start [1/16] %v2740, 128
        %2743 = vxpose.xlu0.b32.cont [2/16] 0.0, 128
        %2744 = vxpose.xlu0.b32.cont [3/16] 0.0, 128
        %2745 = vxpose.xlu0.b32.cont [4/16] 0.0, 128
        %2746 = vxpose.xlu0.b32.cont [5/16] 0.0, 128
        %2747 = vxpose.xlu0.b32.cont [6/16] 0.0, 128
        %2748 = vxpose.xlu0.b32.cont [7/16] 0.0, 128
        %2749 = vxpose.xlu0.b32.cont [8/16] 0.0, 128
        %2750 = vxpose.xlu0.b32.cont [9/16] 0.0, 128
        %2751 = vxpose.xlu0.b32.cont [10/16] 0.0, 128
        %2752 = vxpose.xlu0.b32.cont [11/16] 0.0, 128
        %2753 = vxpose.xlu0.b32.cont [12/16] 0.0, 128
        %2754 = vxpose.xlu0.b32.cont [13/16] 0.0, 128
        %2755 = vxpose.xlu0.b32.cont [14/16] 0.0, 128
        %2756 = vxpose.xlu0.b32.cont [15/16] 0.0, 128
        %2757 = vxpose.xlu0.b32.end [16/16] 0.0, 128
        %v2758 = vpop.trf.xlu0
        %v2759 = vpop.trf.xlu0
        %v2760 = vpop.trf.xlu0
        %v2761 = vpop.trf.xlu0
        %v2762 = vpop.trf.xlu0
        %v2763 = vpop.trf.xlu0
        %v2764 = vpop.trf.xlu0
        %v2765 = vpop.trf.xlu0
        %v2766 = vpop.trf.xlu0
        %v2767 = vpop.trf.xlu0
        %v2768 = vpop.trf.xlu0
        %v2769 = vpop.trf.xlu0
        %v2770 = vpop.trf.xlu0
        %v2771 = vpop.trf.xlu0
        %v2772 = vpop.trf.xlu0
        %v2773 = vpop.trf.xlu0
        %2774 = vrot.lane.b32.xlu0 %v872, 104
        %v2775 = vpop.permute.xlu0 %2774
        %v2778 = vsel %vm1328, %v2758, 0
        %v2781 = vsel %vm1328, %v2759, 0
        %2783 = vmatprep.subr.mxu0 0.0
        %2784 = vmatpush1.msra.mxu0 %v2775
        %2785 = vmatprep.subr.mxu0 0.0
        %2786 = vmatpush1.msra.mxu0 0.0
        %2787 = vmatprep.subr.mxu0 0.0
        %2788 = vmatpush1.msra.mxu0 0.0
        %2789 = vmatprep.subr.mxu0 0.0
        %2790 = vmatpush1.msra.mxu0 0.0
        %2791 = vmatprep.subr.mxu0 0.0
        %2792 = vmatpush1.msra.mxu0 0.0
        %2793 = vmatprep.subr.mxu0 0.0
        %2794 = vmatpush1.msra.mxu0 0.0
        %2795 = vmatprep.subr.mxu0 0.0
        %2796 = vmatpush1.msra.mxu0 0.0
        %2797 = vmatprep.subr.mxu0 0.0
        %2798 = vmatpush1.msra.mxu0 0.0
        %2799 = vmatprep.subr.mxu0 0.0
        %2800 = vmatpush1.msra.mxu0 0.0
        %2801 = vmatprep.subr.mxu0 0.0
        %2802 = vmatpush1.msra.mxu0 0.0
        %2803 = vmatprep.subr.mxu0 0.0
        %2804 = vmatpush1.msra.mxu0 0.0
        %2805 = vmatprep.subr.mxu0 0.0
        %2806 = vmatpush1.msra.mxu0 0.0
        %2807 = vmatprep.subr.mxu0 0.0
        %2808 = vmatpush1.msra.mxu0 0.0
        %2809 = vmatprep.subr.mxu0 0.0
        %2810 = vmatpush1.msra.mxu0 0.0
        %2811 = vmatprep.subr.mxu0 0.0
        %2812 = vmatpush1.msra.mxu0 0.0
        %2813 = vmatprep.subr.mxu0 0.0
        %2814 = vmatpush1.msra.mxu0 0.0
        %2815 = vmatprep.subr.mxu0 0.0
        %2816 = vmatpush1.msra.mxu0 0.0
        %2817 = vmatprep.subr.mxu0 0.0
        %2818 = vmatpush1.msra.mxu0 0.0
        %2819 = vmatprep.subr.mxu0 0.0
        %2820 = vmatpush1.msra.mxu0 0.0
        %2821 = vmatprep.subr.mxu0 0.0
        %2822 = vmatpush1.msra.mxu0 0.0
        %2823 = vmatprep.subr.mxu0 0.0
        %2824 = vmatpush1.msra.mxu0 0.0
        %2825 = vmatprep.subr.mxu0 0.0
        %2826 = vmatpush1.msra.mxu0 0.0
        %2827 = vmatprep.subr.mxu0 0.0
        %2828 = vmatpush1.msra.mxu0 0.0
        %2829 = vmatprep.subr.mxu0 0.0
        %2830 = vmatpush1.msra.mxu0 0.0
        %2831 = vmatprep.subr.mxu0 0.0
        %2832 = vmatpush1.msra.mxu0 0.0
        %2833 = vmatprep.subr.mxu0 0.0
        %2834 = vmatpush1.msra.mxu0 0.0
        %2835 = vmatprep.subr.mxu0 0.0
        %2836 = vmatpush1.msra.mxu0 0.0
        %2837 = vmatprep.subr.mxu0 0.0
        %2838 = vmatpush1.msra.mxu0 0.0
        %2839 = vmatprep.subr.mxu0 0.0
        %2840 = vmatpush1.msra.mxu0 0.0
        %2841 = vmatprep.subr.mxu0 0.0
        %2842 = vmatpush1.msra.mxu0 0.0
        %2843 = vmatprep.subr.mxu0 0.0
        %2844 = vmatpush1.msra.mxu0 0.0
        %2845 = vmatprep.subr.mxu0 0.0
        %2846 = vmatpush1.msra.mxu0 0.0
        %2847 = vmatprep.mubr.f32.mxu0 0.0
        %2848 = vmatmul.mubr.f32.gmra.mrb[0].mxu0 %v2778
        %v2849 = vpop.f32.mrb[0].mxu0
        %v2850 = vadd.f32 0.0, %v2849
        %v2851 = vpop.f32.mrb[0].mxu0
        %2852 = vmatprep.mubr.f32.mxu0 0.0
        %2853 = vmatmul.mubr.f32.gmra.mrb[0].mxu0 %v2781
        %v2854 = vpop.f32.mrb[0].mxu0
        %v2855 = vadd.f32 0.0, %v2854
        %v2856 = vpop.f32.mrb[0].mxu0
        %2857 = vdwg.mxu0
        %2858 = vrot.lane.b32.xlu0 %v1291, 80
        %v2859 = vpop.permute.xlu0 %2858
        %2861 = vxpose.xlu0.b32.start [1/16] %v2859, 128
        %2862 = vxpose.xlu0.b32.cont [2/16] 0.0, 128
        %2863 = vxpose.xlu0.b32.cont [3/16] 0.0, 128
        %2864 = vxpose.xlu0.b32.cont [4/16] 0.0, 128
        %2865 = vxpose.xlu0.b32.cont [5/16] 0.0, 128
        %2866 = vxpose.xlu0.b32.cont [6/16] 0.0, 128
        %2867 = vxpose.xlu0.b32.cont [7/16] 0.0, 128
        %2868 = vxpose.xlu0.b32.cont [8/16] 0.0, 128
        %2869 = vxpose.xlu0.b32.cont [9/16] 0.0, 128
        %2870 = vxpose.xlu0.b32.cont [10/16] 0.0, 128
        %2871 = vxpose.xlu0.b32.cont [11/16] 0.0, 128
        %2872 = vxpose.xlu0.b32.cont [12/16] 0.0, 128
        %2873 = vxpose.xlu0.b32.cont [13/16] 0.0, 128
        %2874 = vxpose.xlu0.b32.cont [14/16] 0.0, 128
        %2875 = vxpose.xlu0.b32.cont [15/16] 0.0, 128
        %2876 = vxpose.xlu0.b32.end [16/16] 0.0, 128
        %v2877 = vpop.trf.xlu0
        %v2878 = vpop.trf.xlu0
        %v2879 = vpop.trf.xlu0
        %v2880 = vpop.trf.xlu0
        %v2881 = vpop.trf.xlu0
        %v2882 = vpop.trf.xlu0
        %v2883 = vpop.trf.xlu0
        %v2884 = vpop.trf.xlu0
        %v2885 = vpop.trf.xlu0
        %v2886 = vpop.trf.xlu0
        %v2887 = vpop.trf.xlu0
        %v2888 = vpop.trf.xlu0
        %v2889 = vpop.trf.xlu0
        %v2890 = vpop.trf.xlu0
        %v2891 = vpop.trf.xlu0
        %v2892 = vpop.trf.xlu0
        %2893 = vrot.lane.b32.xlu0 %v877, 104
        %v2894 = vpop.permute.xlu0 %2893
        %v2897 = vsel %vm1328, %v2877, 0
        %v2900 = vsel %vm1328, %v2878, 0
        %2902 = vmatprep.subr.mxu0 0.0
        %2903 = vmatpush1.msra.mxu0 %v2894
        %2904 = vmatprep.subr.mxu0 0.0
        %2905 = vmatpush1.msra.mxu0 0.0
        %2906 = vmatprep.subr.mxu0 0.0
        %2907 = vmatpush1.msra.mxu0 0.0
        %2908 = vmatprep.subr.mxu0 0.0
        %2909 = vmatpush1.msra.mxu0 0.0
        %2910 = vmatprep.subr.mxu0 0.0
        %2911 = vmatpush1.msra.mxu0 0.0
        %2912 = vmatprep.subr.mxu0 0.0
        %2913 = vmatpush1.msra.mxu0 0.0
        %2914 = vmatprep.subr.mxu0 0.0
        %2915 = vmatpush1.msra.mxu0 0.0
        %2916 = vmatprep.subr.mxu0 0.0
        %2917 = vmatpush1.msra.mxu0 0.0
        %2918 = vmatprep.subr.mxu0 0.0
        %2919 = vmatpush1.msra.mxu0 0.0
        %2920 = vmatprep.subr.mxu0 0.0
        %2921 = vmatpush1.msra.mxu0 0.0
        %2922 = vmatprep.subr.mxu0 0.0
        %2923 = vmatpush1.msra.mxu0 0.0
        %2924 = vmatprep.subr.mxu0 0.0
        %2925 = vmatpush1.msra.mxu0 0.0
        %2926 = vmatprep.subr.mxu0 0.0
        %2927 = vmatpush1.msra.mxu0 0.0
        %2928 = vmatprep.subr.mxu0 0.0
        %2929 = vmatpush1.msra.mxu0 0.0
        %2930 = vmatprep.subr.mxu0 0.0
        %2931 = vmatpush1.msra.mxu0 0.0
        %2932 = vmatprep.subr.mxu0 0.0
        %2933 = vmatpush1.msra.mxu0 0.0
        %2934 = vmatprep.subr.mxu0 0.0
        %2935 = vmatpush1.msra.mxu0 0.0
        %2936 = vmatprep.subr.mxu0 0.0
        %2937 = vmatpush1.msra.mxu0 0.0
        %2938 = vmatprep.subr.mxu0 0.0
        %2939 = vmatpush1.msra.mxu0 0.0
        %2940 = vmatprep.subr.mxu0 0.0
        %2941 = vmatpush1.msra.mxu0 0.0
        %2942 = vmatprep.subr.mxu0 0.0
        %2943 = vmatpush1.msra.mxu0 0.0
        %2944 = vmatprep.subr.mxu0 0.0
        %2945 = vmatpush1.msra.mxu0 0.0
        %2946 = vmatprep.subr.mxu0 0.0
        %2947 = vmatpush1.msra.mxu0 0.0
        %2948 = vmatprep.subr.mxu0 0.0
        %2949 = vmatpush1.msra.mxu0 0.0
        %2950 = vmatprep.subr.mxu0 0.0
        %2951 = vmatpush1.msra.mxu0 0.0
        %2952 = vmatprep.subr.mxu0 0.0
        %2953 = vmatpush1.msra.mxu0 0.0
        %2954 = vmatprep.subr.mxu0 0.0
        %2955 = vmatpush1.msra.mxu0 0.0
        %2956 = vmatprep.subr.mxu0 0.0
        %2957 = vmatpush1.msra.mxu0 0.0
        %2958 = vmatprep.subr.mxu0 0.0
        %2959 = vmatpush1.msra.mxu0 0.0
        %2960 = vmatprep.subr.mxu0 0.0
        %2961 = vmatpush1.msra.mxu0 0.0
        %2962 = vmatprep.subr.mxu0 0.0
        %2963 = vmatpush1.msra.mxu0 0.0
        %2964 = vmatprep.subr.mxu0 0.0
        %2965 = vmatpush1.msra.mxu0 0.0
        %2966 = vmatprep.mubr.f32.mxu0 0.0
        %2967 = vmatmul.mubr.f32.gmra.mrb[0].mxu0 %v2897
        %v2968 = vpop.f32.mrb[0].mxu0
        %v2969 = vadd.f32 0.0, %v2968
        %v2970 = vpop.f32.mrb[0].mxu0
        %2971 = vmatprep.mubr.f32.mxu0 0.0
        %2972 = vmatmul.mubr.f32.gmra.mrb[0].mxu0 %v2900
        %v2973 = vpop.f32.mrb[0].mxu0
        %v2974 = vadd.f32 0.0, %v2973
        %v2975 = vpop.f32.mrb[0].mxu0
        %2976 = vdwg.mxu0
        %v2978 = vsel %vm1328, %v2850, 0
        %v2981 = vsel %vm1328, %v2855, 0
        %v2984 = vsel %vm1328, %v2969, 0
        %v2987 = vsel %vm1328, %v2974, 0
        %2989 = vmatprep.subr.mxu0 0.0
        %2990 = vmatpush1.msra.mxu0 %v1295
        %2991 = vmatprep.subr.mxu0 0.0
        %2992 = vmatpush1.msra.mxu0 0.0
        %2993 = vmatprep.subr.mxu0 0.0
        %2994 = vmatpush1.msra.mxu0 0.0
        %2995 = vmatprep.subr.mxu0 0.0
        %2996 = vmatpush1.msra.mxu0 0.0
        %2997 = vmatprep.subr.mxu0 0.0
        %2998 = vmatpush1.msra.mxu0 0.0
        %2999 = vmatprep.subr.mxu0 0.0
        %3000 = vmatpush1.msra.mxu0 0.0
        %3001 = vmatprep.subr.mxu0 0.0
        %3002 = vmatpush1.msra.mxu0 0.0
        %3003 = vmatprep.subr.mxu0 0.0
        %3004 = vmatpush1.msra.mxu0 0.0
        %3005 = vmatprep.subr.mxu0 0.0
        %3006 = vmatpush1.msra.mxu0 0.0
        %3007 = vmatprep.subr.mxu0 0.0
        %3008 = vmatpush1.msra.mxu0 0.0
        %3009 = vmatprep.subr.mxu0 0.0
        %3010 = vmatpush1.msra.mxu0 0.0
        %3011 = vmatprep.subr.mxu0 0.0
        %3012 = vmatpush1.msra.mxu0 0.0
        %3013 = vmatprep.subr.mxu0 0.0
        %3014 = vmatpush1.msra.mxu0 0.0
        %3015 = vmatprep.subr.mxu0 0.0
        %3016 = vmatpush1.msra.mxu0 0.0
        %3017 = vmatprep.subr.mxu0 0.0
        %3018 = vmatpush1.msra.mxu0 0.0
        %3019 = vmatprep.subr.mxu0 0.0
        %3020 = vmatpush1.msra.mxu0 0.0
        %3021 = vmatprep.subr.mxu0 0.0
        %3022 = vmatpush1.msra.mxu0 0.0
        %3023 = vmatprep.subr.mxu0 0.0
        %3024 = vmatpush1.msra.mxu0 0.0
        %3025 = vmatprep.subr.mxu0 0.0
        %3026 = vmatpush1.msra.mxu0 0.0
        %3027 = vmatprep.subr.mxu0 0.0
        %3028 = vmatpush1.msra.mxu0 0.0
        %3029 = vmatprep.subr.mxu0 0.0
        %3030 = vmatpush1.msra.mxu0 0.0
        %3031 = vmatprep.subr.mxu0 0.0
        %3032 = vmatpush1.msra.mxu0 0.0
        %3033 = vmatprep.subr.mxu0 0.0
        %3034 = vmatpush1.msra.mxu0 0.0
        %3035 = vmatprep.subr.mxu0 0.0
        %3036 = vmatpush1.msra.mxu0 0.0
        %3037 = vmatprep.subr.mxu0 0.0
        %3038 = vmatpush1.msra.mxu0 0.0
        %3039 = vmatprep.subr.mxu0 0.0
        %3040 = vmatpush1.msra.mxu0 0.0
        %3041 = vmatprep.subr.mxu0 0.0
        %3042 = vmatpush1.msra.mxu0 0.0
        %3043 = vmatprep.subr.mxu0 0.0
        %3044 = vmatpush1.msra.mxu0 0.0
        %3045 = vmatprep.subr.mxu0 0.0
        %3046 = vmatpush1.msra.mxu0 0.0
        %3047 = vmatprep.subr.mxu0 0.0
        %3048 = vmatpush1.msra.mxu0 0.0
        %3049 = vmatprep.subr.mxu0 0.0
        %3050 = vmatpush1.msra.mxu0 0.0
        %3051 = vmatprep.subr.mxu0 0.0
        %3052 = vmatpush1.msra.mxu0 0.0
        %3053 = vmatprep.mubr.f32.mxu0 0.0
        %3054 = vmatmul.mubr.f32.gmra.mrb[0].mxu0 %v2978
        %v3055 = vpop.f32.mrb[0].mxu0
        %v3056 = vadd.f32 0.0, %v3055
        %v3057 = vpop.f32.mrb[0].mxu0
        %3058 = vmatprep.mubr.f32.mxu0 0.0
        %3059 = vmatmul.mubr.f32.gmra.mrb[0].mxu0 %v2981
        %v3060 = vpop.f32.mrb[0].mxu0
        %v3061 = vadd.f32 0.0, %v3060
        %v3062 = vpop.f32.mrb[0].mxu0
        %3063 = vmatprep.mubr.f32.mxu0 0.0
        %3064 = vmatmul.mubr.f32.gmra.mrb[0].mxu0 %v2984
        %v3065 = vpop.f32.mrb[0].mxu0
        %v3066 = vadd.f32 0.0, %v3065
        %v3067 = vpop.f32.mrb[0].mxu0
        %3068 = vmatprep.mubr.f32.mxu0 0.0
        %3069 = vmatmul.mubr.f32.gmra.mrb[0].mxu0 %v2987
        %v3070 = vpop.f32.mrb[0].mxu0
        %v3071 = vadd.f32 0.0, %v3070
        %v3072 = vpop.f32.mrb[0].mxu0
        %3073 = vdwg.mxu0
        %3074 = vrot.lane.b32.xlu0 %v982, 80
        %v3075 = vpop.permute.xlu0 %3074
        %v3076 = vsel %vm1962, %v3075, 0
        %3078 = vmatprep.subr.mxu0 0.0
        %3079 = vmatpush1.msra.mxu0 %v3056
        %3080 = vmatprep.subr.mxu0 0.0
        %3081 = vmatpush1.msra.mxu0 %v3061
        %3082 = vmatprep.subr.mxu0 0.0
        %3083 = vmatpush1.msra.mxu0 0.0
        %3084 = vmatprep.subr.mxu0 0.0
        %3085 = vmatpush1.msra.mxu0 0.0
        %3086 = vmatprep.subr.mxu0 0.0
        %3087 = vmatpush1.msra.mxu0 0.0
        %3088 = vmatprep.subr.mxu0 0.0
        %3089 = vmatpush1.msra.mxu0 0.0
        %3090 = vmatprep.subr.mxu0 0.0
        %3091 = vmatpush1.msra.mxu0 0.0
        %3092 = vmatprep.subr.mxu0 0.0
        %3093 = vmatpush1.msra.mxu0 0.0
        %3094 = vmatprep.subr.mxu0 0.0
        %3095 = vmatpush1.msra.mxu0 0.0
        %3096 = vmatprep.subr.mxu0 0.0
        %3097 = vmatpush1.msra.mxu0 0.0
        %3098 = vmatprep.subr.mxu0 0.0
        %3099 = vmatpush1.msra.mxu0 0.0
        %3100 = vmatprep.subr.mxu0 0.0
        %3101 = vmatpush1.msra.mxu0 0.0
        %3102 = vmatprep.subr.mxu0 0.0
        %3103 = vmatpush1.msra.mxu0 0.0
        %3104 = vmatprep.subr.mxu0 0.0
        %3105 = vmatpush1.msra.mxu0 0.0
        %3106 = vmatprep.subr.mxu0 0.0
        %3107 = vmatpush1.msra.mxu0 0.0
        %3108 = vmatprep.subr.mxu0 0.0
        %3109 = vmatpush1.msra.mxu0 0.0
        %3110 = vmatprep.subr.mxu0 0.0
        %3111 = vmatpush1.msra.mxu0 0.0
        %3112 = vmatprep.subr.mxu0 0.0
        %3113 = vmatpush1.msra.mxu0 0.0
        %3114 = vmatprep.subr.mxu0 0.0
        %3115 = vmatpush1.msra.mxu0 0.0
        %3116 = vmatprep.subr.mxu0 0.0
        %3117 = vmatpush1.msra.mxu0 0.0
        %3118 = vmatprep.subr.mxu0 0.0
        %3119 = vmatpush1.msra.mxu0 0.0
        %3120 = vmatprep.subr.mxu0 0.0
        %3121 = vmatpush1.msra.mxu0 0.0
        %3122 = vmatprep.subr.mxu0 0.0
        %3123 = vmatpush1.msra.mxu0 0.0
        %3124 = vmatprep.subr.mxu0 0.0
        %3125 = vmatpush1.msra.mxu0 0.0
        %3126 = vmatprep.subr.mxu0 0.0
        %3127 = vmatpush1.msra.mxu0 0.0
        %3128 = vmatprep.subr.mxu0 0.0
        %3129 = vmatpush1.msra.mxu0 0.0
        %3130 = vmatprep.subr.mxu0 0.0
        %3131 = vmatpush1.msra.mxu0 0.0
        %3132 = vmatprep.subr.mxu0 0.0
        %3133 = vmatpush1.msra.mxu0 0.0
        %3134 = vmatprep.subr.mxu0 0.0
        %3135 = vmatpush1.msra.mxu0 0.0
        %3136 = vmatprep.subr.mxu0 0.0
        %3137 = vmatpush1.msra.mxu0 0.0
        %3138 = vmatprep.subr.mxu0 0.0
        %3139 = vmatpush1.msra.mxu0 0.0
        %3140 = vmatprep.subr.mxu0 0.0
        %3141 = vmatpush1.msra.mxu0 0.0
        %3142 = vmatprep.mubr.f32.mxu0 0.0
        %3143 = vmatmul.mubr.f32.gmra.mrb[0].mxu0 %v3076
        %v3144 = vpop.f32.mrb[0].mxu0
        %v3145 = vadd.f32 0.0, %v3144
        %v3146 = vpop.f32.mrb[0].mxu0
        %3147 = vdwg.mxu0
        %3148 = vrot.lane.b32.xlu0 %v1085, 80
        %v3149 = vpop.permute.xlu0 %3148
        %v3150 = vsel %vm1962, %v3149, 0
        %3152 = vmatprep.subr.mxu0 0.0
        %3153 = vmatpush1.msra.mxu0 %v3066
        %3154 = vmatprep.subr.mxu0 0.0
        %3155 = vmatpush1.msra.mxu0 %v3071
        %3156 = vmatprep.subr.mxu0 0.0
        %3157 = vmatpush1.msra.mxu0 0.0
        %3158 = vmatprep.subr.mxu0 0.0
        %3159 = vmatpush1.msra.mxu0 0.0
        %3160 = vmatprep.subr.mxu0 0.0
        %3161 = vmatpush1.msra.mxu0 0.0
        %3162 = vmatprep.subr.mxu0 0.0
        %3163 = vmatpush1.msra.mxu0 0.0
        %3164 = vmatprep.subr.mxu0 0.0
        %3165 = vmatpush1.msra.mxu0 0.0
        %3166 = vmatprep.subr.mxu0 0.0
        %3167 = vmatpush1.msra.mxu0 0.0
        %3168 = vmatprep.subr.mxu0 0.0
        %3169 = vmatpush1.msra.mxu0 0.0
        %3170 = vmatprep.subr.mxu0 0.0
        %3171 = vmatpush1.msra.mxu0 0.0
        %3172 = vmatprep.subr.mxu0 0.0
        %3173 = vmatpush1.msra.mxu0 0.0
        %3174 = vmatprep.subr.mxu0 0.0
        %3175 = vmatpush1.msra.mxu0 0.0
        %3176 = vmatprep.subr.mxu0 0.0
        %3177 = vmatpush1.msra.mxu0 0.0
        %3178 = vmatprep.subr.mxu0 0.0
        %3179 = vmatpush1.msra.mxu0 0.0
        %3180 = vmatprep.subr.mxu0 0.0
        %3181 = vmatpush1.msra.mxu0 0.0
        %3182 = vmatprep.subr.mxu0 0.0
        %3183 = vmatpush1.msra.mxu0 0.0
        %3184 = vmatprep.subr.mxu0 0.0
        %3185 = vmatpush1.msra.mxu0 0.0
        %3186 = vmatprep.subr.mxu0 0.0
        %3187 = vmatpush1.msra.mxu0 0.0
        %3188 = vmatprep.subr.mxu0 0.0
        %3189 = vmatpush1.msra.mxu0 0.0
        %3190 = vmatprep.subr.mxu0 0.0
        %3191 = vmatpush1.msra.mxu0 0.0
        %3192 = vmatprep.subr.mxu0 0.0
        %3193 = vmatpush1.msra.mxu0 0.0
        %3194 = vmatprep.subr.mxu0 0.0
        %3195 = vmatpush1.msra.mxu0 0.0
        %3196 = vmatprep.subr.mxu0 0.0
        %3197 = vmatpush1.msra.mxu0 0.0
        %3198 = vmatprep.subr.mxu0 0.0
        %3199 = vmatpush1.msra.mxu0 0.0
        %3200 = vmatprep.subr.mxu0 0.0
        %3201 = vmatpush1.msra.mxu0 0.0
        %3202 = vmatprep.subr.mxu0 0.0
        %3203 = vmatpush1.msra.mxu0 0.0
        %3204 = vmatprep.subr.mxu0 0.0
        %3205 = vmatpush1.msra.mxu0 0.0
        %3206 = vmatprep.subr.mxu0 0.0
        %3207 = vmatpush1.msra.mxu0 0.0
        %3208 = vmatprep.subr.mxu0 0.0
        %3209 = vmatpush1.msra.mxu0 0.0
        %3210 = vmatprep.subr.mxu0 0.0
        %3211 = vmatpush1.msra.mxu0 0.0
        %3212 = vmatprep.subr.mxu0 0.0
        %3213 = vmatpush1.msra.mxu0 0.0
        %3214 = vmatprep.subr.mxu0 0.0
        %3215 = vmatpush1.msra.mxu0 0.0
        %3216 = vmatprep.mubr.f32.mxu0 0.0
        %3217 = vmatmul.mubr.f32.gmra.mrb[0].mxu0 %v3150
        %v3218 = vpop.f32.mrb[0].mxu0
        %v3219 = vadd.f32 0.0, %v3218
        %v3220 = vpop.f32.mrb[0].mxu0
        %3221 = vdwg.mxu0
        %v3222 = vadd.f32 %v2737, %v3145
        %v3223 = vadd.f32 %v2738, %v3219
        %v3224 = vld [vmem:[%s656] sm:$0x1]
        %v3226 = vlaneseq
        %v3227 = vshrl.u32 %v3226, 7
        %v3228 = vsub.s32 0, %v3227
        %v3229 = vrot.slane %v3224, %v3228
        %v3231 = vadd.f32 %v3222, %v3229
        %v3232 = vadd.f32 %v3223, %v3229
        %v3233 = vadd.f32 %v690, %v3231
        %v3234 = vadd.f32 %v691, %v3232
        %v3235 = vld [vmem:[%s659] sm:$0x1]
        %v3236 = vld [vmem:[%s662] sm:$0x1]
        %v3237 = vsel %vm721, %v3233, 0.0
        %3238 = vadd.xlane.f32.xlu0 %v3237
        %v3239 = vpop.xlane.xlu0 %3238
        %v3240 = vsel %vm721, %v3234, 0.0
        %3241 = vadd.xlane.f32.xlu0 %v3240
        %v3242 = vpop.xlane.xlu0 %3241
        %v3243 = vrcp.pop 32.0
        %v3244 = vmul.f32 %v3239, %v3243
        %v3245 = vmul.f32 %v3242, %v3243
        %v3246 = vmul.f32 %v3233, %v3233
        %v3247 = vmul.f32 %v3234, %v3234
        %v3248 = vsel %vm721, %v3246, 0.0
        %3249 = vadd.xlane.f32.xlu0 %v3248
        %v3250 = vpop.xlane.xlu0 %3249
        %v3251 = vsel %vm721, %v3247, 0.0
        %3252 = vadd.xlane.f32.xlu0 %v3251
        %v3253 = vpop.xlane.xlu0 %3252
        %v3254 = vmul.f32 %v3250, %v3243
        %v3255 = vmul.f32 %v3253, %v3243
        %v3256 = vmul.f32 %v3244, %v3244
        %v3257 = vmul.f32 %v3245, %v3245
        %v3258 = vsub.f32 %v3254, %v3256
        %v3259 = vsub.f32 %v3255, %v3257
        %v3260 = vsub.f32 %v3233, %v3244
        %v3261 = vsub.f32 %v3234, %v3245
        %v3262 = vadd.f32 %v3258, 1e-05
        %v3263 = vadd.f32 %v3259, 1e-05
        %v3264 = vrsqrt.pop %v3262
        %v3265 = vrsqrt.pop %v3263
        %v3266 = vmul.f32 %v3260, %v3264
        %v3267 = vmul.f32 %v3261, %v3265
        %v3269 = vlaneseq
        %v3270 = vshrl.u32 %v3269, 7
        %v3271 = vsub.s32 0, %v3270
        %v3272 = vrot.slane %v3235, %v3271
        %v3274 = vmul.f32 %v3266, %v3272
        %v3275 = vmul.f32 %v3267, %v3272
        %v3277 = vlaneseq
        %v3278 = vshrl.u32 %v3277, 7
        %v3279 = vsub.s32 0, %v3278
        %v3280 = vrot.slane %v3236, %v3279
        %v3282 = vadd.f32 %v3274, %v3280
        %v3283 = vadd.f32 %v3275, %v3280
        %v3284 = vld [vmem:[%s566] sm:$0xff]
        %v3285 = vld [vmem:[%s566 + $0x8] sm:$0xff]
        %v3286 = vld [vmem:[%s566 + $0x10] sm:$0xff]
        %v3287 = vld [vmem:[%s566 + $0x18] sm:$0xff]
        %v3288 = vld [vmem:[%s665] sm:$0x1]
        %v3290 = vlaneseq
        %v3291 = vshrl.u32 %v3290, 7
        %v3292 = vsub.s32 0, %v3291
        %v3293 = vrot.slane %v3288, %v3292
        %v3296 = vsel %vm721, %v3282, 0
        %v3299 = vsel %vm721, %v3283, 0
        %3301 = vmatprep.subr.mxu0 0.0
        %3302 = vmatpush1.msra.mxu0 %v3284
        %3303 = vmatprep.subr.mxu0 0.0
        %3304 = vmatpush1.msra.mxu0 %v3285
        %3305 = vmatprep.subr.mxu0 0.0
        %3306 = vmatpush1.msra.mxu0 %v3286
        %3307 = vmatprep.subr.mxu0 0.0
        %3308 = vmatpush1.msra.mxu0 %v3287
        %3309 = vmatprep.subr.mxu0 0.0
        %3310 = vmatpush1.msra.mxu0 0.0
        %3311 = vmatprep.subr.mxu0 0.0
        %3312 = vmatpush1.msra.mxu0 0.0
        %3313 = vmatprep.subr.mxu0 0.0
        %3314 = vmatpush1.msra.mxu0 0.0
        %3315 = vmatprep.subr.mxu0 0.0
        %3316 = vmatpush1.msra.mxu0 0.0
        %3317 = vmatprep.subr.mxu0 0.0
        %3318 = vmatpush1.msra.mxu0 0.0
        %3319 = vmatprep.subr.mxu0 0.0
        %3320 = vmatpush1.msra.mxu0 0.0
        %3321 = vmatprep.subr.mxu0 0.0
        %3322 = vmatpush1.msra.mxu0 0.0
        %3323 = vmatprep.subr.mxu0 0.0
        %3324 = vmatpush1.msra.mxu0 0.0
        %3325 = vmatprep.subr.mxu0 0.0
        %3326 = vmatpush1.msra.mxu0 0.0
        %3327 = vmatprep.subr.mxu0 0.0
        %3328 = vmatpush1.msra.mxu0 0.0
        %3329 = vmatprep.subr.mxu0 0.0
        %3330 = vmatpush1.msra.mxu0 0.0
        %3331 = vmatprep.subr.mxu0 0.0
        %3332 = vmatpush1.msra.mxu0 0.0
        %3333 = vmatprep.subr.mxu0 0.0
        %3334 = vmatpush1.msra.mxu0 0.0
        %3335 = vmatprep.subr.mxu0 0.0
        %3336 = vmatpush1.msra.mxu0 0.0
        %3337 = vmatprep.subr.mxu0 0.0
        %3338 = vmatpush1.msra.mxu0 0.0
        %3339 = vmatprep.subr.mxu0 0.0
        %3340 = vmatpush1.msra.mxu0 0.0
        %3341 = vmatprep.subr.mxu0 0.0
        %3342 = vmatpush1.msra.mxu0 0.0
        %3343 = vmatprep.subr.mxu0 0.0
        %3344 = vmatpush1.msra.mxu0 0.0
        %3345 = vmatprep.subr.mxu0 0.0
        %3346 = vmatpush1.msra.mxu0 0.0
        %3347 = vmatprep.subr.mxu0 0.0
        %3348 = vmatpush1.msra.mxu0 0.0
        %3349 = vmatprep.subr.mxu0 0.0
        %3350 = vmatpush1.msra.mxu0 0.0
        %3351 = vmatprep.subr.mxu0 0.0
        %3352 = vmatpush1.msra.mxu0 0.0
        %3353 = vmatprep.subr.mxu0 0.0
        %3354 = vmatpush1.msra.mxu0 0.0
        %3355 = vmatprep.subr.mxu0 0.0
        %3356 = vmatpush1.msra.mxu0 0.0
        %3357 = vmatprep.subr.mxu0 0.0
        %3358 = vmatpush1.msra.mxu0 0.0
        %3359 = vmatprep.subr.mxu0 0.0
        %3360 = vmatpush1.msra.mxu0 0.0
        %3361 = vmatprep.subr.mxu0 0.0
        %3362 = vmatpush1.msra.mxu0 0.0
        %3363 = vmatprep.subr.mxu0 0.0
        %3364 = vmatpush1.msra.mxu0 0.0
        %3365 = vmatprep.mubr.f32.mxu0 0.0
        %3366 = vmatmul.mubr.f32.gmra.mrb[0].mxu0 %v3296
        %v3367 = vpop.f32.mrb[0].mxu0
        %v3368 = vadd.f32 %v3293, %v3367
        %v3369 = vpop.f32.mrb[0].mxu0
        %3370 = vmatprep.mubr.f32.mxu0 0.0
        %3371 = vmatmul.mubr.f32.gmra.mrb[0].mxu0 %v3299
        %v3372 = vpop.f32.mrb[0].mxu0
        %v3373 = vadd.f32 %v3293, %v3372
        %v3374 = vpop.f32.mrb[0].mxu0
        %3375 = vdwg.mxu0
        %v3376 = vmul.f32 %v3368, 0.5
        %v3377 = vmul.f32 %v3373, 0.5
        %v3378 = vmul.f32 %v3368, 0.70710677
        %v3379 = vmul.f32 %v3373, 0.70710677
        %v3380 = verf.f32.pop %v3378
        %v3381 = verf.f32.pop %v3379
        %v3382 = vadd.f32 %v3380, 1.0
        %v3383 = vadd.f32 %v3381, 1.0
        %v3384 = vmul.f32 %v3376, %v3382
        %v3385 = vmul.f32 %v3377, %v3383
        %v3386 = vld [vmem:[%s670] sm:$0xff]
        %v3387 = vld [vmem:[%s670 + $0x8] sm:$0xff]
        %v3388 = vld [vmem:[%s670 + $0x10] sm:$0xff]
        %v3389 = vld [vmem:[%s670 + $0x18] sm:$0xff]
        %v3390 = vld [vmem:[%s670 + $0x20] sm:$0xff]
        %v3391 = vld [vmem:[%s670 + $0x28] sm:$0xff]
        %v3392 = vld [vmem:[%s670 + $0x30] sm:$0xff]
        %v3393 = vld [vmem:[%s670 + $0x38] sm:$0xff]
        %v3394 = vld [vmem:[%s673] sm:$0x1]
        %v3396 = vlaneseq
        %v3397 = vshrl.u32 %v3396, 7
        %v3398 = vsub.s32 0, %v3397
        %v3399 = vrot.slane %v3394, %v3398
        %vm3401 = vcmask 523264
        %v3403 = vsel %vm3401, %v3384, 0
        %v3406 = vsel %vm3401, %v3385, 0
        %3408 = vmatprep.subr.mxu0 0.0
        %3409 = vmatpush1.msra.mxu0 %v3386
        %3410 = vmatprep.subr.mxu0 0.0
        %3411 = vmatpush1.msra.mxu0 %v3387
        %3412 = vmatprep.subr.mxu0 0.0
        %3413 = vmatpush1.msra.mxu0 %v3388
        %3414 = vmatprep.subr.mxu0 0.0
        %3415 = vmatpush1.msra.mxu0 %v3389
        %3416 = vmatprep.subr.mxu0 0.0
        %3417 = vmatpush1.msra.mxu0 %v3390
        %3418 = vmatprep.subr.mxu0 0.0
        %3419 = vmatpush1.msra.mxu0 %v3391
        %3420 = vmatprep.subr.mxu0 0.0
        %3421 = vmatpush1.msra.mxu0 %v3392
        %3422 = vmatprep.subr.mxu0 0.0
        %3423 = vmatpush1.msra.mxu0 %v3393
        %3424 = vmatprep.subr.mxu0 0.0
        %3425 = vmatpush1.msra.mxu0 0.0
        %3426 = vmatprep.subr.mxu0 0.0
        %3427 = vmatpush1.msra.mxu0 0.0
        %3428 = vmatprep.subr.mxu0 0.0
        %3429 = vmatpush1.msra.mxu0 0.0
        %3430 = vmatprep.subr.mxu0 0.0
        %3431 = vmatpush1.msra.mxu0 0.0
        %3432 = vmatprep.subr.mxu0 0.0
        %3433 = vmatpush1.msra.mxu0 0.0
        %3434 = vmatprep.subr.mxu0 0.0
        %3435 = vmatpush1.msra.mxu0 0.0
        %3436 = vmatprep.subr.mxu0 0.0
        %3437 = vmatpush1.msra.mxu0 0.0
        %3438 = vmatprep.subr.mxu0 0.0
        %3439 = vmatpush1.msra.mxu0 0.0
        %3440 = vmatprep.subr.mxu0 0.0
        %3441 = vmatpush1.msra.mxu0 0.0
        %3442 = vmatprep.subr.mxu0 0.0
        %3443 = vmatpush1.msra.mxu0 0.0
        %3444 = vmatprep.subr.mxu0 0.0
        %3445 = vmatpush1.msra.mxu0 0.0
        %3446 = vmatprep.subr.mxu0 0.0
        %3447 = vmatpush1.msra.mxu0 0.0
        %3448 = vmatprep.subr.mxu0 0.0
        %3449 = vmatpush1.msra.mxu0 0.0
        %3450 = vmatprep.subr.mxu0 0.0
        %3451 = vmatpush1.msra.mxu0 0.0
        %3452 = vmatprep.subr.mxu0 0.0
        %3453 = vmatpush1.msra.mxu0 0.0
        %3454 = vmatprep.subr.mxu0 0.0
        %3455 = vmatpush1.msra.mxu0 0.0
        %3456 = vmatprep.subr.mxu0 0.0
        %3457 = vmatpush1.msra.mxu0 0.0
        %3458 = vmatprep.subr.mxu0 0.0
        %3459 = vmatpush1.msra.mxu0 0.0
        %3460 = vmatprep.subr.mxu0 0.0
        %3461 = vmatpush1.msra.mxu0 0.0
        %3462 = vmatprep.subr.mxu0 0.0
        %3463 = vmatpush1.msra.mxu0 0.0
        %3464 = vmatprep.subr.mxu0 0.0
        %3465 = vmatpush1.msra.mxu0 0.0
        %3466 = vmatprep.subr.mxu0 0.0
        %3467 = vmatpush1.msra.mxu0 0.0
        %3468 = vmatprep.subr.mxu0 0.0
        %3469 = vmatpush1.msra.mxu0 0.0
        %3470 = vmatprep.subr.mxu0 0.0
        %3471 = vmatpush1.msra.mxu0 0.0
        %3472 = vmatprep.mubr.f32.mxu0 0.0
        %3473 = vmatmul.mubr.f32.gmra.mrb[0].mxu0 %v3403
        %v3474 = vpop.f32.mrb[0].mxu0
        %v3475 = vadd.f32 %v3399, %v3474
        %v3476 = vpop.f32.mrb[0].mxu0
        %3477 = vmatprep.mubr.f32.mxu0 0.0
        %3478 = vmatmul.mubr.f32.gmra.mrb[0].mxu0 %v3406
        %v3479 = vpop.f32.mrb[0].mxu0
        %v3480 = vadd.f32 %v3399, %v3479
        %v3481 = vpop.f32.mrb[0].mxu0
        %3482 = vdwg.mxu0
        %v3483 = vadd.f32 %v3282, %v3475
        %v3484 = vadd.f32 %v3283, %v3480
        %v3485 = vld [vmem:[%s676] sm:$0x1]
        %v3486 = vld [vmem:[%s679] sm:$0x1]
        %v3487 = vsel %vm721, %v3483, 0.0
        %3488 = vadd.xlane.f32.xlu0 %v3487
        %v3489 = vpop.xlane.xlu0 %3488
        %v3490 = vsel %vm721, %v3484, 0.0
        %3491 = vadd.xlane.f32.xlu0 %v3490
        %v3492 = vpop.xlane.xlu0 %3491
        %v3493 = vmul.f32 %v3489, %v3243
        %v3494 = vmul.f32 %v3492, %v3243
        %v3495 = vmul.f32 %v3483, %v3483
        %v3496 = vmul.f32 %v3484, %v3484
        %v3497 = vsel %vm721, %v3495, 0.0
        %3498 = vadd.xlane.f32.xlu0 %v3497
        %v3499 = vpop.xlane.xlu0 %3498
        %v3500 = vsel %vm721, %v3496, 0.0
        %3501 = vadd.xlane.f32.xlu0 %v3500
        %v3502 = vpop.xlane.xlu0 %3501
        %v3503 = vmul.f32 %v3499, %v3243
        %v3504 = vmul.f32 %v3502, %v3243
        %v3505 = vmul.f32 %v3493, %v3493
        %v3506 = vmul.f32 %v3494, %v3494
        %v3507 = vsub.f32 %v3503, %v3505
        %v3508 = vsub.f32 %v3504, %v3506
        %v3509 = vsub.f32 %v3483, %v3493
        %v3510 = vsub.f32 %v3484, %v3494
        %v3511 = vadd.f32 %v3507, 1e-05
        %v3512 = vadd.f32 %v3508, 1e-05
        %v3513 = vrsqrt.pop %v3511
        %v3514 = vrsqrt.pop %v3512
        %v3515 = vmul.f32 %v3509, %v3513
        %v3516 = vmul.f32 %v3510, %v3514
        %v3518 = vlaneseq
        %v3519 = vshrl.u32 %v3518, 7
        %v3520 = vsub.s32 0, %v3519
        %v3521 = vrot.slane %v3485, %v3520
        %v3523 = vmul.f32 %v3515, %v3521
        %v3524 = vmul.f32 %v3516, %v3521
        %v3526 = vlaneseq
        %v3527 = vshrl.u32 %v3526, 7
        %v3528 = vsub.s32 0, %v3527
        %v3529 = vrot.slane %v3486, %v3528
        %v3531 = vadd.f32 %v3523, %v3529
        %v3532 = vadd.f32 %v3524, %v3529
        %3533 = vst.msk [vmem:[#allocation8] sm:$0xff] %vm721, %v3531
        %3534 = vst.msk [vmem:[#allocation8 + $0x8] sm:$0xff] %vm721, %v3532
        // Predicated region
        $region89: #{tpu_custom_call.1} parent=71 // pred_check
          %p3535 = pneg %p397
        $region90: #{tpu_custom_call.1} parent=71 // pred_check_branch
          %3537 = sbr.rel (%p3535) target = $region92
        $region91: #{tpu_custom_call.1} parent=71 // pred_region
          %s3538 = smul.u32 2, %s33
          %s3540 = ssub.s32 256, 256
          %3541 = vsyncadd [#allocation4], %s3540
          %s3542 = smul.addr %s3538, 128
          %s3543 = scalar_lea.hbm %s13, %s3542
          %s3544 = sshll.u32 [#allocation8], 4
          %s3545 = int_to_ptr.vmem [resolvable:$true] %s3544
          %3550 = dma.vmem_to_hbm [thread:$0]  %s3545, 256, %s3543, [#allocation4], 128, 128, 8
        $region92: #{tpu_custom_call.1} parent=71 // pred_fallthru
          _
        // Predicated region
        $region93: #{tpu_custom_call.1} parent=71 // pred_check
          %p3551 = pneg %p397
        $region94: #{tpu_custom_call.1} parent=71 // pred_check_branch
          %3553 = sbr.rel (%p3551) target = $region96
        $region95: #{tpu_custom_call.1} parent=71 // pred_region
          %3554 = dma.done [#allocation4], 256
        $region96: #{tpu_custom_call.1} parent=71 // pred_fallthru
          _
      $region72: #{tpu_custom_call.1} parent=5 // pred_fallthru
        _
      %p3555 = scmp.le.s32.totalorder 2, %s24
      // Predicated region
      $region97: #{tpu_custom_call.1} parent=5 // pred_check
        %p3556 = pneg %p3555
      $region98: #{tpu_custom_call.1} parent=5 // pred_check_branch
        %3558 = sbr.rel (%p3556) target = $region100
      $region99: #{tpu_custom_call.1} parent=5 // pred_region
        %s3559 = ssub.s32 %s24, 2
      $region100: #{tpu_custom_call.1} parent=5 // pred_fallthru
        _
    $region6: #{tpu_custom_call.1} parent=1 // loop_footer
      %s28 = sadd.s32 1, %s24
    $region7: #{tpu_custom_call.1} parent=1 // loop_footer_branch
      %23 = sbr.rel target = $region3
    $region8: #{tpu_custom_call.1} parent=1 // loop_exit
      _
    %3560 = vsyncpa [#allocation3], 1
    %s3561 = scalar_lea.sflag [#allocation3], 1
    %3562 = vsyncpa %s3561, 1
    %3563 = vsyncpa [#allocation6], 1
    %s3564 = scalar_lea.sflag [#allocation6], 1
    %3565 = vsyncpa %s3564, 1
    %3566 = vsyncpa [#allocation4], 1
    %s3567 = scalar_lea.sflag [#allocation4], 1
    %3568 = vsyncpa %s3567, 1

</llo_original>
